<compile_context>
chip_gen: v6e
topology: v6e:2x2x1
jax: 0.10.0
libtpu: 0.0.40
codegen_flags: <defaults>
</compile_context>

<pallas_src>
import numpy as np
import jax
import jax.numpy as jnp
from jax import lax
from jax.experimental import pallas as pl
from jax.experimental.pallas import tpu as pltpu

# Small, forward-consistent hyperparameters (module defaults scaled down).
INPUT_SIZE = 2
HIDDEN = 32
NUM_LAYERS = 3
SEQ = 8
BATCH = 2
H2 = HIDDEN // 2
EPS = 1e-5  # nn.LayerNorm default eps


def attention_lstm_kernel(x_ref, wpack_ref, misc_ref, out_ref):
    """Whole forward pass in one kernel.

    x_ref:     (T, B, I)   time-major inputs (B padded to 8 sublanes)
    wpack_ref: (4, 2H, 4H) [whh0 | [wih1;whh1] | [wih2;whh2] | fc1_w(padded)]
    misc_ref:  (8, 4H)     wih0 rows, biases, LN params, attn/fc2 rows, scalars
    """
    T, B, _ = x_ref.shape
    H = HIDDEN
    H4 = 4 * H
    bf16 = jnp.bfloat16

    # ---- Unpack the misc vreg (one (8,128) load) with static slices.
    misc = misc_ref[...]
    w0r0 = misc[0:1, :].reshape(1, 1, H4)          # wih0 row 0
    w0r1 = misc[1:2, :].reshape(1, 1, H4)          # wih0 row 1
    b0r = misc[2:3, :].reshape(1, 1, H4)           # layer-0 fused bias
    b1 = misc[3:4, :]                              # (1, 4H)
    b2 = misc[4:5, :]                              # (1, 4H)
    ln_g = misc[5:6, 0:H]                          # (1, H)
    ln_b = misc[5:6, H:2 * H]                      # (1, H)
    fc1_b = misc[5:6, 2 * H:2 * H + H2]            # (1, H2)
    attn_w = misc[6:7, 0:H].reshape(1, 1, H)       # attention weight as a lane row
    fc2_w = misc[6:7, H:H + H2]                    # (1, H2) fc2 weight as a lane row
    attn_b = misc[7:8, 0:1]                        # (1, 1)
    fc2_b = misc[7:8, 1:2]                         # (1, 1)

    # ---- Recurrent weights: hoisted loads + one-time bf16 casts (operands of
    # the critical-path MXU pushes; accumulation stays f32).
    w0 = wpack_ref[0]
    w1 = wpack_ref[1]
    w2 = wpack_ref[2]
    whh0 = w0[:H, :].astype(bf16)                  # (H, 4H)
    wih1 = w1[:H, :].astype(bf16)
    whh1 = w1[H:, :].astype(bf16)
    wih2 = w2[:H, :].astype(bf16)
    whh2 = w2[H:, :].astype(bf16)
    fc1_w = wpack_ref[3][:H, :H2]                  # (H, H2) f32, off critical path

    # ---- Hoisted layer-0 input projection (+ fused bias) for all timesteps.
    # input_size == 2: a VPU broadcast multiply-add beats a K=2 MXU matmul.
    x = x_ref[...]                                 # (T, B, I) f32
    xproj = x[:, :, 0:1] * w0r0 + x[:, :, 1:2] * w0r1 + b0r   # (T, B, 4H)

    def gates_to_hc(gates, c_prev):
        # Full-width sigmoid (1 EUP push over the 128-lane gates vreg), tanh
        # only on the 32-lane g slice (review: don't waste 3/4 of an EUP push).
        sig = jax.nn.sigmoid(gates)
        i = sig[:, 0 * H:1 * H]
        f = sig[:, 1 * H:2 * H]
        o = sig[:, 3 * H:4 * H]
        g = jnp.tanh(gates[:, 2 * H:3 * H])
        c_new = f * c_prev + i * g
        h_new = o * jnp.tanh(c_new)
        return h_new, c_new

    zeros = jnp.zeros((B, H), dtype=jnp.float32)
    h0 = c0 = h1 = c1 = h2 = c2 = zeros
    outs = []
    # T=8 is small and static: full unroll with constant indices lets the
    # scheduler wavefront layer-2 @ t with layer-0 @ t+1.
    # TODO(synk): if SEQ or HIDDEN are scaled up (T>=32 or H>=128), move outs /
    # xproj into VMEM scratch written per step and iterate with
    # lax.fori_loop(unroll=True) over chunks to bound vreg live ranges.
    for t in range(T):
        g0 = xproj[t] + jnp.dot(h0.astype(bf16), whh0,
                                preferred_element_type=jnp.float32)
        h0, c0 = gates_to_hc(g0, c0)
        # Inter-layer dropout is identity at inference time.
        g1 = (jnp.dot(h0.astype(bf16), wih1, preferred_element_type=jnp.float32)
              + jnp.dot(h1.astype(bf16), whh1, preferred_element_type=jnp.float32)
              + b1)
        h1, c1 = gates_to_hc(g1, c1)
        g2 = (jnp.dot(h1.astype(bf16), wih2, preferred_element_type=jnp.float32)
              + jnp.dot(h2.astype(bf16), whh2, preferred_element_type=jnp.float32)
              + b2)
        h2, c2 = gates_to_hc(g2, c2)
        outs.append(h2)

    out_flat = jnp.concatenate(outs, axis=0)                  # (T*B, H), t-major rows
    out_seq = out_flat.reshape(T, B, H)

    # ---- Attention: broadcast multiply + lane reduce (VPU/XLU are idle here);
    # avoids an N=1 MXU push and lane-sparse intermediates.
    scores = (jnp.sum(out_seq * attn_w, axis=-1, keepdims=True)
              + attn_b.reshape(1, 1, 1))                      # (T, B, 1)
    m = jnp.max(scores, axis=0, keepdims=True)
    e = jnp.exp(scores - m)
    attn = e / jnp.sum(e, axis=0, keepdims=True)              # exact divide (off crit path)
    context = jnp.sum(attn * out_seq, axis=0)                 # (B, H)

    # ---- LayerNorm over hidden dim (biased variance, eps=1e-5).
    # Padded batch rows have context == 0 -> var == 0 -> rsqrt(eps) * 0 = 0;
    # harmless, and those rows are sliced off in the wrapper.
    mu = jnp.mean(context, axis=-1, keepdims=True)
    var = jnp.mean((context - mu) ** 2, axis=-1, keepdims=True)
    normed = (context - mu) * lax.rsqrt(var + EPS) * ln_g + ln_b

    # ---- MLP head (dropout is identity at inference time).
    h_fc1 = jnp.maximum(
        jnp.dot(normed, fc1_w, preferred_element_type=jnp.float32) + fc1_b, 0.0)
    out_ref[...] = jnp.sum(h_fc1 * fc2_w, axis=-1, keepdims=True) + fc2_b


@jax.jit
def attention_lstm_forward(x, wpack, misc):
    """x: (B, T, I) float32  ->  (B, 1) float32."""
    B, T, _ = x.shape
    # Pad batch to the 8-sublane width: rows are independent, so padded rows
    # only improve vreg occupancy and are sliced off below.
    BP = ((B + 7) // 8) * 8
    x_tm = jnp.swapaxes(x, 0, 1).astype(jnp.float32)          # time-major (T, B, I)
    if BP != B:
        x_tm = jnp.pad(x_tm, ((0, 0), (0, BP - B), (0, 0)))

    vmem = pl.BlockSpec(memory_space=pltpu.MemorySpace.VMEM)
    # TODO(synk): for large batches, add a batch grid axis with
    # dimension_semantics=("parallel",) and index_maps that pin the weight
    # inputs to block 0 so v7x's second TensorCore is used.
    out = pl.pallas_call(
        attention_lstm_kernel,
        out_shape=jax.ShapeDtypeStruct((BP, 1), jnp.float32),
        in_specs=[vmem, vmem, vmem],
        out_specs=vmem,
    )(x_tm, wpack, misc)
    return out[:B]


def init_params(key):
    H, I = HIDDEN, INPUT_SIZE
    ks = jax.random.split(key, 9)

    def xavier(k, shape):
        bound = float(np.sqrt(6.0 / (shape[0] + shape[1])))
        return jax.random.uniform(k, shape, jnp.float32, -bound, bound)

    # TODO(synk): weight_hh uses xavier here instead of orthogonal init (only
    # the synthetic parameter values differ; forward semantics are unaffected).
    return {
        'wih': [xavier(ks[0], (I, 4 * H)),
                xavier(ks[1], (H, 4 * H)),
                xavier(ks[2], (H, 4 * H))],                   # W_ih_l{0,1,2}^T
        'whh': [xavier(ks[3], (H, 4 * H)),
                xavier(ks[4], (H, 4 * H)),
                xavier(ks[5], (H, 4 * H))],                   # W_hh_l{0,1,2}^T
        'b': [jnp.zeros((4 * H,), jnp.float32) for _ in range(NUM_LAYERS)],  # b_ih+b_hh
        'attn_w': xavier(ks[6], (H, 1)),                      # attention.weight^T
        'attn_b': jnp.zeros((), jnp.float32),
        'ln_g': jnp.ones((H,), jnp.float32),
        'ln_b': jnp.zeros((H,), jnp.float32),
        'fc1_w': xavier(ks[7], (H, H2)),                      # fc1.weight^T
        'fc1_b': jnp.zeros((H2,), jnp.float32),
        'fc2_w': xavier(ks[8], (H2, 1)),                      # fc2.weight^T
        'fc2_b': jnp.zeros((), jnp.float32),
    }


def pack_params(p):
    """Pack the logical parameters into the kernel's 2 consolidated arrays."""
    H = HIDDEN
    wpack = jnp.zeros((4, 2 * H, 4 * H), jnp.float32)
    wpack = wpack.at[0, :H, :].set(p['whh'][0])
    wpack = wpack.at[1, :H, :].set(p['wih'][1])
    wpack = wpack.at[1, H:, :].set(p['whh'][1])
    wpack = wpack.at[2, :H, :].set(p['wih'][2])
    wpack = wpack.at[2, H:, :].set(p['whh'][2])
    wpack = wpack.at[3, :H, :H2].set(p['fc1_w'])

    misc = jnp.zeros((8, 4 * H), jnp.float32)
    misc = misc.at[0, :].set(p['wih'][0][0])
    misc = misc.at[1, :].set(p['wih'][0][1])
    misc = misc.at[2, :].set(p['b'][0])
    misc = misc.at[3, :].set(p['b'][1])
    misc = misc.at[4, :].set(p['b'][2])
    misc = misc.at[5, 0:H].set(p['ln_g'])
    misc = misc.at[5, H:2 * H].set(p['ln_b'])
    misc = misc.at[5, 2 * H:2 * H + H2].set(p['fc1_b'])
    misc = misc.at[6, 0:H].set(p['attn_w'][:, 0])
    misc = misc.at[6, H:H + H2].set(p['fc2_w'][:, 0])
    misc = misc.at[7, 0].set(p['attn_b'])
    misc = misc.at[7, 1].set(p['fc2_b'])
    return wpack, misc


def reference_forward(x, p, mxu_bf16=False):
    """Pure-JAX reference.  mxu_bf16=True mirrors the kernel's bf16 MXU-operand
    precision on the recurrent-chain dots (state/accumulation stay f32)."""
    B, T, _ = x.shape
    H = HIDDEN
    cast = (lambda a: a.astype(jnp.bfloat16)) if mxu_bf16 else (lambda a: a)
    h = [jnp.zeros((B, H), jnp.float32) for _ in range(NUM_LAYERS)]
    c = [jnp.zeros((B, H), jnp.float32) for _ in range(NUM_LAYERS)]
    outs = []
    for t in range(T):
        inp = x[:, t, :].astype(jnp.float32)
        for l in range(NUM_LAYERS):
            if l == 0:
                # Layer-0 input projection is f32 in the kernel too.
                gates = (inp @ p['wih'][0]
                         + jnp.dot(cast(h[0]), cast(p['whh'][0]),
                                   preferred_element_type=jnp.float32)
                         + p['b'][0])
            else:
                gates = (jnp.dot(cast(inp), cast(p['wih'][l]),
                                 preferred_element_type=jnp.float32)
                         + jnp.dot(cast(h[l]), cast(p['whh'][l]),
                                   preferred_element_type=jnp.float32)
                         + p['b'][l])
            i = jax.nn.sigmoid(gates[:, :H])
            f = jax.nn.sigmoid(gates[:, H:2 * H])
            g = jnp.tanh(gates[:, 2 * H:3 * H])
            o = jax.nn.sigmoid(gates[:, 3 * H:])
            c[l] = f * c[l] + i * g
            h[l] = o * jnp.tanh(c[l])
            inp = h[l]
        outs.append(h[-1])
    out_seq = jnp.stack(outs, axis=1)                                 # (B, T, H)
    scores = jnp.squeeze(out_seq @ p['attn_w'], -1) + p['attn_b']
    attn = jax.nn.softmax(scores, axis=1)
    context = jnp.einsum('bt,bth->bh', attn, out_seq)
    mu = jnp.mean(context, -1, keepdims=True)
    var = jnp.mean((context - mu) ** 2, -1, keepdims=True)
    normed = (context - mu) / jnp.sqrt(var + EPS) * p['ln_g'] + p['ln_b']
    hfc = jnp.maximum(normed @ p['fc1_w'] + p['fc1_b'], 0.0)
    return hfc @ p['fc2_w'] + p['fc2_b']


if __name__ == "__main__":
    key = jax.random.PRNGKey(0)
    k_x, k_p = jax.random.split(key)
    x = jax.random.normal(k_x, (BATCH, SEQ, INPUT_SIZE), dtype=jnp.float32)
    params = init_params(k_p)
    wpack, misc = pack_params(params)

    out = jax.block_until_ready(attention_lstm_forward(x, wpack, misc))
    assert out.shape == (BATCH, 1)
    assert bool(jnp.all(jnp.isfinite(out)))

    # Correctness check against a reference using the same bf16 MXU-operand
    # precision on the recurrent chain (everything else f32) — the softmax now
    # uses an exact divide, so the tolerance is tight again.
    ref = jax.block_until_ready(reference_forward(x, params, mxu_bf16=True))
    np.testing.assert_allclose(np.asarray(out), np.asarray(ref), atol=2e-4, rtol=2e-4)

    print("KERNEL_OK")
</pallas_src>

<mosaic_0001>
module attributes {stable_mosaic.version = 11 : i64} {
  func.func @attention_lstm_kernel(%arg0: memref<8x8x2xf32, #tpu.memory_space<vmem>>, %arg1: memref<4x64x128xf32, #tpu.memory_space<vmem>>, %arg2: memref<8x128xf32, #tpu.memory_space<vmem>>, %arg3: memref<8x1xf32, #tpu.memory_space<vmem>>) attributes {dimension_semantics = [], scalar_prefetch = 0 : i64, scratch_operands = 0 : i64, tpu.core_type = #tpu.core_type<tc>} {
    %c0 = arith.constant 0 : index
    %c0_0 = arith.constant 0 : index
    %0 = vector.load %arg2[%c0, %c0_0] : memref<8x128xf32, #tpu.memory_space<vmem>>, vector<8x128xf32>
    %1 = vector.extract_strided_slice %0 {offsets = [0, 0], sizes = [1, 128], strides = [1, 1]} : vector<8x128xf32> to vector<1x128xf32>
    %2 = vector.shape_cast %1 : vector<1x128xf32> to vector<1x1x128xf32>
    %3 = vector.extract_strided_slice %0 {offsets = [1, 0], sizes = [1, 128], strides = [1, 1]} : vector<8x128xf32> to vector<1x128xf32>
    %4 = vector.shape_cast %3 : vector<1x128xf32> to vector<1x1x128xf32>
    %5 = vector.extract_strided_slice %0 {offsets = [2, 0], sizes = [1, 128], strides = [1, 1]} : vector<8x128xf32> to vector<1x128xf32>
    %6 = vector.shape_cast %5 : vector<1x128xf32> to vector<1x1x128xf32>
    %7 = vector.extract_strided_slice %0 {offsets = [3, 0], sizes = [1, 128], strides = [1, 1]} : vector<8x128xf32> to vector<1x128xf32>
    %8 = vector.extract_strided_slice %0 {offsets = [4, 0], sizes = [1, 128], strides = [1, 1]} : vector<8x128xf32> to vector<1x128xf32>
    %9 = vector.extract_strided_slice %0 {offsets = [5, 0], sizes = [1, 32], strides = [1, 1]} : vector<8x128xf32> to vector<1x32xf32>
    %10 = vector.extract_strided_slice %0 {offsets = [5, 32], sizes = [1, 32], strides = [1, 1]} : vector<8x128xf32> to vector<1x32xf32>
    %11 = vector.extract_strided_slice %0 {offsets = [5, 64], sizes = [1, 16], strides = [1, 1]} : vector<8x128xf32> to vector<1x16xf32>
    %12 = vector.extract_strided_slice %0 {offsets = [6, 0], sizes = [1, 32], strides = [1, 1]} : vector<8x128xf32> to vector<1x32xf32>
    %13 = vector.shape_cast %12 : vector<1x32xf32> to vector<1x1x32xf32>
    %14 = vector.extract_strided_slice %0 {offsets = [6, 32], sizes = [1, 16], strides = [1, 1]} : vector<8x128xf32> to vector<1x16xf32>
    %15 = vector.extract_strided_slice %0 {offsets = [7, 0], sizes = [1, 1], strides = [1, 1]} : vector<8x128xf32> to vector<1x1xf32>
    %16 = vector.extract_strided_slice %0 {offsets = [7, 1], sizes = [1, 1], strides = [1, 1]} : vector<8x128xf32> to vector<1x1xf32>
    %c0_1 = arith.constant 0 : index
    %c0_2 = arith.constant 0 : index
    %c0_3 = arith.constant 0 : index
    %17 = vector.load %arg1[%c0_1, %c0_2, %c0_3] : memref<4x64x128xf32, #tpu.memory_space<vmem>>, vector<1x64x128xf32>
    %18 = vector.shape_cast %17 : vector<1x64x128xf32> to vector<64x128xf32>
    %c1 = arith.constant 1 : index
    %c0_4 = arith.constant 0 : index
    %c0_5 = arith.constant 0 : index
    %19 = vector.load %arg1[%c1, %c0_4, %c0_5] : memref<4x64x128xf32, #tpu.memory_space<vmem>>, vector<1x64x128xf32>
    %20 = vector.shape_cast %19 : vector<1x64x128xf32> to vector<64x128xf32>
    %c2 = arith.constant 2 : index
    %c0_6 = arith.constant 0 : index
    %c0_7 = arith.constant 0 : index
    %21 = vector.load %arg1[%c2, %c0_6, %c0_7] : memref<4x64x128xf32, #tpu.memory_space<vmem>>, vector<1x64x128xf32>
    %22 = vector.shape_cast %21 : vector<1x64x128xf32> to vector<64x128xf32>
    %23 = vector.extract_strided_slice %18 {offsets = [0, 0], sizes = [32, 128], strides = [1, 1]} : vector<64x128xf32> to vector<32x128xf32>
    %24 = arith.truncf %23 : vector<32x128xf32> to vector<32x128xbf16>
    %25 = vector.extract_strided_slice %20 {offsets = [0, 0], sizes = [32, 128], strides = [1, 1]} : vector<64x128xf32> to vector<32x128xf32>
    %26 = arith.truncf %25 : vector<32x128xf32> to vector<32x128xbf16>
    %27 = vector.extract_strided_slice %20 {offsets = [32, 0], sizes = [32, 128], strides = [1, 1]} : vector<64x128xf32> to vector<32x128xf32>
    %28 = arith.truncf %27 : vector<32x128xf32> to vector<32x128xbf16>
    %29 = vector.extract_strided_slice %22 {offsets = [0, 0], sizes = [32, 128], strides = [1, 1]} : vector<64x128xf32> to vector<32x128xf32>
    %30 = arith.truncf %29 : vector<32x128xf32> to vector<32x128xbf16>
    %31 = vector.extract_strided_slice %22 {offsets = [32, 0], sizes = [32, 128], strides = [1, 1]} : vector<64x128xf32> to vector<32x128xf32>
    %32 = arith.truncf %31 : vector<32x128xf32> to vector<32x128xbf16>
    %c3 = arith.constant 3 : index
    %c0_8 = arith.constant 0 : index
    %c0_9 = arith.constant 0 : index
    %33 = vector.load %arg1[%c3, %c0_8, %c0_9] : memref<4x64x128xf32, #tpu.memory_space<vmem>>, vector<1x64x128xf32>
    %34 = vector.shape_cast %33 : vector<1x64x128xf32> to vector<64x128xf32>
    %35 = vector.extract_strided_slice %34 {offsets = [0, 0], sizes = [32, 16], strides = [1, 1]} : vector<64x128xf32> to vector<32x16xf32>
    %c0_10 = arith.constant 0 : index
    %c0_11 = arith.constant 0 : index
    %c0_12 = arith.constant 0 : index
    %36 = vector.load %arg0[%c0_10, %c0_11, %c0_12] : memref<8x8x2xf32, #tpu.memory_space<vmem>>, vector<8x8x2xf32>
    %37 = vector.extract_strided_slice %36 {offsets = [0, 0, 0], sizes = [8, 8, 1], strides = [1, 1, 1]} : vector<8x8x2xf32> to vector<8x8x1xf32>
    %38 = vector.broadcast %37 : vector<8x8x1xf32> to vector<8x8x128xf32>
    %39 = vector.broadcast %2 : vector<1x1x128xf32> to vector<8x8x128xf32>
    %40 = arith.mulf %38, %39 : vector<8x8x128xf32>
    %41 = vector.extract_strided_slice %36 {offsets = [0, 0, 1], sizes = [8, 8, 1], strides = [1, 1, 1]} : vector<8x8x2xf32> to vector<8x8x1xf32>
    %42 = vector.broadcast %41 : vector<8x8x1xf32> to vector<8x8x128xf32>
    %43 = vector.broadcast %4 : vector<1x1x128xf32> to vector<8x8x128xf32>
    %44 = arith.mulf %42, %43 : vector<8x8x128xf32>
    %45 = arith.addf %40, %44 : vector<8x8x128xf32>
    %46 = vector.broadcast %6 : vector<1x1x128xf32> to vector<8x8x128xf32>
    %47 = arith.addf %45, %46 : vector<8x8x128xf32>
    %cst = arith.constant 0.000000e+00 : f32
    %48 = vector.broadcast %cst : f32 to vector<8x32xf32>
    %49 = vector.extract_strided_slice %47 {offsets = [0, 0, 0], sizes = [1, 8, 128], strides = [1, 1, 1]} : vector<8x8x128xf32> to vector<1x8x128xf32>
    %50 = vector.shape_cast %49 : vector<1x8x128xf32> to vector<8x128xf32>
    %51 = arith.truncf %48 : vector<8x32xf32> to vector<8x32xbf16>
    %cst_13 = arith.constant dense<0.000000e+00> : vector<8x128xf32>
    %52 = tpu.matmul %51, %24, %cst_13 {dimension_numbers = #tpu.dot_dimension_numbers<[1], [0], [0], [1], [0, 0, 1, 1], [], []>} : vector<8x32xbf16>, vector<32x128xbf16>, vector<8x128xf32> -> vector<8x128xf32>
    %53 = arith.addf %50, %52 : vector<8x128xf32>
    %54 = arith.negf %53 : vector<8x128xf32>
    %55 = math.exp %54 : vector<8x128xf32>
    %cst_14 = arith.constant 1.000000e+00 : f32
    %56 = vector.broadcast %cst_14 : f32 to vector<8x128xf32>
    %57 = arith.addf %56, %55 : vector<8x128xf32>
    %58 = arith.divf %56, %57 : vector<8x128xf32>
    %59 = vector.extract_strided_slice %58 {offsets = [0, 0], sizes = [8, 32], strides = [1, 1]} : vector<8x128xf32> to vector<8x32xf32>
    %60 = vector.extract_strided_slice %58 {offsets = [0, 32], sizes = [8, 32], strides = [1, 1]} : vector<8x128xf32> to vector<8x32xf32>
    %61 = vector.extract_strided_slice %58 {offsets = [0, 96], sizes = [8, 32], strides = [1, 1]} : vector<8x128xf32> to vector<8x32xf32>
    %62 = vector.extract_strided_slice %53 {offsets = [0, 64], sizes = [8, 32], strides = [1, 1]} : vector<8x128xf32> to vector<8x32xf32>
    %63 = math.tanh %62 : vector<8x32xf32>
    %64 = arith.mulf %60, %48 : vector<8x32xf32>
    %65 = arith.mulf %59, %63 : vector<8x32xf32>
    %66 = arith.addf %64, %65 : vector<8x32xf32>
    %67 = math.tanh %66 : vector<8x32xf32>
    %68 = arith.mulf %61, %67 : vector<8x32xf32>
    %69 = arith.truncf %68 : vector<8x32xf32> to vector<8x32xbf16>
    %cst_15 = arith.constant dense<0.000000e+00> : vector<8x128xf32>
    %70 = tpu.matmul %69, %26, %cst_15 {dimension_numbers = #tpu.dot_dimension_numbers<[1], [0], [0], [1], [0, 0, 1, 1], [], []>} : vector<8x32xbf16>, vector<32x128xbf16>, vector<8x128xf32> -> vector<8x128xf32>
    %71 = arith.truncf %48 : vector<8x32xf32> to vector<8x32xbf16>
    %cst_16 = arith.constant dense<0.000000e+00> : vector<8x128xf32>
    %72 = tpu.matmul %71, %28, %cst_16 {dimension_numbers = #tpu.dot_dimension_numbers<[1], [0], [0], [1], [0, 0, 1, 1], [], []>} : vector<8x32xbf16>, vector<32x128xbf16>, vector<8x128xf32> -> vector<8x128xf32>
    %73 = arith.addf %70, %72 : vector<8x128xf32>
    %74 = vector.broadcast %7 : vector<1x128xf32> to vector<8x128xf32>
    %75 = arith.addf %73, %74 : vector<8x128xf32>
    %76 = arith.negf %75 : vector<8x128xf32>
    %77 = math.exp %76 : vector<8x128xf32>
    %cst_17 = arith.constant 1.000000e+00 : f32
    %78 = vector.broadcast %cst_17 : f32 to vector<8x128xf32>
    %79 = arith.addf %78, %77 : vector<8x128xf32>
    %80 = arith.divf %78, %79 : vector<8x128xf32>
    %81 = vector.extract_strided_slice %80 {offsets = [0, 0], sizes = [8, 32], strides = [1, 1]} : vector<8x128xf32> to vector<8x32xf32>
    %82 = vector.extract_strided_slice %80 {offsets = [0, 32], sizes = [8, 32], strides = [1, 1]} : vector<8x128xf32> to vector<8x32xf32>
    %83 = vector.extract_strided_slice %80 {offsets = [0, 96], sizes = [8, 32], strides = [1, 1]} : vector<8x128xf32> to vector<8x32xf32>
    %84 = vector.extract_strided_slice %75 {offsets = [0, 64], sizes = [8, 32], strides = [1, 1]} : vector<8x128xf32> to vector<8x32xf32>
    %85 = math.tanh %84 : vector<8x32xf32>
    %86 = arith.mulf %82, %48 : vector<8x32xf32>
    %87 = arith.mulf %81, %85 : vector<8x32xf32>
    %88 = arith.addf %86, %87 : vector<8x32xf32>
    %89 = math.tanh %88 : vector<8x32xf32>
    %90 = arith.mulf %83, %89 : vector<8x32xf32>
    %91 = arith.truncf %90 : vector<8x32xf32> to vector<8x32xbf16>
    %cst_18 = arith.constant dense<0.000000e+00> : vector<8x128xf32>
    %92 = tpu.matmul %91, %30, %cst_18 {dimension_numbers = #tpu.dot_dimension_numbers<[1], [0], [0], [1], [0, 0, 1, 1], [], []>} : vector<8x32xbf16>, vector<32x128xbf16>, vector<8x128xf32> -> vector<8x128xf32>
    %93 = arith.truncf %48 : vector<8x32xf32> to vector<8x32xbf16>
    %cst_19 = arith.constant dense<0.000000e+00> : vector<8x128xf32>
    %94 = tpu.matmul %93, %32, %cst_19 {dimension_numbers = #tpu.dot_dimension_numbers<[1], [0], [0], [1], [0, 0, 1, 1], [], []>} : vector<8x32xbf16>, vector<32x128xbf16>, vector<8x128xf32> -> vector<8x128xf32>
    %95 = arith.addf %92, %94 : vector<8x128xf32>
    %96 = vector.broadcast %8 : vector<1x128xf32> to vector<8x128xf32>
    %97 = arith.addf %95, %96 : vector<8x128xf32>
    %98 = arith.negf %97 : vector<8x128xf32>
    %99 = math.exp %98 : vector<8x128xf32>
    %cst_20 = arith.constant 1.000000e+00 : f32
    %100 = vector.broadcast %cst_20 : f32 to vector<8x128xf32>
    %101 = arith.addf %100, %99 : vector<8x128xf32>
    %102 = arith.divf %100, %101 : vector<8x128xf32>
    %103 = vector.extract_strided_slice %102 {offsets = [0, 0], sizes = [8, 32], strides = [1, 1]} : vector<8x128xf32> to vector<8x32xf32>
    %104 = vector.extract_strided_slice %102 {offsets = [0, 32], sizes = [8, 32], strides = [1, 1]} : vector<8x128xf32> to vector<8x32xf32>
    %105 = vector.extract_strided_slice %102 {offsets = [0, 96], sizes = [8, 32], strides = [1, 1]} : vector<8x128xf32> to vector<8x32xf32>
    %106 = vector.extract_strided_slice %97 {offsets = [0, 64], sizes = [8, 32], strides = [1, 1]} : vector<8x128xf32> to vector<8x32xf32>
    %107 = math.tanh %106 : vector<8x32xf32>
    %108 = arith.mulf %104, %48 : vector<8x32xf32>
    %109 = arith.mulf %103, %107 : vector<8x32xf32>
    %110 = arith.addf %108, %109 : vector<8x32xf32>
    %111 = math.tanh %110 : vector<8x32xf32>
    %112 = arith.mulf %105, %111 : vector<8x32xf32>
    %113 = vector.extract_strided_slice %47 {offsets = [1, 0, 0], sizes = [1, 8, 128], strides = [1, 1, 1]} : vector<8x8x128xf32> to vector<1x8x128xf32>
    %114 = vector.shape_cast %113 : vector<1x8x128xf32> to vector<8x128xf32>
    %115 = arith.truncf %68 : vector<8x32xf32> to vector<8x32xbf16>
    %cst_21 = arith.constant dense<0.000000e+00> : vector<8x128xf32>
    %116 = tpu.matmul %115, %24, %cst_21 {dimension_numbers = #tpu.dot_dimension_numbers<[1], [0], [0], [1], [0, 0, 1, 1], [], []>} : vector<8x32xbf16>, vector<32x128xbf16>, vector<8x128xf32> -> vector<8x128xf32>
    %117 = arith.addf %114, %116 : vector<8x128xf32>
    %118 = arith.negf %117 : vector<8x128xf32>
    %119 = math.exp %118 : vector<8x128xf32>
    %cst_22 = arith.constant 1.000000e+00 : f32
    %120 = vector.broadcast %cst_22 : f32 to vector<8x128xf32>
    %121 = arith.addf %120, %119 : vector<8x128xf32>
    %122 = arith.divf %120, %121 : vector<8x128xf32>
    %123 = vector.extract_strided_slice %122 {offsets = [0, 0], sizes = [8, 32], strides = [1, 1]} : vector<8x128xf32> to vector<8x32xf32>
    %124 = vector.extract_strided_slice %122 {offsets = [0, 32], sizes = [8, 32], strides = [1, 1]} : vector<8x128xf32> to vector<8x32xf32>
    %125 = vector.extract_strided_slice %122 {offsets = [0, 96], sizes = [8, 32], strides = [1, 1]} : vector<8x128xf32> to vector<8x32xf32>
    %126 = vector.extract_strided_slice %117 {offsets = [0, 64], sizes = [8, 32], strides = [1, 1]} : vector<8x128xf32> to vector<8x32xf32>
    %127 = math.tanh %126 : vector<8x32xf32>
    %128 = arith.mulf %124, %66 : vector<8x32xf32>
    %129 = arith.mulf %123, %127 : vector<8x32xf32>
    %130 = arith.addf %128, %129 : vector<8x32xf32>
    %131 = math.tanh %130 : vector<8x32xf32>
    %132 = arith.mulf %125, %131 : vector<8x32xf32>
    %133 = arith.truncf %132 : vector<8x32xf32> to vector<8x32xbf16>
    %cst_23 = arith.constant dense<0.000000e+00> : vector<8x128xf32>
    %134 = tpu.matmul %133, %26, %cst_23 {dimension_numbers = #tpu.dot_dimension_numbers<[1], [0], [0], [1], [0, 0, 1, 1], [], []>} : vector<8x32xbf16>, vector<32x128xbf16>, vector<8x128xf32> -> vector<8x128xf32>
    %135 = arith.truncf %90 : vector<8x32xf32> to vector<8x32xbf16>
    %cst_24 = arith.constant dense<0.000000e+00> : vector<8x128xf32>
    %136 = tpu.matmul %135, %28, %cst_24 {dimension_numbers = #tpu.dot_dimension_numbers<[1], [0], [0], [1], [0, 0, 1, 1], [], []>} : vector<8x32xbf16>, vector<32x128xbf16>, vector<8x128xf32> -> vector<8x128xf32>
    %137 = arith.addf %134, %136 : vector<8x128xf32>
    %138 = vector.broadcast %7 : vector<1x128xf32> to vector<8x128xf32>
    %139 = arith.addf %137, %138 : vector<8x128xf32>
    %140 = arith.negf %139 : vector<8x128xf32>
    %141 = math.exp %140 : vector<8x128xf32>
    %cst_25 = arith.constant 1.000000e+00 : f32
    %142 = vector.broadcast %cst_25 : f32 to vector<8x128xf32>
    %143 = arith.addf %142, %141 : vector<8x128xf32>
    %144 = arith.divf %142, %143 : vector<8x128xf32>
    %145 = vector.extract_strided_slice %144 {offsets = [0, 0], sizes = [8, 32], strides = [1, 1]} : vector<8x128xf32> to vector<8x32xf32>
    %146 = vector.extract_strided_slice %144 {offsets = [0, 32], sizes = [8, 32], strides = [1, 1]} : vector<8x128xf32> to vector<8x32xf32>
    %147 = vector.extract_strided_slice %144 {offsets = [0, 96], sizes = [8, 32], strides = [1, 1]} : vector<8x128xf32> to vector<8x32xf32>
    %148 = vector.extract_strided_slice %139 {offsets = [0, 64], sizes = [8, 32], strides = [1, 1]} : vector<8x128xf32> to vector<8x32xf32>
    %149 = math.tanh %148 : vector<8x32xf32>
    %150 = arith.mulf %146, %88 : vector<8x32xf32>
    %151 = arith.mulf %145, %149 : vector<8x32xf32>
    %152 = arith.addf %150, %151 : vector<8x32xf32>
    %153 = math.tanh %152 : vector<8x32xf32>
    %154 = arith.mulf %147, %153 : vector<8x32xf32>
    %155 = arith.truncf %154 : vector<8x32xf32> to vector<8x32xbf16>
    %cst_26 = arith.constant dense<0.000000e+00> : vector<8x128xf32>
    %156 = tpu.matmul %155, %30, %cst_26 {dimension_numbers = #tpu.dot_dimension_numbers<[1], [0], [0], [1], [0, 0, 1, 1], [], []>} : vector<8x32xbf16>, vector<32x128xbf16>, vector<8x128xf32> -> vector<8x128xf32>
    %157 = arith.truncf %112 : vector<8x32xf32> to vector<8x32xbf16>
    %cst_27 = arith.constant dense<0.000000e+00> : vector<8x128xf32>
    %158 = tpu.matmul %157, %32, %cst_27 {dimension_numbers = #tpu.dot_dimension_numbers<[1], [0], [0], [1], [0, 0, 1, 1], [], []>} : vector<8x32xbf16>, vector<32x128xbf16>, vector<8x128xf32> -> vector<8x128xf32>
    %159 = arith.addf %156, %158 : vector<8x128xf32>
    %160 = vector.broadcast %8 : vector<1x128xf32> to vector<8x128xf32>
    %161 = arith.addf %159, %160 : vector<8x128xf32>
    %162 = arith.negf %161 : vector<8x128xf32>
    %163 = math.exp %162 : vector<8x128xf32>
    %cst_28 = arith.constant 1.000000e+00 : f32
    %164 = vector.broadcast %cst_28 : f32 to vector<8x128xf32>
    %165 = arith.addf %164, %163 : vector<8x128xf32>
    %166 = arith.divf %164, %165 : vector<8x128xf32>
    %167 = vector.extract_strided_slice %166 {offsets = [0, 0], sizes = [8, 32], strides = [1, 1]} : vector<8x128xf32> to vector<8x32xf32>
    %168 = vector.extract_strided_slice %166 {offsets = [0, 32], sizes = [8, 32], strides = [1, 1]} : vector<8x128xf32> to vector<8x32xf32>
    %169 = vector.extract_strided_slice %166 {offsets = [0, 96], sizes = [8, 32], strides = [1, 1]} : vector<8x128xf32> to vector<8x32xf32>
    %170 = vector.extract_strided_slice %161 {offsets = [0, 64], sizes = [8, 32], strides = [1, 1]} : vector<8x128xf32> to vector<8x32xf32>
    %171 = math.tanh %170 : vector<8x32xf32>
    %172 = arith.mulf %168, %110 : vector<8x32xf32>
    %173 = arith.mulf %167, %171 : vector<8x32xf32>
    %174 = arith.addf %172, %173 : vector<8x32xf32>
    %175 = math.tanh %174 : vector<8x32xf32>
    %176 = arith.mulf %169, %175 : vector<8x32xf32>
    %177 = vector.extract_strided_slice %47 {offsets = [2, 0, 0], sizes = [1, 8, 128], strides = [1, 1, 1]} : vector<8x8x128xf32> to vector<1x8x128xf32>
    %178 = vector.shape_cast %177 : vector<1x8x128xf32> to vector<8x128xf32>
    %179 = arith.truncf %132 : vector<8x32xf32> to vector<8x32xbf16>
    %cst_29 = arith.constant dense<0.000000e+00> : vector<8x128xf32>
    %180 = tpu.matmul %179, %24, %cst_29 {dimension_numbers = #tpu.dot_dimension_numbers<[1], [0], [0], [1], [0, 0, 1, 1], [], []>} : vector<8x32xbf16>, vector<32x128xbf16>, vector<8x128xf32> -> vector<8x128xf32>
    %181 = arith.addf %178, %180 : vector<8x128xf32>
    %182 = arith.negf %181 : vector<8x128xf32>
    %183 = math.exp %182 : vector<8x128xf32>
    %cst_30 = arith.constant 1.000000e+00 : f32
    %184 = vector.broadcast %cst_30 : f32 to vector<8x128xf32>
    %185 = arith.addf %184, %183 : vector<8x128xf32>
    %186 = arith.divf %184, %185 : vector<8x128xf32>
    %187 = vector.extract_strided_slice %186 {offsets = [0, 0], sizes = [8, 32], strides = [1, 1]} : vector<8x128xf32> to vector<8x32xf32>
    %188 = vector.extract_strided_slice %186 {offsets = [0, 32], sizes = [8, 32], strides = [1, 1]} : vector<8x128xf32> to vector<8x32xf32>
    %189 = vector.extract_strided_slice %186 {offsets = [0, 96], sizes = [8, 32], strides = [1, 1]} : vector<8x128xf32> to vector<8x32xf32>
    %190 = vector.extract_strided_slice %181 {offsets = [0, 64], sizes = [8, 32], strides = [1, 1]} : vector<8x128xf32> to vector<8x32xf32>
    %191 = math.tanh %190 : vector<8x32xf32>
    %192 = arith.mulf %188, %130 : vector<8x32xf32>
    %193 = arith.mulf %187, %191 : vector<8x32xf32>
    %194 = arith.addf %192, %193 : vector<8x32xf32>
    %195 = math.tanh %194 : vector<8x32xf32>
    %196 = arith.mulf %189, %195 : vector<8x32xf32>
    %197 = arith.truncf %196 : vector<8x32xf32> to vector<8x32xbf16>
    %cst_31 = arith.constant dense<0.000000e+00> : vector<8x128xf32>
    %198 = tpu.matmul %197, %26, %cst_31 {dimension_numbers = #tpu.dot_dimension_numbers<[1], [0], [0], [1], [0, 0, 1, 1], [], []>} : vector<8x32xbf16>, vector<32x128xbf16>, vector<8x128xf32> -> vector<8x128xf32>
    %199 = arith.truncf %154 : vector<8x32xf32> to vector<8x32xbf16>
    %cst_32 = arith.constant dense<0.000000e+00> : vector<8x128xf32>
    %200 = tpu.matmul %199, %28, %cst_32 {dimension_numbers = #tpu.dot_dimension_numbers<[1], [0], [0], [1], [0, 0, 1, 1], [], []>} : vector<8x32xbf16>, vector<32x128xbf16>, vector<8x128xf32> -> vector<8x128xf32>
    %201 = arith.addf %198, %200 : vector<8x128xf32>
    %202 = vector.broadcast %7 : vector<1x128xf32> to vector<8x128xf32>
    %203 = arith.addf %201, %202 : vector<8x128xf32>
    %204 = arith.negf %203 : vector<8x128xf32>
    %205 = math.exp %204 : vector<8x128xf32>
    %cst_33 = arith.constant 1.000000e+00 : f32
    %206 = vector.broadcast %cst_33 : f32 to vector<8x128xf32>
    %207 = arith.addf %206, %205 : vector<8x128xf32>
    %208 = arith.divf %206, %207 : vector<8x128xf32>
    %209 = vector.extract_strided_slice %208 {offsets = [0, 0], sizes = [8, 32], strides = [1, 1]} : vector<8x128xf32> to vector<8x32xf32>
    %210 = vector.extract_strided_slice %208 {offsets = [0, 32], sizes = [8, 32], strides = [1, 1]} : vector<8x128xf32> to vector<8x32xf32>
    %211 = vector.extract_strided_slice %208 {offsets = [0, 96], sizes = [8, 32], strides = [1, 1]} : vector<8x128xf32> to vector<8x32xf32>
    %212 = vector.extract_strided_slice %203 {offsets = [0, 64], sizes = [8, 32], strides = [1, 1]} : vector<8x128xf32> to vector<8x32xf32>
    %213 = math.tanh %212 : vector<8x32xf32>
    %214 = arith.mulf %210, %152 : vector<8x32xf32>
    %215 = arith.mulf %209, %213 : vector<8x32xf32>
    %216 = arith.addf %214, %215 : vector<8x32xf32>
    %217 = math.tanh %216 : vector<8x32xf32>
    %218 = arith.mulf %211, %217 : vector<8x32xf32>
    %219 = arith.truncf %218 : vector<8x32xf32> to vector<8x32xbf16>
    %cst_34 = arith.constant dense<0.000000e+00> : vector<8x128xf32>
    %220 = tpu.matmul %219, %30, %cst_34 {dimension_numbers = #tpu.dot_dimension_numbers<[1], [0], [0], [1], [0, 0, 1, 1], [], []>} : vector<8x32xbf16>, vector<32x128xbf16>, vector<8x128xf32> -> vector<8x128xf32>
    %221 = arith.truncf %176 : vector<8x32xf32> to vector<8x32xbf16>
    %cst_35 = arith.constant dense<0.000000e+00> : vector<8x128xf32>
    %222 = tpu.matmul %221, %32, %cst_35 {dimension_numbers = #tpu.dot_dimension_numbers<[1], [0], [0], [1], [0, 0, 1, 1], [], []>} : vector<8x32xbf16>, vector<32x128xbf16>, vector<8x128xf32> -> vector<8x128xf32>
    %223 = arith.addf %220, %222 : vector<8x128xf32>
    %224 = vector.broadcast %8 : vector<1x128xf32> to vector<8x128xf32>
    %225 = arith.addf %223, %224 : vector<8x128xf32>
    %226 = arith.negf %225 : vector<8x128xf32>
    %227 = math.exp %226 : vector<8x128xf32>
    %cst_36 = arith.constant 1.000000e+00 : f32
    %228 = vector.broadcast %cst_36 : f32 to vector<8x128xf32>
    %229 = arith.addf %228, %227 : vector<8x128xf32>
    %230 = arith.divf %228, %229 : vector<8x128xf32>
    %231 = vector.extract_strided_slice %230 {offsets = [0, 0], sizes = [8, 32], strides = [1, 1]} : vector<8x128xf32> to vector<8x32xf32>
    %232 = vector.extract_strided_slice %230 {offsets = [0, 32], sizes = [8, 32], strides = [1, 1]} : vector<8x128xf32> to vector<8x32xf32>
    %233 = vector.extract_strided_slice %230 {offsets = [0, 96], sizes = [8, 32], strides = [1, 1]} : vector<8x128xf32> to vector<8x32xf32>
    %234 = vector.extract_strided_slice %225 {offsets = [0, 64], sizes = [8, 32], strides = [1, 1]} : vector<8x128xf32> to vector<8x32xf32>
    %235 = math.tanh %234 : vector<8x32xf32>
    %236 = arith.mulf %232, %174 : vector<8x32xf32>
    %237 = arith.mulf %231, %235 : vector<8x32xf32>
    %238 = arith.addf %236, %237 : vector<8x32xf32>
    %239 = math.tanh %238 : vector<8x32xf32>
    %240 = arith.mulf %233, %239 : vector<8x32xf32>
    %241 = vector.extract_strided_slice %47 {offsets = [3, 0, 0], sizes = [1, 8, 128], strides = [1, 1, 1]} : vector<8x8x128xf32> to vector<1x8x128xf32>
    %242 = vector.shape_cast %241 : vector<1x8x128xf32> to vector<8x128xf32>
    %243 = arith.truncf %196 : vector<8x32xf32> to vector<8x32xbf16>
    %cst_37 = arith.constant dense<0.000000e+00> : vector<8x128xf32>
    %244 = tpu.matmul %243, %24, %cst_37 {dimension_numbers = #tpu.dot_dimension_numbers<[1], [0], [0], [1], [0, 0, 1, 1], [], []>} : vector<8x32xbf16>, vector<32x128xbf16>, vector<8x128xf32> -> vector<8x128xf32>
    %245 = arith.addf %242, %244 : vector<8x128xf32>
    %246 = arith.negf %245 : vector<8x128xf32>
    %247 = math.exp %246 : vector<8x128xf32>
    %cst_38 = arith.constant 1.000000e+00 : f32
    %248 = vector.broadcast %cst_38 : f32 to vector<8x128xf32>
    %249 = arith.addf %248, %247 : vector<8x128xf32>
    %250 = arith.divf %248, %249 : vector<8x128xf32>
    %251 = vector.extract_strided_slice %250 {offsets = [0, 0], sizes = [8, 32], strides = [1, 1]} : vector<8x128xf32> to vector<8x32xf32>
    %252 = vector.extract_strided_slice %250 {offsets = [0, 32], sizes = [8, 32], strides = [1, 1]} : vector<8x128xf32> to vector<8x32xf32>
    %253 = vector.extract_strided_slice %250 {offsets = [0, 96], sizes = [8, 32], strides = [1, 1]} : vector<8x128xf32> to vector<8x32xf32>
    %254 = vector.extract_strided_slice %245 {offsets = [0, 64], sizes = [8, 32], strides = [1, 1]} : vector<8x128xf32> to vector<8x32xf32>
    %255 = math.tanh %254 : vector<8x32xf32>
    %256 = arith.mulf %252, %194 : vector<8x32xf32>
    %257 = arith.mulf %251, %255 : vector<8x32xf32>
    %258 = arith.addf %256, %257 : vector<8x32xf32>
    %259 = math.tanh %258 : vector<8x32xf32>
    %260 = arith.mulf %253, %259 : vector<8x32xf32>
    %261 = arith.truncf %260 : vector<8x32xf32> to vector<8x32xbf16>
    %cst_39 = arith.constant dense<0.000000e+00> : vector<8x128xf32>
    %262 = tpu.matmul %261, %26, %cst_39 {dimension_numbers = #tpu.dot_dimension_numbers<[1], [0], [0], [1], [0, 0, 1, 1], [], []>} : vector<8x32xbf16>, vector<32x128xbf16>, vector<8x128xf32> -> vector<8x128xf32>
    %263 = arith.truncf %218 : vector<8x32xf32> to vector<8x32xbf16>
    %cst_40 = arith.constant dense<0.000000e+00> : vector<8x128xf32>
    %264 = tpu.matmul %263, %28, %cst_40 {dimension_numbers = #tpu.dot_dimension_numbers<[1], [0], [0], [1], [0, 0, 1, 1], [], []>} : vector<8x32xbf16>, vector<32x128xbf16>, vector<8x128xf32> -> vector<8x128xf32>
    %265 = arith.addf %262, %264 : vector<8x128xf32>
    %266 = vector.broadcast %7 : vector<1x128xf32> to vector<8x128xf32>
    %267 = arith.addf %265, %266 : vector<8x128xf32>
    %268 = arith.negf %267 : vector<8x128xf32>
    %269 = math.exp %268 : vector<8x128xf32>
    %cst_41 = arith.constant 1.000000e+00 : f32
    %270 = vector.broadcast %cst_41 : f32 to vector<8x128xf32>
    %271 = arith.addf %270, %269 : vector<8x128xf32>
    %272 = arith.divf %270, %271 : vector<8x128xf32>
    %273 = vector.extract_strided_slice %272 {offsets = [0, 0], sizes = [8, 32], strides = [1, 1]} : vector<8x128xf32> to vector<8x32xf32>
    %274 = vector.extract_strided_slice %272 {offsets = [0, 32], sizes = [8, 32], strides = [1, 1]} : vector<8x128xf32> to vector<8x32xf32>
    %275 = vector.extract_strided_slice %272 {offsets = [0, 96], sizes = [8, 32], strides = [1, 1]} : vector<8x128xf32> to vector<8x32xf32>
    %276 = vector.extract_strided_slice %267 {offsets = [0, 64], sizes = [8, 32], strides = [1, 1]} : vector<8x128xf32> to vector<8x32xf32>
    %277 = math.tanh %276 : vector<8x32xf32>
    %278 = arith.mulf %274, %216 : vector<8x32xf32>
    %279 = arith.mulf %273, %277 : vector<8x32xf32>
    %280 = arith.addf %278, %279 : vector<8x32xf32>
    %281 = math.tanh %280 : vector<8x32xf32>
    %282 = arith.mulf %275, %281 : vector<8x32xf32>
    %283 = arith.truncf %282 : vector<8x32xf32> to vector<8x32xbf16>
    %cst_42 = arith.constant dense<0.000000e+00> : vector<8x128xf32>
    %284 = tpu.matmul %283, %30, %cst_42 {dimension_numbers = #tpu.dot_dimension_numbers<[1], [0], [0], [1], [0, 0, 1, 1], [], []>} : vector<8x32xbf16>, vector<32x128xbf16>, vector<8x128xf32> -> vector<8x128xf32>
    %285 = arith.truncf %240 : vector<8x32xf32> to vector<8x32xbf16>
    %cst_43 = arith.constant dense<0.000000e+00> : vector<8x128xf32>
    %286 = tpu.matmul %285, %32, %cst_43 {dimension_numbers = #tpu.dot_dimension_numbers<[1], [0], [0], [1], [0, 0, 1, 1], [], []>} : vector<8x32xbf16>, vector<32x128xbf16>, vector<8x128xf32> -> vector<8x128xf32>
    %287 = arith.addf %284, %286 : vector<8x128xf32>
    %288 = vector.broadcast %8 : vector<1x128xf32> to vector<8x128xf32>
    %289 = arith.addf %287, %288 : vector<8x128xf32>
    %290 = arith.negf %289 : vector<8x128xf32>
    %291 = math.exp %290 : vector<8x128xf32>
    %cst_44 = arith.constant 1.000000e+00 : f32
    %292 = vector.broadcast %cst_44 : f32 to vector<8x128xf32>
    %293 = arith.addf %292, %291 : vector<8x128xf32>
    %294 = arith.divf %292, %293 : vector<8x128xf32>
    %295 = vector.extract_strided_slice %294 {offsets = [0, 0], sizes = [8, 32], strides = [1, 1]} : vector<8x128xf32> to vector<8x32xf32>
    %296 = vector.extract_strided_slice %294 {offsets = [0, 32], sizes = [8, 32], strides = [1, 1]} : vector<8x128xf32> to vector<8x32xf32>
    %297 = vector.extract_strided_slice %294 {offsets = [0, 96], sizes = [8, 32], strides = [1, 1]} : vector<8x128xf32> to vector<8x32xf32>
    %298 = vector.extract_strided_slice %289 {offsets = [0, 64], sizes = [8, 32], strides = [1, 1]} : vector<8x128xf32> to vector<8x32xf32>
    %299 = math.tanh %298 : vector<8x32xf32>
    %300 = arith.mulf %296, %238 : vector<8x32xf32>
    %301 = arith.mulf %295, %299 : vector<8x32xf32>
    %302 = arith.addf %300, %301 : vector<8x32xf32>
    %303 = math.tanh %302 : vector<8x32xf32>
    %304 = arith.mulf %297, %303 : vector<8x32xf32>
    %305 = vector.extract_strided_slice %47 {offsets = [4, 0, 0], sizes = [1, 8, 128], strides = [1, 1, 1]} : vector<8x8x128xf32> to vector<1x8x128xf32>
    %306 = vector.shape_cast %305 : vector<1x8x128xf32> to vector<8x128xf32>
    %307 = arith.truncf %260 : vector<8x32xf32> to vector<8x32xbf16>
    %cst_45 = arith.constant dense<0.000000e+00> : vector<8x128xf32>
    %308 = tpu.matmul %307, %24, %cst_45 {dimension_numbers = #tpu.dot_dimension_numbers<[1], [0], [0], [1], [0, 0, 1, 1], [], []>} : vector<8x32xbf16>, vector<32x128xbf16>, vector<8x128xf32> -> vector<8x128xf32>
    %309 = arith.addf %306, %308 : vector<8x128xf32>
    %310 = arith.negf %309 : vector<8x128xf32>
    %311 = math.exp %310 : vector<8x128xf32>
    %cst_46 = arith.constant 1.000000e+00 : f32
    %312 = vector.broadcast %cst_46 : f32 to vector<8x128xf32>
    %313 = arith.addf %312, %311 : vector<8x128xf32>
    %314 = arith.divf %312, %313 : vector<8x128xf32>
    %315 = vector.extract_strided_slice %314 {offsets = [0, 0], sizes = [8, 32], strides = [1, 1]} : vector<8x128xf32> to vector<8x32xf32>
    %316 = vector.extract_strided_slice %314 {offsets = [0, 32], sizes = [8, 32], strides = [1, 1]} : vector<8x128xf32> to vector<8x32xf32>
    %317 = vector.extract_strided_slice %314 {offsets = [0, 96], sizes = [8, 32], strides = [1, 1]} : vector<8x128xf32> to vector<8x32xf32>
    %318 = vector.extract_strided_slice %309 {offsets = [0, 64], sizes = [8, 32], strides = [1, 1]} : vector<8x128xf32> to vector<8x32xf32>
    %319 = math.tanh %318 : vector<8x32xf32>
    %320 = arith.mulf %316, %258 : vector<8x32xf32>
    %321 = arith.mulf %315, %319 : vector<8x32xf32>
    %322 = arith.addf %320, %321 : vector<8x32xf32>
    %323 = math.tanh %322 : vector<8x32xf32>
    %324 = arith.mulf %317, %323 : vector<8x32xf32>
    %325 = arith.truncf %324 : vector<8x32xf32> to vector<8x32xbf16>
    %cst_47 = arith.constant dense<0.000000e+00> : vector<8x128xf32>
    %326 = tpu.matmul %325, %26, %cst_47 {dimension_numbers = #tpu.dot_dimension_numbers<[1], [0], [0], [1], [0, 0, 1, 1], [], []>} : vector<8x32xbf16>, vector<32x128xbf16>, vector<8x128xf32> -> vector<8x128xf32>
    %327 = arith.truncf %282 : vector<8x32xf32> to vector<8x32xbf16>
    %cst_48 = arith.constant dense<0.000000e+00> : vector<8x128xf32>
    %328 = tpu.matmul %327, %28, %cst_48 {dimension_numbers = #tpu.dot_dimension_numbers<[1], [0], [0], [1], [0, 0, 1, 1], [], []>} : vector<8x32xbf16>, vector<32x128xbf16>, vector<8x128xf32> -> vector<8x128xf32>
    %329 = arith.addf %326, %328 : vector<8x128xf32>
    %330 = vector.broadcast %7 : vector<1x128xf32> to vector<8x128xf32>
    %331 = arith.addf %329, %330 : vector<8x128xf32>
    %332 = arith.negf %331 : vector<8x128xf32>
    %333 = math.exp %332 : vector<8x128xf32>
    %cst_49 = arith.constant 1.000000e+00 : f32
    %334 = vector.broadcast %cst_49 : f32 to vector<8x128xf32>
    %335 = arith.addf %334, %333 : vector<8x128xf32>
    %336 = arith.divf %334, %335 : vector<8x128xf32>
    %337 = vector.extract_strided_slice %336 {offsets = [0, 0], sizes = [8, 32], strides = [1, 1]} : vector<8x128xf32> to vector<8x32xf32>
    %338 = vector.extract_strided_slice %336 {offsets = [0, 32], sizes = [8, 32], strides = [1, 1]} : vector<8x128xf32> to vector<8x32xf32>
    %339 = vector.extract_strided_slice %336 {offsets = [0, 96], sizes = [8, 32], strides = [1, 1]} : vector<8x128xf32> to vector<8x32xf32>
    %340 = vector.extract_strided_slice %331 {offsets = [0, 64], sizes = [8, 32], strides = [1, 1]} : vector<8x128xf32> to vector<8x32xf32>
    %341 = math.tanh %340 : vector<8x32xf32>
    %342 = arith.mulf %338, %280 : vector<8x32xf32>
    %343 = arith.mulf %337, %341 : vector<8x32xf32>
    %344 = arith.addf %342, %343 : vector<8x32xf32>
    %345 = math.tanh %344 : vector<8x32xf32>
    %346 = arith.mulf %339, %345 : vector<8x32xf32>
    %347 = arith.truncf %346 : vector<8x32xf32> to vector<8x32xbf16>
    %cst_50 = arith.constant dense<0.000000e+00> : vector<8x128xf32>
    %348 = tpu.matmul %347, %30, %cst_50 {dimension_numbers = #tpu.dot_dimension_numbers<[1], [0], [0], [1], [0, 0, 1, 1], [], []>} : vector<8x32xbf16>, vector<32x128xbf16>, vector<8x128xf32> -> vector<8x128xf32>
    %349 = arith.truncf %304 : vector<8x32xf32> to vector<8x32xbf16>
    %cst_51 = arith.constant dense<0.000000e+00> : vector<8x128xf32>
    %350 = tpu.matmul %349, %32, %cst_51 {dimension_numbers = #tpu.dot_dimension_numbers<[1], [0], [0], [1], [0, 0, 1, 1], [], []>} : vector<8x32xbf16>, vector<32x128xbf16>, vector<8x128xf32> -> vector<8x128xf32>
    %351 = arith.addf %348, %350 : vector<8x128xf32>
    %352 = vector.broadcast %8 : vector<1x128xf32> to vector<8x128xf32>
    %353 = arith.addf %351, %352 : vector<8x128xf32>
    %354 = arith.negf %353 : vector<8x128xf32>
    %355 = math.exp %354 : vector<8x128xf32>
    %cst_52 = arith.constant 1.000000e+00 : f32
    %356 = vector.broadcast %cst_52 : f32 to vector<8x128xf32>
    %357 = arith.addf %356, %355 : vector<8x128xf32>
    %358 = arith.divf %356, %357 : vector<8x128xf32>
    %359 = vector.extract_strided_slice %358 {offsets = [0, 0], sizes = [8, 32], strides = [1, 1]} : vector<8x128xf32> to vector<8x32xf32>
    %360 = vector.extract_strided_slice %358 {offsets = [0, 32], sizes = [8, 32], strides = [1, 1]} : vector<8x128xf32> to vector<8x32xf32>
    %361 = vector.extract_strided_slice %358 {offsets = [0, 96], sizes = [8, 32], strides = [1, 1]} : vector<8x128xf32> to vector<8x32xf32>
    %362 = vector.extract_strided_slice %353 {offsets = [0, 64], sizes = [8, 32], strides = [1, 1]} : vector<8x128xf32> to vector<8x32xf32>
    %363 = math.tanh %362 : vector<8x32xf32>
    %364 = arith.mulf %360, %302 : vector<8x32xf32>
    %365 = arith.mulf %359, %363 : vector<8x32xf32>
    %366 = arith.addf %364, %365 : vector<8x32xf32>
    %367 = math.tanh %366 : vector<8x32xf32>
    %368 = arith.mulf %361, %367 : vector<8x32xf32>
    %369 = vector.extract_strided_slice %47 {offsets = [5, 0, 0], sizes = [1, 8, 128], strides = [1, 1, 1]} : vector<8x8x128xf32> to vector<1x8x128xf32>
    %370 = vector.shape_cast %369 : vector<1x8x128xf32> to vector<8x128xf32>
    %371 = arith.truncf %324 : vector<8x32xf32> to vector<8x32xbf16>
    %cst_53 = arith.constant dense<0.000000e+00> : vector<8x128xf32>
    %372 = tpu.matmul %371, %24, %cst_53 {dimension_numbers = #tpu.dot_dimension_numbers<[1], [0], [0], [1], [0, 0, 1, 1], [], []>} : vector<8x32xbf16>, vector<32x128xbf16>, vector<8x128xf32> -> vector<8x128xf32>
    %373 = arith.addf %370, %372 : vector<8x128xf32>
    %374 = arith.negf %373 : vector<8x128xf32>
    %375 = math.exp %374 : vector<8x128xf32>
    %cst_54 = arith.constant 1.000000e+00 : f32
    %376 = vector.broadcast %cst_54 : f32 to vector<8x128xf32>
    %377 = arith.addf %376, %375 : vector<8x128xf32>
    %378 = arith.divf %376, %377 : vector<8x128xf32>
    %379 = vector.extract_strided_slice %378 {offsets = [0, 0], sizes = [8, 32], strides = [1, 1]} : vector<8x128xf32> to vector<8x32xf32>
    %380 = vector.extract_strided_slice %378 {offsets = [0, 32], sizes = [8, 32], strides = [1, 1]} : vector<8x128xf32> to vector<8x32xf32>
    %381 = vector.extract_strided_slice %378 {offsets = [0, 96], sizes = [8, 32], strides = [1, 1]} : vector<8x128xf32> to vector<8x32xf32>
    %382 = vector.extract_strided_slice %373 {offsets = [0, 64], sizes = [8, 32], strides = [1, 1]} : vector<8x128xf32> to vector<8x32xf32>
    %383 = math.tanh %382 : vector<8x32xf32>
    %384 = arith.mulf %380, %322 : vector<8x32xf32>
    %385 = arith.mulf %379, %383 : vector<8x32xf32>
    %386 = arith.addf %384, %385 : vector<8x32xf32>
    %387 = math.tanh %386 : vector<8x32xf32>
    %388 = arith.mulf %381, %387 : vector<8x32xf32>
    %389 = arith.truncf %388 : vector<8x32xf32> to vector<8x32xbf16>
    %cst_55 = arith.constant dense<0.000000e+00> : vector<8x128xf32>
    %390 = tpu.matmul %389, %26, %cst_55 {dimension_numbers = #tpu.dot_dimension_numbers<[1], [0], [0], [1], [0, 0, 1, 1], [], []>} : vector<8x32xbf16>, vector<32x128xbf16>, vector<8x128xf32> -> vector<8x128xf32>
    %391 = arith.truncf %346 : vector<8x32xf32> to vector<8x32xbf16>
    %cst_56 = arith.constant dense<0.000000e+00> : vector<8x128xf32>
    %392 = tpu.matmul %391, %28, %cst_56 {dimension_numbers = #tpu.dot_dimension_numbers<[1], [0], [0], [1], [0, 0, 1, 1], [], []>} : vector<8x32xbf16>, vector<32x128xbf16>, vector<8x128xf32> -> vector<8x128xf32>
    %393 = arith.addf %390, %392 : vector<8x128xf32>
    %394 = vector.broadcast %7 : vector<1x128xf32> to vector<8x128xf32>
    %395 = arith.addf %393, %394 : vector<8x128xf32>
    %396 = arith.negf %395 : vector<8x128xf32>
    %397 = math.exp %396 : vector<8x128xf32>
    %cst_57 = arith.constant 1.000000e+00 : f32
    %398 = vector.broadcast %cst_57 : f32 to vector<8x128xf32>
    %399 = arith.addf %398, %397 : vector<8x128xf32>
    %400 = arith.divf %398, %399 : vector<8x128xf32>
    %401 = vector.extract_strided_slice %400 {offsets = [0, 0], sizes = [8, 32], strides = [1, 1]} : vector<8x128xf32> to vector<8x32xf32>
    %402 = vector.extract_strided_slice %400 {offsets = [0, 32], sizes = [8, 32], strides = [1, 1]} : vector<8x128xf32> to vector<8x32xf32>
    %403 = vector.extract_strided_slice %400 {offsets = [0, 96], sizes = [8, 32], strides = [1, 1]} : vector<8x128xf32> to vector<8x32xf32>
    %404 = vector.extract_strided_slice %395 {offsets = [0, 64], sizes = [8, 32], strides = [1, 1]} : vector<8x128xf32> to vector<8x32xf32>
    %405 = math.tanh %404 : vector<8x32xf32>
    %406 = arith.mulf %402, %344 : vector<8x32xf32>
    %407 = arith.mulf %401, %405 : vector<8x32xf32>
    %408 = arith.addf %406, %407 : vector<8x32xf32>
    %409 = math.tanh %408 : vector<8x32xf32>
    %410 = arith.mulf %403, %409 : vector<8x32xf32>
    %411 = arith.truncf %410 : vector<8x32xf32> to vector<8x32xbf16>
    %cst_58 = arith.constant dense<0.000000e+00> : vector<8x128xf32>
    %412 = tpu.matmul %411, %30, %cst_58 {dimension_numbers = #tpu.dot_dimension_numbers<[1], [0], [0], [1], [0, 0, 1, 1], [], []>} : vector<8x32xbf16>, vector<32x128xbf16>, vector<8x128xf32> -> vector<8x128xf32>
    %413 = arith.truncf %368 : vector<8x32xf32> to vector<8x32xbf16>
    %cst_59 = arith.constant dense<0.000000e+00> : vector<8x128xf32>
    %414 = tpu.matmul %413, %32, %cst_59 {dimension_numbers = #tpu.dot_dimension_numbers<[1], [0], [0], [1], [0, 0, 1, 1], [], []>} : vector<8x32xbf16>, vector<32x128xbf16>, vector<8x128xf32> -> vector<8x128xf32>
    %415 = arith.addf %412, %414 : vector<8x128xf32>
    %416 = vector.broadcast %8 : vector<1x128xf32> to vector<8x128xf32>
    %417 = arith.addf %415, %416 : vector<8x128xf32>
    %418 = arith.negf %417 : vector<8x128xf32>
    %419 = math.exp %418 : vector<8x128xf32>
    %cst_60 = arith.constant 1.000000e+00 : f32
    %420 = vector.broadcast %cst_60 : f32 to vector<8x128xf32>
    %421 = arith.addf %420, %419 : vector<8x128xf32>
    %422 = arith.divf %420, %421 : vector<8x128xf32>
    %423 = vector.extract_strided_slice %422 {offsets = [0, 0], sizes = [8, 32], strides = [1, 1]} : vector<8x128xf32> to vector<8x32xf32>
    %424 = vector.extract_strided_slice %422 {offsets = [0, 32], sizes = [8, 32], strides = [1, 1]} : vector<8x128xf32> to vector<8x32xf32>
    %425 = vector.extract_strided_slice %422 {offsets = [0, 96], sizes = [8, 32], strides = [1, 1]} : vector<8x128xf32> to vector<8x32xf32>
    %426 = vector.extract_strided_slice %417 {offsets = [0, 64], sizes = [8, 32], strides = [1, 1]} : vector<8x128xf32> to vector<8x32xf32>
    %427 = math.tanh %426 : vector<8x32xf32>
    %428 = arith.mulf %424, %366 : vector<8x32xf32>
    %429 = arith.mulf %423, %427 : vector<8x32xf32>
    %430 = arith.addf %428, %429 : vector<8x32xf32>
    %431 = math.tanh %430 : vector<8x32xf32>
    %432 = arith.mulf %425, %431 : vector<8x32xf32>
    %433 = vector.extract_strided_slice %47 {offsets = [6, 0, 0], sizes = [1, 8, 128], strides = [1, 1, 1]} : vector<8x8x128xf32> to vector<1x8x128xf32>
    %434 = vector.shape_cast %433 : vector<1x8x128xf32> to vector<8x128xf32>
    %435 = arith.truncf %388 : vector<8x32xf32> to vector<8x32xbf16>
    %cst_61 = arith.constant dense<0.000000e+00> : vector<8x128xf32>
    %436 = tpu.matmul %435, %24, %cst_61 {dimension_numbers = #tpu.dot_dimension_numbers<[1], [0], [0], [1], [0, 0, 1, 1], [], []>} : vector<8x32xbf16>, vector<32x128xbf16>, vector<8x128xf32> -> vector<8x128xf32>
    %437 = arith.addf %434, %436 : vector<8x128xf32>
    %438 = arith.negf %437 : vector<8x128xf32>
    %439 = math.exp %438 : vector<8x128xf32>
    %cst_62 = arith.constant 1.000000e+00 : f32
    %440 = vector.broadcast %cst_62 : f32 to vector<8x128xf32>
    %441 = arith.addf %440, %439 : vector<8x128xf32>
    %442 = arith.divf %440, %441 : vector<8x128xf32>
    %443 = vector.extract_strided_slice %442 {offsets = [0, 0], sizes = [8, 32], strides = [1, 1]} : vector<8x128xf32> to vector<8x32xf32>
    %444 = vector.extract_strided_slice %442 {offsets = [0, 32], sizes = [8, 32], strides = [1, 1]} : vector<8x128xf32> to vector<8x32xf32>
    %445 = vector.extract_strided_slice %442 {offsets = [0, 96], sizes = [8, 32], strides = [1, 1]} : vector<8x128xf32> to vector<8x32xf32>
    %446 = vector.extract_strided_slice %437 {offsets = [0, 64], sizes = [8, 32], strides = [1, 1]} : vector<8x128xf32> to vector<8x32xf32>
    %447 = math.tanh %446 : vector<8x32xf32>
    %448 = arith.mulf %444, %386 : vector<8x32xf32>
    %449 = arith.mulf %443, %447 : vector<8x32xf32>
    %450 = arith.addf %448, %449 : vector<8x32xf32>
    %451 = math.tanh %450 : vector<8x32xf32>
    %452 = arith.mulf %445, %451 : vector<8x32xf32>
    %453 = arith.truncf %452 : vector<8x32xf32> to vector<8x32xbf16>
    %cst_63 = arith.constant dense<0.000000e+00> : vector<8x128xf32>
    %454 = tpu.matmul %453, %26, %cst_63 {dimension_numbers = #tpu.dot_dimension_numbers<[1], [0], [0], [1], [0, 0, 1, 1], [], []>} : vector<8x32xbf16>, vector<32x128xbf16>, vector<8x128xf32> -> vector<8x128xf32>
    %455 = arith.truncf %410 : vector<8x32xf32> to vector<8x32xbf16>
    %cst_64 = arith.constant dense<0.000000e+00> : vector<8x128xf32>
    %456 = tpu.matmul %455, %28, %cst_64 {dimension_numbers = #tpu.dot_dimension_numbers<[1], [0], [0], [1], [0, 0, 1, 1], [], []>} : vector<8x32xbf16>, vector<32x128xbf16>, vector<8x128xf32> -> vector<8x128xf32>
    %457 = arith.addf %454, %456 : vector<8x128xf32>
    %458 = vector.broadcast %7 : vector<1x128xf32> to vector<8x128xf32>
    %459 = arith.addf %457, %458 : vector<8x128xf32>
    %460 = arith.negf %459 : vector<8x128xf32>
    %461 = math.exp %460 : vector<8x128xf32>
    %cst_65 = arith.constant 1.000000e+00 : f32
    %462 = vector.broadcast %cst_65 : f32 to vector<8x128xf32>
    %463 = arith.addf %462, %461 : vector<8x128xf32>
    %464 = arith.divf %462, %463 : vector<8x128xf32>
    %465 = vector.extract_strided_slice %464 {offsets = [0, 0], sizes = [8, 32], strides = [1, 1]} : vector<8x128xf32> to vector<8x32xf32>
    %466 = vector.extract_strided_slice %464 {offsets = [0, 32], sizes = [8, 32], strides = [1, 1]} : vector<8x128xf32> to vector<8x32xf32>
    %467 = vector.extract_strided_slice %464 {offsets = [0, 96], sizes = [8, 32], strides = [1, 1]} : vector<8x128xf32> to vector<8x32xf32>
    %468 = vector.extract_strided_slice %459 {offsets = [0, 64], sizes = [8, 32], strides = [1, 1]} : vector<8x128xf32> to vector<8x32xf32>
    %469 = math.tanh %468 : vector<8x32xf32>
    %470 = arith.mulf %466, %408 : vector<8x32xf32>
    %471 = arith.mulf %465, %469 : vector<8x32xf32>
    %472 = arith.addf %470, %471 : vector<8x32xf32>
    %473 = math.tanh %472 : vector<8x32xf32>
    %474 = arith.mulf %467, %473 : vector<8x32xf32>
    %475 = arith.truncf %474 : vector<8x32xf32> to vector<8x32xbf16>
    %cst_66 = arith.constant dense<0.000000e+00> : vector<8x128xf32>
    %476 = tpu.matmul %475, %30, %cst_66 {dimension_numbers = #tpu.dot_dimension_numbers<[1], [0], [0], [1], [0, 0, 1, 1], [], []>} : vector<8x32xbf16>, vector<32x128xbf16>, vector<8x128xf32> -> vector<8x128xf32>
    %477 = arith.truncf %432 : vector<8x32xf32> to vector<8x32xbf16>
    %cst_67 = arith.constant dense<0.000000e+00> : vector<8x128xf32>
    %478 = tpu.matmul %477, %32, %cst_67 {dimension_numbers = #tpu.dot_dimension_numbers<[1], [0], [0], [1], [0, 0, 1, 1], [], []>} : vector<8x32xbf16>, vector<32x128xbf16>, vector<8x128xf32> -> vector<8x128xf32>
    %479 = arith.addf %476, %478 : vector<8x128xf32>
    %480 = vector.broadcast %8 : vector<1x128xf32> to vector<8x128xf32>
    %481 = arith.addf %479, %480 : vector<8x128xf32>
    %482 = arith.negf %481 : vector<8x128xf32>
    %483 = math.exp %482 : vector<8x128xf32>
    %cst_68 = arith.constant 1.000000e+00 : f32
    %484 = vector.broadcast %cst_68 : f32 to vector<8x128xf32>
    %485 = arith.addf %484, %483 : vector<8x128xf32>
    %486 = arith.divf %484, %485 : vector<8x128xf32>
    %487 = vector.extract_strided_slice %486 {offsets = [0, 0], sizes = [8, 32], strides = [1, 1]} : vector<8x128xf32> to vector<8x32xf32>
    %488 = vector.extract_strided_slice %486 {offsets = [0, 32], sizes = [8, 32], strides = [1, 1]} : vector<8x128xf32> to vector<8x32xf32>
    %489 = vector.extract_strided_slice %486 {offsets = [0, 96], sizes = [8, 32], strides = [1, 1]} : vector<8x128xf32> to vector<8x32xf32>
    %490 = vector.extract_strided_slice %481 {offsets = [0, 64], sizes = [8, 32], strides = [1, 1]} : vector<8x128xf32> to vector<8x32xf32>
    %491 = math.tanh %490 : vector<8x32xf32>
    %492 = arith.mulf %488, %430 : vector<8x32xf32>
    %493 = arith.mulf %487, %491 : vector<8x32xf32>
    %494 = arith.addf %492, %493 : vector<8x32xf32>
    %495 = math.tanh %494 : vector<8x32xf32>
    %496 = arith.mulf %489, %495 : vector<8x32xf32>
    %497 = vector.extract_strided_slice %47 {offsets = [7, 0, 0], sizes = [1, 8, 128], strides = [1, 1, 1]} : vector<8x8x128xf32> to vector<1x8x128xf32>
    %498 = vector.shape_cast %497 : vector<1x8x128xf32> to vector<8x128xf32>
    %499 = arith.truncf %452 : vector<8x32xf32> to vector<8x32xbf16>
    %cst_69 = arith.constant dense<0.000000e+00> : vector<8x128xf32>
    %500 = tpu.matmul %499, %24, %cst_69 {dimension_numbers = #tpu.dot_dimension_numbers<[1], [0], [0], [1], [0, 0, 1, 1], [], []>} : vector<8x32xbf16>, vector<32x128xbf16>, vector<8x128xf32> -> vector<8x128xf32>
    %501 = arith.addf %498, %500 : vector<8x128xf32>
    %502 = arith.negf %501 : vector<8x128xf32>
    %503 = math.exp %502 : vector<8x128xf32>
    %cst_70 = arith.constant 1.000000e+00 : f32
    %504 = vector.broadcast %cst_70 : f32 to vector<8x128xf32>
    %505 = arith.addf %504, %503 : vector<8x128xf32>
    %506 = arith.divf %504, %505 : vector<8x128xf32>
    %507 = vector.extract_strided_slice %506 {offsets = [0, 0], sizes = [8, 32], strides = [1, 1]} : vector<8x128xf32> to vector<8x32xf32>
    %508 = vector.extract_strided_slice %506 {offsets = [0, 32], sizes = [8, 32], strides = [1, 1]} : vector<8x128xf32> to vector<8x32xf32>
    %509 = vector.extract_strided_slice %506 {offsets = [0, 96], sizes = [8, 32], strides = [1, 1]} : vector<8x128xf32> to vector<8x32xf32>
    %510 = vector.extract_strided_slice %501 {offsets = [0, 64], sizes = [8, 32], strides = [1, 1]} : vector<8x128xf32> to vector<8x32xf32>
    %511 = math.tanh %510 : vector<8x32xf32>
    %512 = arith.mulf %508, %450 : vector<8x32xf32>
    %513 = arith.mulf %507, %511 : vector<8x32xf32>
    %514 = arith.addf %512, %513 : vector<8x32xf32>
    %515 = math.tanh %514 : vector<8x32xf32>
    %516 = arith.mulf %509, %515 : vector<8x32xf32>
    %517 = arith.truncf %516 : vector<8x32xf32> to vector<8x32xbf16>
    %cst_71 = arith.constant dense<0.000000e+00> : vector<8x128xf32>
    %518 = tpu.matmul %517, %26, %cst_71 {dimension_numbers = #tpu.dot_dimension_numbers<[1], [0], [0], [1], [0, 0, 1, 1], [], []>} : vector<8x32xbf16>, vector<32x128xbf16>, vector<8x128xf32> -> vector<8x128xf32>
    %519 = arith.truncf %474 : vector<8x32xf32> to vector<8x32xbf16>
    %cst_72 = arith.constant dense<0.000000e+00> : vector<8x128xf32>
    %520 = tpu.matmul %519, %28, %cst_72 {dimension_numbers = #tpu.dot_dimension_numbers<[1], [0], [0], [1], [0, 0, 1, 1], [], []>} : vector<8x32xbf16>, vector<32x128xbf16>, vector<8x128xf32> -> vector<8x128xf32>
    %521 = arith.addf %518, %520 : vector<8x128xf32>
    %522 = vector.broadcast %7 : vector<1x128xf32> to vector<8x128xf32>
    %523 = arith.addf %521, %522 : vector<8x128xf32>
    %524 = arith.negf %523 : vector<8x128xf32>
    %525 = math.exp %524 : vector<8x128xf32>
    %cst_73 = arith.constant 1.000000e+00 : f32
    %526 = vector.broadcast %cst_73 : f32 to vector<8x128xf32>
    %527 = arith.addf %526, %525 : vector<8x128xf32>
    %528 = arith.divf %526, %527 : vector<8x128xf32>
    %529 = vector.extract_strided_slice %528 {offsets = [0, 0], sizes = [8, 32], strides = [1, 1]} : vector<8x128xf32> to vector<8x32xf32>
    %530 = vector.extract_strided_slice %528 {offsets = [0, 32], sizes = [8, 32], strides = [1, 1]} : vector<8x128xf32> to vector<8x32xf32>
    %531 = vector.extract_strided_slice %528 {offsets = [0, 96], sizes = [8, 32], strides = [1, 1]} : vector<8x128xf32> to vector<8x32xf32>
    %532 = vector.extract_strided_slice %523 {offsets = [0, 64], sizes = [8, 32], strides = [1, 1]} : vector<8x128xf32> to vector<8x32xf32>
    %533 = math.tanh %532 : vector<8x32xf32>
    %534 = arith.mulf %530, %472 : vector<8x32xf32>
    %535 = arith.mulf %529, %533 : vector<8x32xf32>
    %536 = arith.addf %534, %535 : vector<8x32xf32>
    %537 = math.tanh %536 : vector<8x32xf32>
    %538 = arith.mulf %531, %537 : vector<8x32xf32>
    %539 = arith.truncf %538 : vector<8x32xf32> to vector<8x32xbf16>
    %cst_74 = arith.constant dense<0.000000e+00> : vector<8x128xf32>
    %540 = tpu.matmul %539, %30, %cst_74 {dimension_numbers = #tpu.dot_dimension_numbers<[1], [0], [0], [1], [0, 0, 1, 1], [], []>} : vector<8x32xbf16>, vector<32x128xbf16>, vector<8x128xf32> -> vector<8x128xf32>
    %541 = arith.truncf %496 : vector<8x32xf32> to vector<8x32xbf16>
    %cst_75 = arith.constant dense<0.000000e+00> : vector<8x128xf32>
    %542 = tpu.matmul %541, %32, %cst_75 {dimension_numbers = #tpu.dot_dimension_numbers<[1], [0], [0], [1], [0, 0, 1, 1], [], []>} : vector<8x32xbf16>, vector<32x128xbf16>, vector<8x128xf32> -> vector<8x128xf32>
    %543 = arith.addf %540, %542 : vector<8x128xf32>
    %544 = vector.broadcast %8 : vector<1x128xf32> to vector<8x128xf32>
    %545 = arith.addf %543, %544 : vector<8x128xf32>
    %546 = arith.negf %545 : vector<8x128xf32>
    %547 = math.exp %546 : vector<8x128xf32>
    %cst_76 = arith.constant 1.000000e+00 : f32
    %548 = vector.broadcast %cst_76 : f32 to vector<8x128xf32>
    %549 = arith.addf %548, %547 : vector<8x128xf32>
    %550 = arith.divf %548, %549 : vector<8x128xf32>
    %551 = vector.extract_strided_slice %550 {offsets = [0, 0], sizes = [8, 32], strides = [1, 1]} : vector<8x128xf32> to vector<8x32xf32>
    %552 = vector.extract_strided_slice %550 {offsets = [0, 32], sizes = [8, 32], strides = [1, 1]} : vector<8x128xf32> to vector<8x32xf32>
    %553 = vector.extract_strided_slice %550 {offsets = [0, 96], sizes = [8, 32], strides = [1, 1]} : vector<8x128xf32> to vector<8x32xf32>
    %554 = vector.extract_strided_slice %545 {offsets = [0, 64], sizes = [8, 32], strides = [1, 1]} : vector<8x128xf32> to vector<8x32xf32>
    %555 = math.tanh %554 : vector<8x32xf32>
    %556 = arith.mulf %552, %494 : vector<8x32xf32>
    %557 = arith.mulf %551, %555 : vector<8x32xf32>
    %558 = arith.addf %556, %557 : vector<8x32xf32>
    %559 = math.tanh %558 : vector<8x32xf32>
    %560 = arith.mulf %553, %559 : vector<8x32xf32>
    %561 = tpu.concatenate %112, %176, %240, %304, %368, %432, %496, %560 in 0 : vector<8x32xf32>, vector<8x32xf32>, vector<8x32xf32>, vector<8x32xf32>, vector<8x32xf32>, vector<8x32xf32>, vector<8x32xf32>, vector<8x32xf32> -> vector<64x32xf32>
    %562 = vector.shape_cast %561 : vector<64x32xf32> to vector<8x8x32xf32>
    %563 = vector.broadcast %13 : vector<1x1x32xf32> to vector<8x8x32xf32>
    %564 = arith.mulf %562, %563 : vector<8x8x32xf32>
    %cst_77 = arith.constant dense<0.000000e+00> : vector<8x8xf32>
    %565 = vector.multi_reduction <add>, %564, %cst_77 [2] : vector<8x8x32xf32> to vector<8x8xf32>
    %566 = vector.shape_cast %565 : vector<8x8xf32> to vector<8x8x1xf32>
    %567 = vector.shape_cast %15 : vector<1x1xf32> to vector<1x1x1xf32>
    %568 = vector.broadcast %567 : vector<1x1x1xf32> to vector<8x8x1xf32>
    %569 = arith.addf %566, %568 : vector<8x8x1xf32>
    %cst_78 = arith.constant dense<0xFF800000> : vector<8x1xf32>
    %570 = vector.multi_reduction <maximumf>, %569, %cst_78 [0] : vector<8x8x1xf32> to vector<8x1xf32>
    %571 = vector.shape_cast %570 : vector<8x1xf32> to vector<1x8x1xf32>
    %572 = vector.broadcast %571 : vector<1x8x1xf32> to vector<8x8x1xf32>
    %573 = arith.subf %569, %572 : vector<8x8x1xf32>
    %574 = math.exp %573 : vector<8x8x1xf32>
    %cst_79 = arith.constant dense<0.000000e+00> : vector<8x1xf32>
    %575 = vector.multi_reduction <add>, %574, %cst_79 [0] : vector<8x8x1xf32> to vector<8x1xf32>
    %576 = vector.shape_cast %575 : vector<8x1xf32> to vector<1x8x1xf32>
    %577 = vector.broadcast %576 : vector<1x8x1xf32> to vector<8x8x1xf32>
    %578 = arith.divf %574, %577 : vector<8x8x1xf32>
    %579 = vector.broadcast %578 : vector<8x8x1xf32> to vector<8x8x32xf32>
    %580 = arith.mulf %579, %562 : vector<8x8x32xf32>
    %cst_80 = arith.constant dense<0.000000e+00> : vector<8x32xf32>
    %581 = vector.multi_reduction <add>, %580, %cst_80 [0] : vector<8x8x32xf32> to vector<8x32xf32>
    %cst_81 = arith.constant dense<0.000000e+00> : vector<8xf32>
    %582 = vector.multi_reduction <add>, %581, %cst_81 [1] : vector<8x32xf32> to vector<8xf32>
    %583 = vector.shape_cast %582 : vector<8xf32> to vector<8x1xf32>
    %cst_82 = arith.constant 3.200000e+01 : f32
    %584 = vector.broadcast %cst_82 : f32 to vector<8x1xf32>
    %585 = arith.divf %583, %584 : vector<8x1xf32>
    %586 = vector.broadcast %585 : vector<8x1xf32> to vector<8x32xf32>
    %587 = arith.subf %581, %586 : vector<8x32xf32>
    %588 = arith.mulf %587, %587 : vector<8x32xf32>
    %cst_83 = arith.constant dense<0.000000e+00> : vector<8xf32>
    %589 = vector.multi_reduction <add>, %588, %cst_83 [1] : vector<8x32xf32> to vector<8xf32>
    %590 = vector.shape_cast %589 : vector<8xf32> to vector<8x1xf32>
    %cst_84 = arith.constant 3.200000e+01 : f32
    %591 = vector.broadcast %cst_84 : f32 to vector<8x1xf32>
    %592 = arith.divf %590, %591 : vector<8x1xf32>
    %593 = vector.broadcast %585 : vector<8x1xf32> to vector<8x32xf32>
    %594 = arith.subf %581, %593 : vector<8x32xf32>
    %cst_85 = arith.constant 9.99999974E-6 : f32
    %595 = vector.broadcast %cst_85 : f32 to vector<8x1xf32>
    %596 = arith.addf %592, %595 : vector<8x1xf32>
    %597 = math.rsqrt %596 : vector<8x1xf32>
    %598 = vector.broadcast %597 : vector<8x1xf32> to vector<8x32xf32>
    %599 = arith.mulf %594, %598 : vector<8x32xf32>
    %600 = vector.broadcast %9 : vector<1x32xf32> to vector<8x32xf32>
    %601 = arith.mulf %599, %600 : vector<8x32xf32>
    %602 = vector.broadcast %10 : vector<1x32xf32> to vector<8x32xf32>
    %603 = arith.addf %601, %602 : vector<8x32xf32>
    %cst_86 = arith.constant dense<0.000000e+00> : vector<8x16xf32>
    %604 = tpu.matmul %603, %35, %cst_86 {dimension_numbers = #tpu.dot_dimension_numbers<[1], [0], [0], [1], [0, 0, 1, 1], [], []>} : vector<8x32xf32>, vector<32x16xf32>, vector<8x16xf32> -> vector<8x16xf32>
    %605 = vector.broadcast %11 : vector<1x16xf32> to vector<8x16xf32>
    %606 = arith.addf %604, %605 : vector<8x16xf32>
    %cst_87 = arith.constant 0.000000e+00 : f32
    %607 = vector.broadcast %cst_87 : f32 to vector<8x16xf32>
    %608 = arith.maximumf %606, %607 : vector<8x16xf32>
    %609 = vector.broadcast %14 : vector<1x16xf32> to vector<8x16xf32>
    %610 = arith.mulf %608, %609 : vector<8x16xf32>
    %cst_88 = arith.constant dense<0.000000e+00> : vector<8xf32>
    %611 = vector.multi_reduction <add>, %610, %cst_88 [1] : vector<8x16xf32> to vector<8xf32>
    %612 = vector.shape_cast %611 : vector<8xf32> to vector<8x1xf32>
    %613 = vector.broadcast %16 : vector<1x1xf32> to vector<8x1xf32>
    %614 = arith.addf %612, %613 : vector<8x1xf32>
    %c0_89 = arith.constant 0 : index
    %c0_90 = arith.constant 0 : index
    %615 = vector.load %arg3[%c0_89, %c0_90] : memref<8x1xf32, #tpu.memory_space<vmem>>, vector<8x1xf32>
    tpu.vector_store %arg3[%c0_89, %c0_90], %614 {strides = array<i32>} : memref<8x1xf32, #tpu.memory_space<vmem>>, vector<8x1xf32>,
    return
  }
}

</mosaic_0001>

<llo_original>
// kernel: attention_lstm_forward.1
$region0: #{attention_lstm_forward.1}
  #allocation0 [shape = 'u32[]', space=smem, size = 0x4, offset = 0x4, fixed_abs, tag = 'smem constant byte address 0x4 - core index']
  #allocation1 [shape = 'u32[144,128]{1,0:T(1,128)}', space=vmem, size = 0x12000, scoped, tag = 'internal scratch']
  %s0 = inlined_call_operand.vmem [shape: f32[8,8,2], index: 0, kind: input, shape index: {}]
  %s1 = inlined_call_operand.hbm [shape: f32[4,64,128], index: 1, kind: input, shape index: {}]
  %s2 = inlined_call_operand.vmem [shape: f32[8,128], index: 2, kind: input, shape index: {}]
  %s3 = inlined_call_operand.vmem [shape: f32[8,1], index: 3, kind: output, shape index: {}]
  %s4 = sld [smem:[#allocation0]]
  $region26: #{attention_lstm_forward.1} parent=0
    _
  %s6 = ssub.s32 1, %s4
  %s7 = scalar_select 0, %s6, %s4
  $region1: #{attention_lstm_forward.1} parent=0
    #allocation2 [shape = 'u8[131072]{0}', space=vmem, size = 0x20000, scoped, tag = 'input window, operand 1, single buffered']
    #allocation3 [shape = 's32[1]{0}', space=sflag, size = 0x4, scoped, tag = 'scoped memory for attention_lstm_forward.1']
    %8 = vsyncpa [#allocation3], 0
    // Predicated region
    $region2: #{attention_lstm_forward.1} parent=1 // pred_check
      _
    $region3: #{attention_lstm_forward.1} parent=1 // pred_check_branch
      %10 = sbr.rel (0) target = $region5
    $region4: #{attention_lstm_forward.1} parent=1 // pred_region
      _
    $region5: #{attention_lstm_forward.1} parent=1 // pred_fallthru
      _
    // Predicated region
    $region6: #{attention_lstm_forward.1} parent=1 // pred_check
      _
    $region7: #{attention_lstm_forward.1} parent=1 // pred_check_branch
      %12 = sbr.rel (0) target = $region9
    $region8: #{attention_lstm_forward.1} parent=1 // pred_region
      %s14 = ssub.s32 4096, 4096
      %15 = vsyncadd [#allocation3], %s14
      %s16 = sshll.u32 [#allocation2], 4
      %s17 = int_to_ptr.vmem [resolvable:$true] %s16
      %22 = dma.hbm_to_vmem [thread:$0]  %s1, 4096, %s17, [#allocation3], 128, 128, 8
    $region9: #{attention_lstm_forward.1} parent=1 // pred_fallthru
      _
    // Predicated region
    $region10: #{attention_lstm_forward.1} parent=1 // pred_check
      _
    $region11: #{attention_lstm_forward.1} parent=1 // pred_check_branch
      %24 = sbr.rel (0) target = $region13
    $region12: #{attention_lstm_forward.1} parent=1 // pred_region
      _
    $region13: #{attention_lstm_forward.1} parent=1 // pred_fallthru
      _
    // Predicated region
    $region14: #{attention_lstm_forward.1} parent=1 // pred_check
      _
    $region15: #{attention_lstm_forward.1} parent=1 // pred_check_branch
      %26 = sbr.rel (0) target = $region17
    $region16: #{attention_lstm_forward.1} parent=1 // pred_region
      %27 = dma.done [#allocation3], 4096
    $region17: #{attention_lstm_forward.1} parent=1 // pred_fallthru
      _
    %v29 = vld [vmem:[%s2] sm:$0xff]
    %v30 = vld [vmem:[#allocation2] sm:$0xff]
    %v31 = vld [vmem:[#allocation2 + $0x8] sm:$0xff]
    %v32 = vld [vmem:[#allocation2 + $0x10] sm:$0xff]
    %v33 = vld [vmem:[#allocation2 + $0x18] sm:$0xff]
    %s34 = scalar_lea.vmem [#allocation2], 64
    %v35 = vld [vmem:[%s34] sm:$0xff]
    %v36 = vld [vmem:[%s34 + $0x8] sm:$0xff]
    %v37 = vld [vmem:[%s34 + $0x10] sm:$0xff]
    %v38 = vld [vmem:[%s34 + $0x18] sm:$0xff]
    %v39 = vld [vmem:[%s34 + $0x20] sm:$0xff]
    %v40 = vld [vmem:[%s34 + $0x28] sm:$0xff]
    %v41 = vld [vmem:[%s34 + $0x30] sm:$0xff]
    %v42 = vld [vmem:[%s34 + $0x38] sm:$0xff]
    %s43 = scalar_lea.vmem [#allocation2], 128
    %v44 = vld [vmem:[%s43] sm:$0xff]
    %v45 = vld [vmem:[%s43 + $0x8] sm:$0xff]
    %v46 = vld [vmem:[%s43 + $0x10] sm:$0xff]
    %v47 = vld [vmem:[%s43 + $0x18] sm:$0xff]
    %v48 = vld [vmem:[%s43 + $0x20] sm:$0xff]
    %v49 = vld [vmem:[%s43 + $0x28] sm:$0xff]
    %v50 = vld [vmem:[%s43 + $0x30] sm:$0xff]
    %v51 = vld [vmem:[%s43 + $0x38] sm:$0xff]
    %v52 = vpack.c.bf16 %v31, %v30
    %v53 = vpack.c.bf16 %v33, %v32
    %v54 = vpack.c.bf16 %v36, %v35
    %v55 = vpack.c.bf16 %v38, %v37
    %v56 = vpack.c.bf16 %v40, %v39
    %v57 = vpack.c.bf16 %v42, %v41
    %v58 = vpack.c.bf16 %v45, %v44
    %v59 = vpack.c.bf16 %v47, %v46
    %v60 = vpack.c.bf16 %v49, %v48
    %v61 = vpack.c.bf16 %v51, %v50
    %s62 = scalar_lea.vmem [#allocation2], 192
    %v63 = vld [vmem:[%s62] sm:$0xff]
    %v64 = vld [vmem:[%s62 + $0x8] sm:$0xff]
    %v65 = vld [vmem:[%s62 + $0x10] sm:$0xff]
    %v66 = vld [vmem:[%s62 + $0x18] sm:$0xff]
    %v67 = vld [vmem:[%s0] sm:$0xff]
    %v68 = vld [vmem:[%s0 + $0x8] sm:$0xff]
    %v69 = vld [vmem:[%s0 + $0x10] sm:$0xff]
    %v70 = vld [vmem:[%s0 + $0x18] sm:$0xff]
    %v71 = vld [vmem:[%s0 + $0x20] sm:$0xff]
    %v72 = vld [vmem:[%s0 + $0x28] sm:$0xff]
    %v73 = vld [vmem:[%s0 + $0x30] sm:$0xff]
    %v74 = vld [vmem:[%s0 + $0x38] sm:$0xff]
    %76 = vset.pattern.permute.xlu0 0
    %77 = vperm.xlu0 %76, %v67
    %v78 = vpop.permute.xlu0 %77
    %81 = vset.pattern.permute.xlu0 0
    %82 = vperm.xlu0 %81, %v68
    %v83 = vpop.permute.xlu0 %82
    %86 = vset.pattern.permute.xlu0 0
    %87 = vperm.xlu0 %86, %v69
    %v88 = vpop.permute.xlu0 %87
    %91 = vset.pattern.permute.xlu0 0
    %92 = vperm.xlu0 %91, %v70
    %v93 = vpop.permute.xlu0 %92
    %96 = vset.pattern.permute.xlu0 0
    %97 = vperm.xlu0 %96, %v71
    %v98 = vpop.permute.xlu0 %97
    %101 = vset.pattern.permute.xlu0 0
    %102 = vperm.xlu0 %101, %v72
    %v103 = vpop.permute.xlu0 %102
    %106 = vset.pattern.permute.xlu0 0
    %107 = vperm.xlu0 %106, %v73
    %v108 = vpop.permute.xlu0 %107
    %111 = vset.pattern.permute.xlu0 0
    %112 = vperm.xlu0 %111, %v74
    %v113 = vpop.permute.xlu0 %112
    %v115 = vlaneseq
    %v116 = vshrl.u32 %v115, 7
    %v117 = vsub.s32 0, %v116
    %v118 = vrot.slane %v29, %v117
    %v119 = vmul.f32 %v78, %v118
    %v120 = vmul.f32 %v83, %v118
    %v121 = vmul.f32 %v88, %v118
    %v122 = vmul.f32 %v93, %v118
    %v123 = vmul.f32 %v98, %v118
    %v124 = vmul.f32 %v103, %v118
    %v125 = vmul.f32 %v108, %v118
    %v126 = vmul.f32 %v113, %v118
    %127 = vset.pattern.permute.xlu0 1
    %128 = vperm.xlu0 %127, %v67
    %v129 = vpop.permute.xlu0 %128
    %131 = vset.pattern.permute.xlu0 1
    %132 = vperm.xlu0 %131, %v68
    %v133 = vpop.permute.xlu0 %132
    %135 = vset.pattern.permute.xlu0 1
    %136 = vperm.xlu0 %135, %v69
    %v137 = vpop.permute.xlu0 %136
    %139 = vset.pattern.permute.xlu0 1
    %140 = vperm.xlu0 %139, %v70
    %v141 = vpop.permute.xlu0 %140
    %143 = vset.pattern.permute.xlu0 1
    %144 = vperm.xlu0 %143, %v71
    %v145 = vpop.permute.xlu0 %144
    %147 = vset.pattern.permute.xlu0 1
    %148 = vperm.xlu0 %147, %v72
    %v149 = vpop.permute.xlu0 %148
    %151 = vset.pattern.permute.xlu0 1
    %152 = vperm.xlu0 %151, %v73
    %v153 = vpop.permute.xlu0 %152
    %155 = vset.pattern.permute.xlu0 1
    %156 = vperm.xlu0 %155, %v74
    %v157 = vpop.permute.xlu0 %156
    %v159 = vlaneseq
    %v160 = vshrl.u32 %v159, 7
    %v161 = vsub.s32 1, %v160
    %v162 = vrot.slane %v29, %v161
    %v163 = vmul.f32 %v129, %v162
    %v164 = vmul.f32 %v133, %v162
    %v165 = vmul.f32 %v137, %v162
    %v166 = vmul.f32 %v141, %v162
    %v167 = vmul.f32 %v145, %v162
    %v168 = vmul.f32 %v149, %v162
    %v169 = vmul.f32 %v153, %v162
    %v170 = vmul.f32 %v157, %v162
    %v171 = vadd.f32 %v119, %v163
    %v172 = vadd.f32 %v120, %v164
    %v173 = vadd.f32 %v121, %v165
    %v174 = vadd.f32 %v122, %v166
    %v175 = vadd.f32 %v123, %v167
    %v176 = vadd.f32 %v124, %v168
    %v177 = vadd.f32 %v125, %v169
    %v178 = vadd.f32 %v126, %v170
    %v179 = vlaneseq
    %v180 = vshrl.u32 %v179, 7
    %v181 = vsub.s32 2, %v180
    %v182 = vrot.slane %v29, %v181
    %v183 = vadd.f32 %v171, %v182
    %v184 = vadd.f32 %v172, %v182
    %v185 = vadd.f32 %v173, %v182
    %v186 = vadd.f32 %v174, %v182
    %v187 = vadd.f32 %v175, %v182
    %v188 = vadd.f32 %v176, %v182
    %v189 = vadd.f32 %v177, %v182
    %v190 = vadd.f32 %v178, %v182
    %vm191 = vcmask 261120
    %v193 = vsel %vm191, 0, 0
    %195 = vmatprep.subr.bf16.mxu0 0
    %196 = vmatpush1.bf16.msra.mxu0 0
    %197 = vmatprep.subr.bf16.mxu0 0
    %198 = vmatpush1.bf16.msra.mxu0 0
    %199 = vmatprep.subr.bf16.mxu0 0
    %200 = vmatpush1.bf16.msra.mxu0 0
    %201 = vmatprep.subr.bf16.mxu0 0
    %202 = vmatpush1.bf16.msra.mxu0 0
    %203 = vmatprep.subr.bf16.mxu0 0
    %204 = vmatpush1.bf16.msra.mxu0 0
    %205 = vmatprep.subr.bf16.mxu0 0
    %206 = vmatpush1.bf16.msra.mxu0 0
    %207 = vmatprep.subr.bf16.mxu0 0
    %208 = vmatpush1.bf16.msra.mxu0 %v53
    %209 = vmatprep.subr.bf16.mxu0 0
    %210 = vmatpush1.bf16.msra.mxu0 %v52
    %211 = vmatprep.subr.bf16.mxu0 0
    %212 = vmatpush2.bf16.msra.mxu0 0
    %213 = vmatprep.subr.bf16.mxu0 0
    %214 = vmatpush2.bf16.msra.mxu0 0
    %215 = vmatprep.subr.bf16.mxu0 0
    %216 = vmatpush2.bf16.msra.mxu0 0
    %217 = vmatprep.subr.bf16.mxu0 0
    %218 = vmatpush2.bf16.msra.mxu0 0
    %219 = vmatprep.subr.bf16.mxu0 0
    %220 = vmatpush2.bf16.msra.mxu0 0
    %221 = vmatprep.subr.bf16.mxu0 0
    %222 = vmatpush2.bf16.msra.mxu0 0
    %223 = vmatprep.subr.bf16.mxu0 0
    %224 = vmatpush2.bf16.msra.mxu0 0
    %225 = vmatprep.subr.bf16.mxu0 0
    %226 = vmatpush2.bf16.msra.mxu0 0
    %227 = vmatprep.mubr.bf16.mxu0 0
    %228 = vmatmul.mubr.bf16.gmra.mxu0 %v193
    %v229 = vpop.f32.mrf.mxu0
    %v230 = vadd.f32 0.0, %v229
    %v231 = vpop.f32.mrf.mxu0
    %v232 = vpop.f32.mrf.mxu0
    %v233 = vpop.f32.mrf.mxu0
    %234 = vdwg.mxu0
    %v235 = vadd.f32 %v183, %v230
    %v236 = vxor.u32 %v235, 2147483648
    %v237 = vmul.f32 %v236, 1.442695
    %v238 = vpow.pop %v237
    %v239 = vadd.f32 %v238, 1.0
    %v240 = vrcp.pop %v239
    %v241 = vmul.f32 1.0, %v240
    %v242 = vtanh.pop %v235
    %v243 = vmul.f32 %v241, 0.0
    %245 = vrot.lane.b32.xlu0 %v242, 64
    %v246 = vpop.permute.xlu0 %245
    %v248 = vmul.f32 %v241, %v246
    %250 = vrot.lane.b32.xlu0 %v248, 32
    %v251 = vpop.permute.xlu0 %250
    %v253 = vadd.f32 %v243, %v251
    %v254 = vtanh.pop %v253
    %256 = vrot.lane.b32.xlu0 %v254, 64
    %v257 = vpop.permute.xlu0 %256
    %v259 = vmul.f32 %v241, %v257
    %v260 = vpack.c.bf16 %v259, %v259
    %261 = vmatprep.subr.bf16.mxu0 0
    %262 = vmatpush1.bf16.msra.mxu0 0
    %263 = vmatprep.subr.bf16.mxu0 0
    %264 = vmatpush1.bf16.msra.mxu0 0
    %265 = vmatprep.subr.bf16.mxu0 0
    %266 = vmatpush1.bf16.msra.mxu0 0
    %267 = vmatprep.subr.bf16.mxu0 0
    %268 = vmatpush1.bf16.msra.mxu0 0
    %269 = vmatprep.subr.bf16.mxu0 0
    %270 = vmatpush1.bf16.msra.mxu0 0
    %271 = vmatprep.subr.bf16.mxu0 0
    %272 = vmatpush1.bf16.msra.mxu0 0
    %273 = vmatprep.subr.bf16.mxu0 0
    %274 = vmatpush1.bf16.msra.mxu0 %v57
    %275 = vmatprep.subr.bf16.mxu0 0
    %276 = vmatpush1.bf16.msra.mxu0 %v56
    %277 = vmatprep.subr.bf16.mxu0 0
    %278 = vmatpush2.bf16.msra.mxu0 0
    %279 = vmatprep.subr.bf16.mxu0 0
    %280 = vmatpush2.bf16.msra.mxu0 0
    %281 = vmatprep.subr.bf16.mxu0 0
    %282 = vmatpush2.bf16.msra.mxu0 0
    %283 = vmatprep.subr.bf16.mxu0 0
    %284 = vmatpush2.bf16.msra.mxu0 0
    %285 = vmatprep.subr.bf16.mxu0 0
    %286 = vmatpush2.bf16.msra.mxu0 0
    %287 = vmatprep.subr.bf16.mxu0 0
    %288 = vmatpush2.bf16.msra.mxu0 0
    %289 = vmatprep.subr.bf16.mxu0 0
    %290 = vmatpush2.bf16.msra.mxu0 0
    %291 = vmatprep.subr.bf16.mxu0 0
    %292 = vmatpush2.bf16.msra.mxu0 0
    %293 = vmatprep.mubr.bf16.mxu0 0
    %294 = vmatmul.mubr.bf16.gmra.mxu0 %v193
    %v295 = vpop.f32.mrf.mxu0
    %v296 = vadd.f32 0.0, %v295
    %v297 = vpop.f32.mrf.mxu0
    %v298 = vpop.f32.mrf.mxu0
    %v299 = vpop.f32.mrf.mxu0
    %300 = vdwg.mxu0
    %302 = vrot.lane.b32.xlu0 %v260, 32
    %v303 = vpop.permute.xlu0 %302
    %v305 = vsel %vm191, %v303, 0
    %307 = vmatprep.subr.bf16.mxu0 0
    %308 = vmatpush1.bf16.msra.mxu0 0
    %309 = vmatprep.subr.bf16.mxu0 0
    %310 = vmatpush1.bf16.msra.mxu0 0
    %311 = vmatprep.subr.bf16.mxu0 0
    %312 = vmatpush1.bf16.msra.mxu0 0
    %313 = vmatprep.subr.bf16.mxu0 0
    %314 = vmatpush1.bf16.msra.mxu0 0
    %315 = vmatprep.subr.bf16.mxu0 0
    %316 = vmatpush1.bf16.msra.mxu0 0
    %317 = vmatprep.subr.bf16.mxu0 0
    %318 = vmatpush1.bf16.msra.mxu0 0
    %319 = vmatprep.subr.bf16.mxu0 0
    %320 = vmatpush1.bf16.msra.mxu0 %v55
    %321 = vmatprep.subr.bf16.mxu0 0
    %322 = vmatpush1.bf16.msra.mxu0 %v54
    %323 = vmatprep.subr.bf16.mxu0 0
    %324 = vmatpush2.bf16.msra.mxu0 0
    %325 = vmatprep.subr.bf16.mxu0 0
    %326 = vmatpush2.bf16.msra.mxu0 0
    %327 = vmatprep.subr.bf16.mxu0 0
    %328 = vmatpush2.bf16.msra.mxu0 0
    %329 = vmatprep.subr.bf16.mxu0 0
    %330 = vmatpush2.bf16.msra.mxu0 0
    %331 = vmatprep.subr.bf16.mxu0 0
    %332 = vmatpush2.bf16.msra.mxu0 0
    %333 = vmatprep.subr.bf16.mxu0 0
    %334 = vmatpush2.bf16.msra.mxu0 0
    %335 = vmatprep.subr.bf16.mxu0 0
    %336 = vmatpush2.bf16.msra.mxu0 0
    %337 = vmatprep.subr.bf16.mxu0 0
    %338 = vmatpush2.bf16.msra.mxu0 0
    %339 = vmatprep.mubr.bf16.mxu0 0
    %340 = vmatmul.mubr.bf16.gmra.mxu0 %v305
    %v341 = vpop.f32.mrf.mxu0
    %v342 = vadd.f32 %v296, %v341
    %v343 = vpop.f32.mrf.mxu0
    %v344 = vpop.f32.mrf.mxu0
    %v345 = vpop.f32.mrf.mxu0
    %346 = vdwg.mxu0
    %v347 = vlaneseq
    %v348 = vshrl.u32 %v347, 7
    %v349 = vsub.s32 3, %v348
    %v350 = vrot.slane %v29, %v349
    %v351 = vadd.f32 %v342, %v350
    %v352 = vxor.u32 %v351, 2147483648
    %v353 = vmul.f32 %v352, 1.442695
    %v354 = vpow.pop %v353
    %v355 = vadd.f32 %v354, 1.0
    %v356 = vrcp.pop %v355
    %v357 = vmul.f32 1.0, %v356
    %v358 = vtanh.pop %v351
    %v359 = vmul.f32 %v357, 0.0
    %361 = vrot.lane.b32.xlu0 %v358, 64
    %v362 = vpop.permute.xlu0 %361
    %v364 = vmul.f32 %v357, %v362
    %366 = vrot.lane.b32.xlu0 %v364, 32
    %v367 = vpop.permute.xlu0 %366
    %v369 = vadd.f32 %v359, %v367
    %v370 = vtanh.pop %v369
    %372 = vrot.lane.b32.xlu0 %v370, 64
    %v373 = vpop.permute.xlu0 %372
    %v375 = vmul.f32 %v357, %v373
    %v376 = vpack.c.bf16 %v375, %v375
    %377 = vmatprep.subr.bf16.mxu0 0
    %378 = vmatpush1.bf16.msra.mxu0 0
    %379 = vmatprep.subr.bf16.mxu0 0
    %380 = vmatpush1.bf16.msra.mxu0 0
    %381 = vmatprep.subr.bf16.mxu0 0
    %382 = vmatpush1.bf16.msra.mxu0 0
    %383 = vmatprep.subr.bf16.mxu0 0
    %384 = vmatpush1.bf16.msra.mxu0 0
    %385 = vmatprep.subr.bf16.mxu0 0
    %386 = vmatpush1.bf16.msra.mxu0 0
    %387 = vmatprep.subr.bf16.mxu0 0
    %388 = vmatpush1.bf16.msra.mxu0 0
    %389 = vmatprep.subr.bf16.mxu0 0
    %390 = vmatpush1.bf16.msra.mxu0 %v61
    %391 = vmatprep.subr.bf16.mxu0 0
    %392 = vmatpush1.bf16.msra.mxu0 %v60
    %393 = vmatprep.subr.bf16.mxu0 0
    %394 = vmatpush2.bf16.msra.mxu0 0
    %395 = vmatprep.subr.bf16.mxu0 0
    %396 = vmatpush2.bf16.msra.mxu0 0
    %397 = vmatprep.subr.bf16.mxu0 0
    %398 = vmatpush2.bf16.msra.mxu0 0
    %399 = vmatprep.subr.bf16.mxu0 0
    %400 = vmatpush2.bf16.msra.mxu0 0
    %401 = vmatprep.subr.bf16.mxu0 0
    %402 = vmatpush2.bf16.msra.mxu0 0
    %403 = vmatprep.subr.bf16.mxu0 0
    %404 = vmatpush2.bf16.msra.mxu0 0
    %405 = vmatprep.subr.bf16.mxu0 0
    %406 = vmatpush2.bf16.msra.mxu0 0
    %407 = vmatprep.subr.bf16.mxu0 0
    %408 = vmatpush2.bf16.msra.mxu0 0
    %409 = vmatprep.mubr.bf16.mxu0 0
    %410 = vmatmul.mubr.bf16.gmra.mxu0 %v193
    %v411 = vpop.f32.mrf.mxu0
    %v412 = vadd.f32 0.0, %v411
    %v413 = vpop.f32.mrf.mxu0
    %v414 = vpop.f32.mrf.mxu0
    %v415 = vpop.f32.mrf.mxu0
    %416 = vdwg.mxu0
    %418 = vrot.lane.b32.xlu0 %v376, 32
    %v419 = vpop.permute.xlu0 %418
    %v421 = vsel %vm191, %v419, 0
    %423 = vmatprep.subr.bf16.mxu0 0
    %424 = vmatpush1.bf16.msra.mxu0 0
    %425 = vmatprep.subr.bf16.mxu0 0
    %426 = vmatpush1.bf16.msra.mxu0 0
    %427 = vmatprep.subr.bf16.mxu0 0
    %428 = vmatpush1.bf16.msra.mxu0 0
    %429 = vmatprep.subr.bf16.mxu0 0
    %430 = vmatpush1.bf16.msra.mxu0 0
    %431 = vmatprep.subr.bf16.mxu0 0
    %432 = vmatpush1.bf16.msra.mxu0 0
    %433 = vmatprep.subr.bf16.mxu0 0
    %434 = vmatpush1.bf16.msra.mxu0 0
    %435 = vmatprep.subr.bf16.mxu0 0
    %436 = vmatpush1.bf16.msra.mxu0 %v59
    %437 = vmatprep.subr.bf16.mxu0 0
    %438 = vmatpush1.bf16.msra.mxu0 %v58
    %439 = vmatprep.subr.bf16.mxu0 0
    %440 = vmatpush2.bf16.msra.mxu0 0
    %441 = vmatprep.subr.bf16.mxu0 0
    %442 = vmatpush2.bf16.msra.mxu0 0
    %443 = vmatprep.subr.bf16.mxu0 0
    %444 = vmatpush2.bf16.msra.mxu0 0
    %445 = vmatprep.subr.bf16.mxu0 0
    %446 = vmatpush2.bf16.msra.mxu0 0
    %447 = vmatprep.subr.bf16.mxu0 0
    %448 = vmatpush2.bf16.msra.mxu0 0
    %449 = vmatprep.subr.bf16.mxu0 0
    %450 = vmatpush2.bf16.msra.mxu0 0
    %451 = vmatprep.subr.bf16.mxu0 0
    %452 = vmatpush2.bf16.msra.mxu0 0
    %453 = vmatprep.subr.bf16.mxu0 0
    %454 = vmatpush2.bf16.msra.mxu0 0
    %455 = vmatprep.mubr.bf16.mxu0 0
    %456 = vmatmul.mubr.bf16.gmra.mxu0 %v421
    %v457 = vpop.f32.mrf.mxu0
    %v458 = vadd.f32 %v412, %v457
    %v459 = vpop.f32.mrf.mxu0
    %v460 = vpop.f32.mrf.mxu0
    %v461 = vpop.f32.mrf.mxu0
    %462 = vdwg.mxu0
    %v463 = vlaneseq
    %v464 = vshrl.u32 %v463, 7
    %v465 = vsub.s32 4, %v464
    %v466 = vrot.slane %v29, %v465
    %v467 = vadd.f32 %v458, %v466
    %v468 = vxor.u32 %v467, 2147483648
    %v469 = vmul.f32 %v468, 1.442695
    %v470 = vpow.pop %v469
    %v471 = vadd.f32 %v470, 1.0
    %v472 = vrcp.pop %v471
    %v473 = vmul.f32 1.0, %v472
    %v474 = vtanh.pop %v467
    %v475 = vmul.f32 %v473, 0.0
    %477 = vrot.lane.b32.xlu0 %v474, 64
    %v478 = vpop.permute.xlu0 %477
    %v480 = vmul.f32 %v473, %v478
    %482 = vrot.lane.b32.xlu0 %v480, 32
    %v483 = vpop.permute.xlu0 %482
    %v485 = vadd.f32 %v475, %v483
    %v486 = vtanh.pop %v485
    %488 = vrot.lane.b32.xlu0 %v486, 64
    %v489 = vpop.permute.xlu0 %488
    %v491 = vmul.f32 %v473, %v489
    %492 = vmatprep.subr.bf16.mxu0 0
    %493 = vmatpush1.bf16.msra.mxu0 0
    %494 = vmatprep.subr.bf16.mxu0 0
    %495 = vmatpush1.bf16.msra.mxu0 0
    %496 = vmatprep.subr.bf16.mxu0 0
    %497 = vmatpush1.bf16.msra.mxu0 0
    %498 = vmatprep.subr.bf16.mxu0 0
    %499 = vmatpush1.bf16.msra.mxu0 0
    %500 = vmatprep.subr.bf16.mxu0 0
    %501 = vmatpush1.bf16.msra.mxu0 0
    %502 = vmatprep.subr.bf16.mxu0 0
    %503 = vmatpush1.bf16.msra.mxu0 0
    %504 = vmatprep.subr.bf16.mxu0 0
    %505 = vmatpush1.bf16.msra.mxu0 %v53
    %506 = vmatprep.subr.bf16.mxu0 0
    %507 = vmatpush1.bf16.msra.mxu0 %v52
    %508 = vmatprep.subr.bf16.mxu0 0
    %509 = vmatpush2.bf16.msra.mxu0 0
    %510 = vmatprep.subr.bf16.mxu0 0
    %511 = vmatpush2.bf16.msra.mxu0 0
    %512 = vmatprep.subr.bf16.mxu0 0
    %513 = vmatpush2.bf16.msra.mxu0 0
    %514 = vmatprep.subr.bf16.mxu0 0
    %515 = vmatpush2.bf16.msra.mxu0 0
    %516 = vmatprep.subr.bf16.mxu0 0
    %517 = vmatpush2.bf16.msra.mxu0 0
    %518 = vmatprep.subr.bf16.mxu0 0
    %519 = vmatpush2.bf16.msra.mxu0 0
    %520 = vmatprep.subr.bf16.mxu0 0
    %521 = vmatpush2.bf16.msra.mxu0 0
    %522 = vmatprep.subr.bf16.mxu0 0
    %523 = vmatpush2.bf16.msra.mxu0 0
    %524 = vmatprep.mubr.bf16.mxu0 0
    %525 = vmatmul.mubr.bf16.gmra.mxu0 %v305
    %v526 = vpop.f32.mrf.mxu0
    %v527 = vadd.f32 0.0, %v526
    %v528 = vpop.f32.mrf.mxu0
    %v529 = vpop.f32.mrf.mxu0
    %v530 = vpop.f32.mrf.mxu0
    %531 = vdwg.mxu0
    %v532 = vadd.f32 %v184, %v527
    %v533 = vxor.u32 %v532, 2147483648
    %v534 = vmul.f32 %v533, 1.442695
    %v535 = vpow.pop %v534
    %v536 = vadd.f32 %v535, 1.0
    %v537 = vrcp.pop %v536
    %v538 = vmul.f32 1.0, %v537
    %v539 = vtanh.pop %v532
    %v540 = vmul.f32 %v538, %v253
    %542 = vrot.lane.b32.xlu0 %v539, 64
    %v543 = vpop.permute.xlu0 %542
    %v545 = vmul.f32 %v538, %v543
    %547 = vrot.lane.b32.xlu0 %v545, 32
    %v548 = vpop.permute.xlu0 %547
    %v550 = vadd.f32 %v540, %v548
    %v551 = vtanh.pop %v550
    %553 = vrot.lane.b32.xlu0 %v551, 64
    %v554 = vpop.permute.xlu0 %553
    %v556 = vmul.f32 %v538, %v554
    %v557 = vpack.c.bf16 %v556, %v556
    %558 = vmatprep.subr.bf16.mxu0 0
    %559 = vmatpush1.bf16.msra.mxu0 0
    %560 = vmatprep.subr.bf16.mxu0 0
    %561 = vmatpush1.bf16.msra.mxu0 0
    %562 = vmatprep.subr.bf16.mxu0 0
    %563 = vmatpush1.bf16.msra.mxu0 0
    %564 = vmatprep.subr.bf16.mxu0 0
    %565 = vmatpush1.bf16.msra.mxu0 0
    %566 = vmatprep.subr.bf16.mxu0 0
    %567 = vmatpush1.bf16.msra.mxu0 0
    %568 = vmatprep.subr.bf16.mxu0 0
    %569 = vmatpush1.bf16.msra.mxu0 0
    %570 = vmatprep.subr.bf16.mxu0 0
    %571 = vmatpush1.bf16.msra.mxu0 %v57
    %572 = vmatprep.subr.bf16.mxu0 0
    %573 = vmatpush1.bf16.msra.mxu0 %v56
    %574 = vmatprep.subr.bf16.mxu0 0
    %575 = vmatpush2.bf16.msra.mxu0 0
    %576 = vmatprep.subr.bf16.mxu0 0
    %577 = vmatpush2.bf16.msra.mxu0 0
    %578 = vmatprep.subr.bf16.mxu0 0
    %579 = vmatpush2.bf16.msra.mxu0 0
    %580 = vmatprep.subr.bf16.mxu0 0
    %581 = vmatpush2.bf16.msra.mxu0 0
    %582 = vmatprep.subr.bf16.mxu0 0
    %583 = vmatpush2.bf16.msra.mxu0 0
    %584 = vmatprep.subr.bf16.mxu0 0
    %585 = vmatpush2.bf16.msra.mxu0 0
    %586 = vmatprep.subr.bf16.mxu0 0
    %587 = vmatpush2.bf16.msra.mxu0 0
    %588 = vmatprep.subr.bf16.mxu0 0
    %589 = vmatpush2.bf16.msra.mxu0 0
    %590 = vmatprep.mubr.bf16.mxu0 0
    %591 = vmatmul.mubr.bf16.gmra.mxu0 %v421
    %v592 = vpop.f32.mrf.mxu0
    %v593 = vadd.f32 0.0, %v592
    %v594 = vpop.f32.mrf.mxu0
    %v595 = vpop.f32.mrf.mxu0
    %v596 = vpop.f32.mrf.mxu0
    %597 = vdwg.mxu0
    %599 = vrot.lane.b32.xlu0 %v557, 32
    %v600 = vpop.permute.xlu0 %599
    %v602 = vsel %vm191, %v600, 0
    %604 = vmatprep.subr.bf16.mxu0 0
    %605 = vmatpush1.bf16.msra.mxu0 0
    %606 = vmatprep.subr.bf16.mxu0 0
    %607 = vmatpush1.bf16.msra.mxu0 0
    %608 = vmatprep.subr.bf16.mxu0 0
    %609 = vmatpush1.bf16.msra.mxu0 0
    %610 = vmatprep.subr.bf16.mxu0 0
    %611 = vmatpush1.bf16.msra.mxu0 0
    %612 = vmatprep.subr.bf16.mxu0 0
    %613 = vmatpush1.bf16.msra.mxu0 0
    %614 = vmatprep.subr.bf16.mxu0 0
    %615 = vmatpush1.bf16.msra.mxu0 0
    %616 = vmatprep.subr.bf16.mxu0 0
    %617 = vmatpush1.bf16.msra.mxu0 %v55
    %618 = vmatprep.subr.bf16.mxu0 0
    %619 = vmatpush1.bf16.msra.mxu0 %v54
    %620 = vmatprep.subr.bf16.mxu0 0
    %621 = vmatpush2.bf16.msra.mxu0 0
    %622 = vmatprep.subr.bf16.mxu0 0
    %623 = vmatpush2.bf16.msra.mxu0 0
    %624 = vmatprep.subr.bf16.mxu0 0
    %625 = vmatpush2.bf16.msra.mxu0 0
    %626 = vmatprep.subr.bf16.mxu0 0
    %627 = vmatpush2.bf16.msra.mxu0 0
    %628 = vmatprep.subr.bf16.mxu0 0
    %629 = vmatpush2.bf16.msra.mxu0 0
    %630 = vmatprep.subr.bf16.mxu0 0
    %631 = vmatpush2.bf16.msra.mxu0 0
    %632 = vmatprep.subr.bf16.mxu0 0
    %633 = vmatpush2.bf16.msra.mxu0 0
    %634 = vmatprep.subr.bf16.mxu0 0
    %635 = vmatpush2.bf16.msra.mxu0 0
    %636 = vmatprep.mubr.bf16.mxu0 0
    %637 = vmatmul.mubr.bf16.gmra.mxu0 %v602
    %v638 = vpop.f32.mrf.mxu0
    %v639 = vadd.f32 %v593, %v638
    %v640 = vpop.f32.mrf.mxu0
    %v641 = vpop.f32.mrf.mxu0
    %v642 = vpop.f32.mrf.mxu0
    %643 = vdwg.mxu0
    %v644 = vadd.f32 %v639, %v350
    %v645 = vxor.u32 %v644, 2147483648
    %v646 = vmul.f32 %v645, 1.442695
    %v647 = vpow.pop %v646
    %v648 = vadd.f32 %v647, 1.0
    %v649 = vrcp.pop %v648
    %v650 = vmul.f32 1.0, %v649
    %v651 = vtanh.pop %v644
    %v652 = vmul.f32 %v650, %v369
    %654 = vrot.lane.b32.xlu0 %v651, 64
    %v655 = vpop.permute.xlu0 %654
    %v657 = vmul.f32 %v650, %v655
    %659 = vrot.lane.b32.xlu0 %v657, 32
    %v660 = vpop.permute.xlu0 %659
    %v662 = vadd.f32 %v652, %v660
    %v663 = vtanh.pop %v662
    %665 = vrot.lane.b32.xlu0 %v663, 64
    %v666 = vpop.permute.xlu0 %665
    %v668 = vmul.f32 %v650, %v666
    %v669 = vpack.c.bf16 %v668, %v668
    %v670 = vpack.c.bf16 %v491, %v491
    %672 = vrot.lane.b32.xlu0 %v670, 32
    %v673 = vpop.permute.xlu0 %672
    %v675 = vsel %vm191, %v673, 0
    %677 = vmatprep.subr.bf16.mxu0 0
    %678 = vmatpush1.bf16.msra.mxu0 0
    %679 = vmatprep.subr.bf16.mxu0 0
    %680 = vmatpush1.bf16.msra.mxu0 0
    %681 = vmatprep.subr.bf16.mxu0 0
    %682 = vmatpush1.bf16.msra.mxu0 0
    %683 = vmatprep.subr.bf16.mxu0 0
    %684 = vmatpush1.bf16.msra.mxu0 0
    %685 = vmatprep.subr.bf16.mxu0 0
    %686 = vmatpush1.bf16.msra.mxu0 0
    %687 = vmatprep.subr.bf16.mxu0 0
    %688 = vmatpush1.bf16.msra.mxu0 0
    %689 = vmatprep.subr.bf16.mxu0 0
    %690 = vmatpush1.bf16.msra.mxu0 %v61
    %691 = vmatprep.subr.bf16.mxu0 0
    %692 = vmatpush1.bf16.msra.mxu0 %v60
    %693 = vmatprep.subr.bf16.mxu0 0
    %694 = vmatpush2.bf16.msra.mxu0 0
    %695 = vmatprep.subr.bf16.mxu0 0
    %696 = vmatpush2.bf16.msra.mxu0 0
    %697 = vmatprep.subr.bf16.mxu0 0
    %698 = vmatpush2.bf16.msra.mxu0 0
    %699 = vmatprep.subr.bf16.mxu0 0
    %700 = vmatpush2.bf16.msra.mxu0 0
    %701 = vmatprep.subr.bf16.mxu0 0
    %702 = vmatpush2.bf16.msra.mxu0 0
    %703 = vmatprep.subr.bf16.mxu0 0
    %704 = vmatpush2.bf16.msra.mxu0 0
    %705 = vmatprep.subr.bf16.mxu0 0
    %706 = vmatpush2.bf16.msra.mxu0 0
    %707 = vmatprep.subr.bf16.mxu0 0
    %708 = vmatpush2.bf16.msra.mxu0 0
    %709 = vmatprep.mubr.bf16.mxu0 0
    %710 = vmatmul.mubr.bf16.gmra.mxu0 %v675
    %v711 = vpop.f32.mrf.mxu0
    %v712 = vadd.f32 0.0, %v711
    %v713 = vpop.f32.mrf.mxu0
    %v714 = vpop.f32.mrf.mxu0
    %v715 = vpop.f32.mrf.mxu0
    %716 = vdwg.mxu0
    %718 = vrot.lane.b32.xlu0 %v669, 32
    %v719 = vpop.permute.xlu0 %718
    %v721 = vsel %vm191, %v719, 0
    %723 = vmatprep.subr.bf16.mxu0 0
    %724 = vmatpush1.bf16.msra.mxu0 0
    %725 = vmatprep.subr.bf16.mxu0 0
    %726 = vmatpush1.bf16.msra.mxu0 0
    %727 = vmatprep.subr.bf16.mxu0 0
    %728 = vmatpush1.bf16.msra.mxu0 0
    %729 = vmatprep.subr.bf16.mxu0 0
    %730 = vmatpush1.bf16.msra.mxu0 0
    %731 = vmatprep.subr.bf16.mxu0 0
    %732 = vmatpush1.bf16.msra.mxu0 0
    %733 = vmatprep.subr.bf16.mxu0 0
    %734 = vmatpush1.bf16.msra.mxu0 0
    %735 = vmatprep.subr.bf16.mxu0 0
    %736 = vmatpush1.bf16.msra.mxu0 %v59
    %737 = vmatprep.subr.bf16.mxu0 0
    %738 = vmatpush1.bf16.msra.mxu0 %v58
    %739 = vmatprep.subr.bf16.mxu0 0
    %740 = vmatpush2.bf16.msra.mxu0 0
    %741 = vmatprep.subr.bf16.mxu0 0
    %742 = vmatpush2.bf16.msra.mxu0 0
    %743 = vmatprep.subr.bf16.mxu0 0
    %744 = vmatpush2.bf16.msra.mxu0 0
    %745 = vmatprep.subr.bf16.mxu0 0
    %746 = vmatpush2.bf16.msra.mxu0 0
    %747 = vmatprep.subr.bf16.mxu0 0
    %748 = vmatpush2.bf16.msra.mxu0 0
    %749 = vmatprep.subr.bf16.mxu0 0
    %750 = vmatpush2.bf16.msra.mxu0 0
    %751 = vmatprep.subr.bf16.mxu0 0
    %752 = vmatpush2.bf16.msra.mxu0 0
    %753 = vmatprep.subr.bf16.mxu0 0
    %754 = vmatpush2.bf16.msra.mxu0 0
    %755 = vmatprep.mubr.bf16.mxu0 0
    %756 = vmatmul.mubr.bf16.gmra.mxu0 %v721
    %v757 = vpop.f32.mrf.mxu0
    %v758 = vadd.f32 %v712, %v757
    %v759 = vpop.f32.mrf.mxu0
    %v760 = vpop.f32.mrf.mxu0
    %v761 = vpop.f32.mrf.mxu0
    %762 = vdwg.mxu0
    %v763 = vadd.f32 %v758, %v466
    %v764 = vxor.u32 %v763, 2147483648
    %v765 = vmul.f32 %v764, 1.442695
    %v766 = vpow.pop %v765
    %v767 = vadd.f32 %v766, 1.0
    %v768 = vrcp.pop %v767
    %v769 = vmul.f32 1.0, %v768
    %v770 = vtanh.pop %v763
    %v771 = vmul.f32 %v769, %v485
    %773 = vrot.lane.b32.xlu0 %v770, 64
    %v774 = vpop.permute.xlu0 %773
    %v776 = vmul.f32 %v769, %v774
    %778 = vrot.lane.b32.xlu0 %v776, 32
    %v779 = vpop.permute.xlu0 %778
    %v781 = vadd.f32 %v771, %v779
    %v782 = vtanh.pop %v781
    %784 = vrot.lane.b32.xlu0 %v782, 64
    %v785 = vpop.permute.xlu0 %784
    %v787 = vmul.f32 %v769, %v785
    %788 = vmatprep.subr.bf16.mxu0 0
    %789 = vmatpush1.bf16.msra.mxu0 0
    %790 = vmatprep.subr.bf16.mxu0 0
    %791 = vmatpush1.bf16.msra.mxu0 0
    %792 = vmatprep.subr.bf16.mxu0 0
    %793 = vmatpush1.bf16.msra.mxu0 0
    %794 = vmatprep.subr.bf16.mxu0 0
    %795 = vmatpush1.bf16.msra.mxu0 0
    %796 = vmatprep.subr.bf16.mxu0 0
    %797 = vmatpush1.bf16.msra.mxu0 0
    %798 = vmatprep.subr.bf16.mxu0 0
    %799 = vmatpush1.bf16.msra.mxu0 0
    %800 = vmatprep.subr.bf16.mxu0 0
    %801 = vmatpush1.bf16.msra.mxu0 %v53
    %802 = vmatprep.subr.bf16.mxu0 0
    %803 = vmatpush1.bf16.msra.mxu0 %v52
    %804 = vmatprep.subr.bf16.mxu0 0
    %805 = vmatpush2.bf16.msra.mxu0 0
    %806 = vmatprep.subr.bf16.mxu0 0
    %807 = vmatpush2.bf16.msra.mxu0 0
    %808 = vmatprep.subr.bf16.mxu0 0
    %809 = vmatpush2.bf16.msra.mxu0 0
    %810 = vmatprep.subr.bf16.mxu0 0
    %811 = vmatpush2.bf16.msra.mxu0 0
    %812 = vmatprep.subr.bf16.mxu0 0
    %813 = vmatpush2.bf16.msra.mxu0 0
    %814 = vmatprep.subr.bf16.mxu0 0
    %815 = vmatpush2.bf16.msra.mxu0 0
    %816 = vmatprep.subr.bf16.mxu0 0
    %817 = vmatpush2.bf16.msra.mxu0 0
    %818 = vmatprep.subr.bf16.mxu0 0
    %819 = vmatpush2.bf16.msra.mxu0 0
    %820 = vmatprep.mubr.bf16.mxu0 0
    %821 = vmatmul.mubr.bf16.gmra.mxu0 %v602
    %v822 = vpop.f32.mrf.mxu0
    %v823 = vadd.f32 0.0, %v822
    %v824 = vpop.f32.mrf.mxu0
    %v825 = vpop.f32.mrf.mxu0
    %v826 = vpop.f32.mrf.mxu0
    %827 = vdwg.mxu0
    %v828 = vadd.f32 %v185, %v823
    %v829 = vxor.u32 %v828, 2147483648
    %v830 = vmul.f32 %v829, 1.442695
    %v831 = vpow.pop %v830
    %v832 = vadd.f32 %v831, 1.0
    %v833 = vrcp.pop %v832
    %v834 = vmul.f32 1.0, %v833
    %v835 = vtanh.pop %v828
    %v836 = vmul.f32 %v834, %v550
    %838 = vrot.lane.b32.xlu0 %v835, 64
    %v839 = vpop.permute.xlu0 %838
    %v841 = vmul.f32 %v834, %v839
    %843 = vrot.lane.b32.xlu0 %v841, 32
    %v844 = vpop.permute.xlu0 %843
    %v846 = vadd.f32 %v836, %v844
    %v847 = vtanh.pop %v846
    %849 = vrot.lane.b32.xlu0 %v847, 64
    %v850 = vpop.permute.xlu0 %849
    %v852 = vmul.f32 %v834, %v850
    %v853 = vpack.c.bf16 %v852, %v852
    %854 = vmatprep.subr.bf16.mxu0 0
    %855 = vmatpush1.bf16.msra.mxu0 0
    %856 = vmatprep.subr.bf16.mxu0 0
    %857 = vmatpush1.bf16.msra.mxu0 0
    %858 = vmatprep.subr.bf16.mxu0 0
    %859 = vmatpush1.bf16.msra.mxu0 0
    %860 = vmatprep.subr.bf16.mxu0 0
    %861 = vmatpush1.bf16.msra.mxu0 0
    %862 = vmatprep.subr.bf16.mxu0 0
    %863 = vmatpush1.bf16.msra.mxu0 0
    %864 = vmatprep.subr.bf16.mxu0 0
    %865 = vmatpush1.bf16.msra.mxu0 0
    %866 = vmatprep.subr.bf16.mxu0 0
    %867 = vmatpush1.bf16.msra.mxu0 %v57
    %868 = vmatprep.subr.bf16.mxu0 0
    %869 = vmatpush1.bf16.msra.mxu0 %v56
    %870 = vmatprep.subr.bf16.mxu0 0
    %871 = vmatpush2.bf16.msra.mxu0 0
    %872 = vmatprep.subr.bf16.mxu0 0
    %873 = vmatpush2.bf16.msra.mxu0 0
    %874 = vmatprep.subr.bf16.mxu0 0
    %875 = vmatpush2.bf16.msra.mxu0 0
    %876 = vmatprep.subr.bf16.mxu0 0
    %877 = vmatpush2.bf16.msra.mxu0 0
    %878 = vmatprep.subr.bf16.mxu0 0
    %879 = vmatpush2.bf16.msra.mxu0 0
    %880 = vmatprep.subr.bf16.mxu0 0
    %881 = vmatpush2.bf16.msra.mxu0 0
    %882 = vmatprep.subr.bf16.mxu0 0
    %883 = vmatpush2.bf16.msra.mxu0 0
    %884 = vmatprep.subr.bf16.mxu0 0
    %885 = vmatpush2.bf16.msra.mxu0 0
    %886 = vmatprep.mubr.bf16.mxu0 0
    %887 = vmatmul.mubr.bf16.gmra.mxu0 %v721
    %v888 = vpop.f32.mrf.mxu0
    %v889 = vadd.f32 0.0, %v888
    %v890 = vpop.f32.mrf.mxu0
    %v891 = vpop.f32.mrf.mxu0
    %v892 = vpop.f32.mrf.mxu0
    %893 = vdwg.mxu0
    %895 = vrot.lane.b32.xlu0 %v853, 32
    %v896 = vpop.permute.xlu0 %895
    %v898 = vsel %vm191, %v896, 0
    %900 = vmatprep.subr.bf16.mxu0 0
    %901 = vmatpush1.bf16.msra.mxu0 0
    %902 = vmatprep.subr.bf16.mxu0 0
    %903 = vmatpush1.bf16.msra.mxu0 0
    %904 = vmatprep.subr.bf16.mxu0 0
    %905 = vmatpush1.bf16.msra.mxu0 0
    %906 = vmatprep.subr.bf16.mxu0 0
    %907 = vmatpush1.bf16.msra.mxu0 0
    %908 = vmatprep.subr.bf16.mxu0 0
    %909 = vmatpush1.bf16.msra.mxu0 0
    %910 = vmatprep.subr.bf16.mxu0 0
    %911 = vmatpush1.bf16.msra.mxu0 0
    %912 = vmatprep.subr.bf16.mxu0 0
    %913 = vmatpush1.bf16.msra.mxu0 %v55
    %914 = vmatprep.subr.bf16.mxu0 0
    %915 = vmatpush1.bf16.msra.mxu0 %v54
    %916 = vmatprep.subr.bf16.mxu0 0
    %917 = vmatpush2.bf16.msra.mxu0 0
    %918 = vmatprep.subr.bf16.mxu0 0
    %919 = vmatpush2.bf16.msra.mxu0 0
    %920 = vmatprep.subr.bf16.mxu0 0
    %921 = vmatpush2.bf16.msra.mxu0 0
    %922 = vmatprep.subr.bf16.mxu0 0
    %923 = vmatpush2.bf16.msra.mxu0 0
    %924 = vmatprep.subr.bf16.mxu0 0
    %925 = vmatpush2.bf16.msra.mxu0 0
    %926 = vmatprep.subr.bf16.mxu0 0
    %927 = vmatpush2.bf16.msra.mxu0 0
    %928 = vmatprep.subr.bf16.mxu0 0
    %929 = vmatpush2.bf16.msra.mxu0 0
    %930 = vmatprep.subr.bf16.mxu0 0
    %931 = vmatpush2.bf16.msra.mxu0 0
    %932 = vmatprep.mubr.bf16.mxu0 0
    %933 = vmatmul.mubr.bf16.gmra.mxu0 %v898
    %v934 = vpop.f32.mrf.mxu0
    %v935 = vadd.f32 %v889, %v934
    %v936 = vpop.f32.mrf.mxu0
    %v937 = vpop.f32.mrf.mxu0
    %v938 = vpop.f32.mrf.mxu0
    %939 = vdwg.mxu0
    %v940 = vadd.f32 %v935, %v350
    %v941 = vxor.u32 %v940, 2147483648
    %v942 = vmul.f32 %v941, 1.442695
    %v943 = vpow.pop %v942
    %v944 = vadd.f32 %v943, 1.0
    %v945 = vrcp.pop %v944
    %v946 = vmul.f32 1.0, %v945
    %v947 = vtanh.pop %v940
    %v948 = vmul.f32 %v946, %v662
    %950 = vrot.lane.b32.xlu0 %v947, 64
    %v951 = vpop.permute.xlu0 %950
    %v953 = vmul.f32 %v946, %v951
    %955 = vrot.lane.b32.xlu0 %v953, 32
    %v956 = vpop.permute.xlu0 %955
    %v958 = vadd.f32 %v948, %v956
    %v959 = vtanh.pop %v958
    %961 = vrot.lane.b32.xlu0 %v959, 64
    %v962 = vpop.permute.xlu0 %961
    %v964 = vmul.f32 %v946, %v962
    %v965 = vpack.c.bf16 %v964, %v964
    %v966 = vpack.c.bf16 %v787, %v787
    %968 = vrot.lane.b32.xlu0 %v966, 32
    %v969 = vpop.permute.xlu0 %968
    %v971 = vsel %vm191, %v969, 0
    %973 = vmatprep.subr.bf16.mxu0 0
    %974 = vmatpush1.bf16.msra.mxu0 0
    %975 = vmatprep.subr.bf16.mxu0 0
    %976 = vmatpush1.bf16.msra.mxu0 0
    %977 = vmatprep.subr.bf16.mxu0 0
    %978 = vmatpush1.bf16.msra.mxu0 0
    %979 = vmatprep.subr.bf16.mxu0 0
    %980 = vmatpush1.bf16.msra.mxu0 0
    %981 = vmatprep.subr.bf16.mxu0 0
    %982 = vmatpush1.bf16.msra.mxu0 0
    %983 = vmatprep.subr.bf16.mxu0 0
    %984 = vmatpush1.bf16.msra.mxu0 0
    %985 = vmatprep.subr.bf16.mxu0 0
    %986 = vmatpush1.bf16.msra.mxu0 %v61
    %987 = vmatprep.subr.bf16.mxu0 0
    %988 = vmatpush1.bf16.msra.mxu0 %v60
    %989 = vmatprep.subr.bf16.mxu0 0
    %990 = vmatpush2.bf16.msra.mxu0 0
    %991 = vmatprep.subr.bf16.mxu0 0
    %992 = vmatpush2.bf16.msra.mxu0 0
    %993 = vmatprep.subr.bf16.mxu0 0
    %994 = vmatpush2.bf16.msra.mxu0 0
    %995 = vmatprep.subr.bf16.mxu0 0
    %996 = vmatpush2.bf16.msra.mxu0 0
    %997 = vmatprep.subr.bf16.mxu0 0
    %998 = vmatpush2.bf16.msra.mxu0 0
    %999 = vmatprep.subr.bf16.mxu0 0
    %1000 = vmatpush2.bf16.msra.mxu0 0
    %1001 = vmatprep.subr.bf16.mxu0 0
    %1002 = vmatpush2.bf16.msra.mxu0 0
    %1003 = vmatprep.subr.bf16.mxu0 0
    %1004 = vmatpush2.bf16.msra.mxu0 0
    %1005 = vmatprep.mubr.bf16.mxu0 0
    %1006 = vmatmul.mubr.bf16.gmra.mxu0 %v971
    %v1007 = vpop.f32.mrf.mxu0
    %v1008 = vadd.f32 0.0, %v1007
    %v1009 = vpop.f32.mrf.mxu0
    %v1010 = vpop.f32.mrf.mxu0
    %v1011 = vpop.f32.mrf.mxu0
    %1012 = vdwg.mxu0
    %1014 = vrot.lane.b32.xlu0 %v965, 32
    %v1015 = vpop.permute.xlu0 %1014
    %v1017 = vsel %vm191, %v1015, 0
    %1019 = vmatprep.subr.bf16.mxu0 0
    %1020 = vmatpush1.bf16.msra.mxu0 0
    %1021 = vmatprep.subr.bf16.mxu0 0
    %1022 = vmatpush1.bf16.msra.mxu0 0
    %1023 = vmatprep.subr.bf16.mxu0 0
    %1024 = vmatpush1.bf16.msra.mxu0 0
    %1025 = vmatprep.subr.bf16.mxu0 0
    %1026 = vmatpush1.bf16.msra.mxu0 0
    %1027 = vmatprep.subr.bf16.mxu0 0
    %1028 = vmatpush1.bf16.msra.mxu0 0
    %1029 = vmatprep.subr.bf16.mxu0 0
    %1030 = vmatpush1.bf16.msra.mxu0 0
    %1031 = vmatprep.subr.bf16.mxu0 0
    %1032 = vmatpush1.bf16.msra.mxu0 %v59
    %1033 = vmatprep.subr.bf16.mxu0 0
    %1034 = vmatpush1.bf16.msra.mxu0 %v58
    %1035 = vmatprep.subr.bf16.mxu0 0
    %1036 = vmatpush2.bf16.msra.mxu0 0
    %1037 = vmatprep.subr.bf16.mxu0 0
    %1038 = vmatpush2.bf16.msra.mxu0 0
    %1039 = vmatprep.subr.bf16.mxu0 0
    %1040 = vmatpush2.bf16.msra.mxu0 0
    %1041 = vmatprep.subr.bf16.mxu0 0
    %1042 = vmatpush2.bf16.msra.mxu0 0
    %1043 = vmatprep.subr.bf16.mxu0 0
    %1044 = vmatpush2.bf16.msra.mxu0 0
    %1045 = vmatprep.subr.bf16.mxu0 0
    %1046 = vmatpush2.bf16.msra.mxu0 0
    %1047 = vmatprep.subr.bf16.mxu0 0
    %1048 = vmatpush2.bf16.msra.mxu0 0
    %1049 = vmatprep.subr.bf16.mxu0 0
    %1050 = vmatpush2.bf16.msra.mxu0 0
    %1051 = vmatprep.mubr.bf16.mxu0 0
    %1052 = vmatmul.mubr.bf16.gmra.mxu0 %v1017
    %v1053 = vpop.f32.mrf.mxu0
    %v1054 = vadd.f32 %v1008, %v1053
    %v1055 = vpop.f32.mrf.mxu0
    %v1056 = vpop.f32.mrf.mxu0
    %v1057 = vpop.f32.mrf.mxu0
    %1058 = vdwg.mxu0
    %v1059 = vadd.f32 %v1054, %v466
    %v1060 = vxor.u32 %v1059, 2147483648
    %v1061 = vmul.f32 %v1060, 1.442695
    %v1062 = vpow.pop %v1061
    %v1063 = vadd.f32 %v1062, 1.0
    %v1064 = vrcp.pop %v1063
    %v1065 = vmul.f32 1.0, %v1064
    %v1066 = vtanh.pop %v1059
    %v1067 = vmul.f32 %v1065, %v781
    %1069 = vrot.lane.b32.xlu0 %v1066, 64
    %v1070 = vpop.permute.xlu0 %1069
    %v1072 = vmul.f32 %v1065, %v1070
    %1074 = vrot.lane.b32.xlu0 %v1072, 32
    %v1075 = vpop.permute.xlu0 %1074
    %v1077 = vadd.f32 %v1067, %v1075
    %v1078 = vtanh.pop %v1077
    %1080 = vrot.lane.b32.xlu0 %v1078, 64
    %v1081 = vpop.permute.xlu0 %1080
    %v1083 = vmul.f32 %v1065, %v1081
    %1084 = vmatprep.subr.bf16.mxu0 0
    %1085 = vmatpush1.bf16.msra.mxu0 0
    %1086 = vmatprep.subr.bf16.mxu0 0
    %1087 = vmatpush1.bf16.msra.mxu0 0
    %1088 = vmatprep.subr.bf16.mxu0 0
    %1089 = vmatpush1.bf16.msra.mxu0 0
    %1090 = vmatprep.subr.bf16.mxu0 0
    %1091 = vmatpush1.bf16.msra.mxu0 0
    %1092 = vmatprep.subr.bf16.mxu0 0
    %1093 = vmatpush1.bf16.msra.mxu0 0
    %1094 = vmatprep.subr.bf16.mxu0 0
    %1095 = vmatpush1.bf16.msra.mxu0 0
    %1096 = vmatprep.subr.bf16.mxu0 0
    %1097 = vmatpush1.bf16.msra.mxu0 %v53
    %1098 = vmatprep.subr.bf16.mxu0 0
    %1099 = vmatpush1.bf16.msra.mxu0 %v52
    %1100 = vmatprep.subr.bf16.mxu0 0
    %1101 = vmatpush2.bf16.msra.mxu0 0
    %1102 = vmatprep.subr.bf16.mxu0 0
    %1103 = vmatpush2.bf16.msra.mxu0 0
    %1104 = vmatprep.subr.bf16.mxu0 0
    %1105 = vmatpush2.bf16.msra.mxu0 0
    %1106 = vmatprep.subr.bf16.mxu0 0
    %1107 = vmatpush2.bf16.msra.mxu0 0
    %1108 = vmatprep.subr.bf16.mxu0 0
    %1109 = vmatpush2.bf16.msra.mxu0 0
    %1110 = vmatprep.subr.bf16.mxu0 0
    %1111 = vmatpush2.bf16.msra.mxu0 0
    %1112 = vmatprep.subr.bf16.mxu0 0
    %1113 = vmatpush2.bf16.msra.mxu0 0
    %1114 = vmatprep.subr.bf16.mxu0 0
    %1115 = vmatpush2.bf16.msra.mxu0 0
    %1116 = vmatprep.mubr.bf16.mxu0 0
    %1117 = vmatmul.mubr.bf16.gmra.mxu0 %v898
    %v1118 = vpop.f32.mrf.mxu0
    %v1119 = vadd.f32 0.0, %v1118
    %v1120 = vpop.f32.mrf.mxu0
    %v1121 = vpop.f32.mrf.mxu0
    %v1122 = vpop.f32.mrf.mxu0
    %1123 = vdwg.mxu0
    %v1124 = vadd.f32 %v186, %v1119
    %v1125 = vxor.u32 %v1124, 2147483648
    %v1126 = vmul.f32 %v1125, 1.442695
    %v1127 = vpow.pop %v1126
    %v1128 = vadd.f32 %v1127, 1.0
    %v1129 = vrcp.pop %v1128
    %v1130 = vmul.f32 1.0, %v1129
    %v1131 = vtanh.pop %v1124
    %v1132 = vmul.f32 %v1130, %v846
    %1134 = vrot.lane.b32.xlu0 %v1131, 64
    %v1135 = vpop.permute.xlu0 %1134
    %v1137 = vmul.f32 %v1130, %v1135
    %1139 = vrot.lane.b32.xlu0 %v1137, 32
    %v1140 = vpop.permute.xlu0 %1139
    %v1142 = vadd.f32 %v1132, %v1140
    %v1143 = vtanh.pop %v1142
    %1145 = vrot.lane.b32.xlu0 %v1143, 64
    %v1146 = vpop.permute.xlu0 %1145
    %v1148 = vmul.f32 %v1130, %v1146
    %v1149 = vpack.c.bf16 %v1148, %v1148
    %1150 = vmatprep.subr.bf16.mxu0 0
    %1151 = vmatpush1.bf16.msra.mxu0 0
    %1152 = vmatprep.subr.bf16.mxu0 0
    %1153 = vmatpush1.bf16.msra.mxu0 0
    %1154 = vmatprep.subr.bf16.mxu0 0
    %1155 = vmatpush1.bf16.msra.mxu0 0
    %1156 = vmatprep.subr.bf16.mxu0 0
    %1157 = vmatpush1.bf16.msra.mxu0 0
    %1158 = vmatprep.subr.bf16.mxu0 0
    %1159 = vmatpush1.bf16.msra.mxu0 0
    %1160 = vmatprep.subr.bf16.mxu0 0
    %1161 = vmatpush1.bf16.msra.mxu0 0
    %1162 = vmatprep.subr.bf16.mxu0 0
    %1163 = vmatpush1.bf16.msra.mxu0 %v57
    %1164 = vmatprep.subr.bf16.mxu0 0
    %1165 = vmatpush1.bf16.msra.mxu0 %v56
    %1166 = vmatprep.subr.bf16.mxu0 0
    %1167 = vmatpush2.bf16.msra.mxu0 0
    %1168 = vmatprep.subr.bf16.mxu0 0
    %1169 = vmatpush2.bf16.msra.mxu0 0
    %1170 = vmatprep.subr.bf16.mxu0 0
    %1171 = vmatpush2.bf16.msra.mxu0 0
    %1172 = vmatprep.subr.bf16.mxu0 0
    %1173 = vmatpush2.bf16.msra.mxu0 0
    %1174 = vmatprep.subr.bf16.mxu0 0
    %1175 = vmatpush2.bf16.msra.mxu0 0
    %1176 = vmatprep.subr.bf16.mxu0 0
    %1177 = vmatpush2.bf16.msra.mxu0 0
    %1178 = vmatprep.subr.bf16.mxu0 0
    %1179 = vmatpush2.bf16.msra.mxu0 0
    %1180 = vmatprep.subr.bf16.mxu0 0
    %1181 = vmatpush2.bf16.msra.mxu0 0
    %1182 = vmatprep.mubr.bf16.mxu0 0
    %1183 = vmatmul.mubr.bf16.gmra.mxu0 %v1017
    %v1184 = vpop.f32.mrf.mxu0
    %v1185 = vadd.f32 0.0, %v1184
    %v1186 = vpop.f32.mrf.mxu0
    %v1187 = vpop.f32.mrf.mxu0
    %v1188 = vpop.f32.mrf.mxu0
    %1189 = vdwg.mxu0
    %1191 = vrot.lane.b32.xlu0 %v1149, 32
    %v1192 = vpop.permute.xlu0 %1191
    %v1194 = vsel %vm191, %v1192, 0
    %1196 = vmatprep.subr.bf16.mxu0 0
    %1197 = vmatpush1.bf16.msra.mxu0 0
    %1198 = vmatprep.subr.bf16.mxu0 0
    %1199 = vmatpush1.bf16.msra.mxu0 0
    %1200 = vmatprep.subr.bf16.mxu0 0
    %1201 = vmatpush1.bf16.msra.mxu0 0
    %1202 = vmatprep.subr.bf16.mxu0 0
    %1203 = vmatpush1.bf16.msra.mxu0 0
    %1204 = vmatprep.subr.bf16.mxu0 0
    %1205 = vmatpush1.bf16.msra.mxu0 0
    %1206 = vmatprep.subr.bf16.mxu0 0
    %1207 = vmatpush1.bf16.msra.mxu0 0
    %1208 = vmatprep.subr.bf16.mxu0 0
    %1209 = vmatpush1.bf16.msra.mxu0 %v55
    %1210 = vmatprep.subr.bf16.mxu0 0
    %1211 = vmatpush1.bf16.msra.mxu0 %v54
    %1212 = vmatprep.subr.bf16.mxu0 0
    %1213 = vmatpush2.bf16.msra.mxu0 0
    %1214 = vmatprep.subr.bf16.mxu0 0
    %1215 = vmatpush2.bf16.msra.mxu0 0
    %1216 = vmatprep.subr.bf16.mxu0 0
    %1217 = vmatpush2.bf16.msra.mxu0 0
    %1218 = vmatprep.subr.bf16.mxu0 0
    %1219 = vmatpush2.bf16.msra.mxu0 0
    %1220 = vmatprep.subr.bf16.mxu0 0
    %1221 = vmatpush2.bf16.msra.mxu0 0
    %1222 = vmatprep.subr.bf16.mxu0 0
    %1223 = vmatpush2.bf16.msra.mxu0 0
    %1224 = vmatprep.subr.bf16.mxu0 0
    %1225 = vmatpush2.bf16.msra.mxu0 0
    %1226 = vmatprep.subr.bf16.mxu0 0
    %1227 = vmatpush2.bf16.msra.mxu0 0
    %1228 = vmatprep.mubr.bf16.mxu0 0
    %1229 = vmatmul.mubr.bf16.gmra.mxu0 %v1194
    %v1230 = vpop.f32.mrf.mxu0
    %v1231 = vadd.f32 %v1185, %v1230
    %v1232 = vpop.f32.mrf.mxu0
    %v1233 = vpop.f32.mrf.mxu0
    %v1234 = vpop.f32.mrf.mxu0
    %1235 = vdwg.mxu0
    %v1236 = vadd.f32 %v1231, %v350
    %v1237 = vxor.u32 %v1236, 2147483648
    %v1238 = vmul.f32 %v1237, 1.442695
    %v1239 = vpow.pop %v1238
    %v1240 = vadd.f32 %v1239, 1.0
    %v1241 = vrcp.pop %v1240
    %v1242 = vmul.f32 1.0, %v1241
    %v1243 = vtanh.pop %v1236
    %v1244 = vmul.f32 %v1242, %v958
    %1246 = vrot.lane.b32.xlu0 %v1243, 64
    %v1247 = vpop.permute.xlu0 %1246
    %v1249 = vmul.f32 %v1242, %v1247
    %1251 = vrot.lane.b32.xlu0 %v1249, 32
    %v1252 = vpop.permute.xlu0 %1251
    %v1254 = vadd.f32 %v1244, %v1252
    %v1255 = vtanh.pop %v1254
    %1257 = vrot.lane.b32.xlu0 %v1255, 64
    %v1258 = vpop.permute.xlu0 %1257
    %v1260 = vmul.f32 %v1242, %v1258
    %v1261 = vpack.c.bf16 %v1260, %v1260
    %v1262 = vpack.c.bf16 %v1083, %v1083
    %1264 = vrot.lane.b32.xlu0 %v1262, 32
    %v1265 = vpop.permute.xlu0 %1264
    %v1267 = vsel %vm191, %v1265, 0
    %1269 = vmatprep.subr.bf16.mxu0 0
    %1270 = vmatpush1.bf16.msra.mxu0 0
    %1271 = vmatprep.subr.bf16.mxu0 0
    %1272 = vmatpush1.bf16.msra.mxu0 0
    %1273 = vmatprep.subr.bf16.mxu0 0
    %1274 = vmatpush1.bf16.msra.mxu0 0
    %1275 = vmatprep.subr.bf16.mxu0 0
    %1276 = vmatpush1.bf16.msra.mxu0 0
    %1277 = vmatprep.subr.bf16.mxu0 0
    %1278 = vmatpush1.bf16.msra.mxu0 0
    %1279 = vmatprep.subr.bf16.mxu0 0
    %1280 = vmatpush1.bf16.msra.mxu0 0
    %1281 = vmatprep.subr.bf16.mxu0 0
    %1282 = vmatpush1.bf16.msra.mxu0 %v61
    %1283 = vmatprep.subr.bf16.mxu0 0
    %1284 = vmatpush1.bf16.msra.mxu0 %v60
    %1285 = vmatprep.subr.bf16.mxu0 0
    %1286 = vmatpush2.bf16.msra.mxu0 0
    %1287 = vmatprep.subr.bf16.mxu0 0
    %1288 = vmatpush2.bf16.msra.mxu0 0
    %1289 = vmatprep.subr.bf16.mxu0 0
    %1290 = vmatpush2.bf16.msra.mxu0 0
    %1291 = vmatprep.subr.bf16.mxu0 0
    %1292 = vmatpush2.bf16.msra.mxu0 0
    %1293 = vmatprep.subr.bf16.mxu0 0
    %1294 = vmatpush2.bf16.msra.mxu0 0
    %1295 = vmatprep.subr.bf16.mxu0 0
    %1296 = vmatpush2.bf16.msra.mxu0 0
    %1297 = vmatprep.subr.bf16.mxu0 0
    %1298 = vmatpush2.bf16.msra.mxu0 0
    %1299 = vmatprep.subr.bf16.mxu0 0
    %1300 = vmatpush2.bf16.msra.mxu0 0
    %1301 = vmatprep.mubr.bf16.mxu0 0
    %1302 = vmatmul.mubr.bf16.gmra.mxu0 %v1267
    %v1303 = vpop.f32.mrf.mxu0
    %v1304 = vadd.f32 0.0, %v1303
    %v1305 = vpop.f32.mrf.mxu0
    %v1306 = vpop.f32.mrf.mxu0
    %v1307 = vpop.f32.mrf.mxu0
    %1308 = vdwg.mxu0
    %1310 = vrot.lane.b32.xlu0 %v1261, 32
    %v1311 = vpop.permute.xlu0 %1310
    %v1313 = vsel %vm191, %v1311, 0
    %1315 = vmatprep.subr.bf16.mxu0 0
    %1316 = vmatpush1.bf16.msra.mxu0 0
    %1317 = vmatprep.subr.bf16.mxu0 0
    %1318 = vmatpush1.bf16.msra.mxu0 0
    %1319 = vmatprep.subr.bf16.mxu0 0
    %1320 = vmatpush1.bf16.msra.mxu0 0
    %1321 = vmatprep.subr.bf16.mxu0 0
    %1322 = vmatpush1.bf16.msra.mxu0 0
    %1323 = vmatprep.subr.bf16.mxu0 0
    %1324 = vmatpush1.bf16.msra.mxu0 0
    %1325 = vmatprep.subr.bf16.mxu0 0
    %1326 = vmatpush1.bf16.msra.mxu0 0
    %1327 = vmatprep.subr.bf16.mxu0 0
    %1328 = vmatpush1.bf16.msra.mxu0 %v59
    %1329 = vmatprep.subr.bf16.mxu0 0
    %1330 = vmatpush1.bf16.msra.mxu0 %v58
    %1331 = vmatprep.subr.bf16.mxu0 0
    %1332 = vmatpush2.bf16.msra.mxu0 0
    %1333 = vmatprep.subr.bf16.mxu0 0
    %1334 = vmatpush2.bf16.msra.mxu0 0
    %1335 = vmatprep.subr.bf16.mxu0 0
    %1336 = vmatpush2.bf16.msra.mxu0 0
    %1337 = vmatprep.subr.bf16.mxu0 0
    %1338 = vmatpush2.bf16.msra.mxu0 0
    %1339 = vmatprep.subr.bf16.mxu0 0
    %1340 = vmatpush2.bf16.msra.mxu0 0
    %1341 = vmatprep.subr.bf16.mxu0 0
    %1342 = vmatpush2.bf16.msra.mxu0 0
    %1343 = vmatprep.subr.bf16.mxu0 0
    %1344 = vmatpush2.bf16.msra.mxu0 0
    %1345 = vmatprep.subr.bf16.mxu0 0
    %1346 = vmatpush2.bf16.msra.mxu0 0
    %1347 = vmatprep.mubr.bf16.mxu0 0
    %1348 = vmatmul.mubr.bf16.gmra.mxu0 %v1313
    %v1349 = vpop.f32.mrf.mxu0
    %v1350 = vadd.f32 %v1304, %v1349
    %v1351 = vpop.f32.mrf.mxu0
    %v1352 = vpop.f32.mrf.mxu0
    %v1353 = vpop.f32.mrf.mxu0
    %1354 = vdwg.mxu0
    %v1355 = vadd.f32 %v1350, %v466
    %v1356 = vxor.u32 %v1355, 2147483648
    %v1357 = vmul.f32 %v1356, 1.442695
    %v1358 = vpow.pop %v1357
    %v1359 = vadd.f32 %v1358, 1.0
    %v1360 = vrcp.pop %v1359
    %v1361 = vmul.f32 1.0, %v1360
    %v1362 = vtanh.pop %v1355
    %v1363 = vmul.f32 %v1361, %v1077
    %1365 = vrot.lane.b32.xlu0 %v1362, 64
    %v1366 = vpop.permute.xlu0 %1365
    %v1368 = vmul.f32 %v1361, %v1366
    %1370 = vrot.lane.b32.xlu0 %v1368, 32
    %v1371 = vpop.permute.xlu0 %1370
    %v1373 = vadd.f32 %v1363, %v1371
    %v1374 = vtanh.pop %v1373
    %1376 = vrot.lane.b32.xlu0 %v1374, 64
    %v1377 = vpop.permute.xlu0 %1376
    %v1379 = vmul.f32 %v1361, %v1377
    %1380 = vmatprep.subr.bf16.mxu0 0
    %1381 = vmatpush1.bf16.msra.mxu0 0
    %1382 = vmatprep.subr.bf16.mxu0 0
    %1383 = vmatpush1.bf16.msra.mxu0 0
    %1384 = vmatprep.subr.bf16.mxu0 0
    %1385 = vmatpush1.bf16.msra.mxu0 0
    %1386 = vmatprep.subr.bf16.mxu0 0
    %1387 = vmatpush1.bf16.msra.mxu0 0
    %1388 = vmatprep.subr.bf16.mxu0 0
    %1389 = vmatpush1.bf16.msra.mxu0 0
    %1390 = vmatprep.subr.bf16.mxu0 0
    %1391 = vmatpush1.bf16.msra.mxu0 0
    %1392 = vmatprep.subr.bf16.mxu0 0
    %1393 = vmatpush1.bf16.msra.mxu0 %v53
    %1394 = vmatprep.subr.bf16.mxu0 0
    %1395 = vmatpush1.bf16.msra.mxu0 %v52
    %1396 = vmatprep.subr.bf16.mxu0 0
    %1397 = vmatpush2.bf16.msra.mxu0 0
    %1398 = vmatprep.subr.bf16.mxu0 0
    %1399 = vmatpush2.bf16.msra.mxu0 0
    %1400 = vmatprep.subr.bf16.mxu0 0
    %1401 = vmatpush2.bf16.msra.mxu0 0
    %1402 = vmatprep.subr.bf16.mxu0 0
    %1403 = vmatpush2.bf16.msra.mxu0 0
    %1404 = vmatprep.subr.bf16.mxu0 0
    %1405 = vmatpush2.bf16.msra.mxu0 0
    %1406 = vmatprep.subr.bf16.mxu0 0
    %1407 = vmatpush2.bf16.msra.mxu0 0
    %1408 = vmatprep.subr.bf16.mxu0 0
    %1409 = vmatpush2.bf16.msra.mxu0 0
    %1410 = vmatprep.subr.bf16.mxu0 0
    %1411 = vmatpush2.bf16.msra.mxu0 0
    %1412 = vmatprep.mubr.bf16.mxu0 0
    %1413 = vmatmul.mubr.bf16.gmra.mxu0 %v1194
    %v1414 = vpop.f32.mrf.mxu0
    %v1415 = vadd.f32 0.0, %v1414
    %v1416 = vpop.f32.mrf.mxu0
    %v1417 = vpop.f32.mrf.mxu0
    %v1418 = vpop.f32.mrf.mxu0
    %1419 = vdwg.mxu0
    %v1420 = vadd.f32 %v187, %v1415
    %v1421 = vxor.u32 %v1420, 2147483648
    %v1422 = vmul.f32 %v1421, 1.442695
    %v1423 = vpow.pop %v1422
    %v1424 = vadd.f32 %v1423, 1.0
    %v1425 = vrcp.pop %v1424
    %v1426 = vmul.f32 1.0, %v1425
    %v1427 = vtanh.pop %v1420
    %v1428 = vmul.f32 %v1426, %v1142
    %1430 = vrot.lane.b32.xlu0 %v1427, 64
    %v1431 = vpop.permute.xlu0 %1430
    %v1433 = vmul.f32 %v1426, %v1431
    %1435 = vrot.lane.b32.xlu0 %v1433, 32
    %v1436 = vpop.permute.xlu0 %1435
    %v1438 = vadd.f32 %v1428, %v1436
    %v1439 = vtanh.pop %v1438
    %1441 = vrot.lane.b32.xlu0 %v1439, 64
    %v1442 = vpop.permute.xlu0 %1441
    %v1444 = vmul.f32 %v1426, %v1442
    %v1445 = vpack.c.bf16 %v1444, %v1444
    %1446 = vmatprep.subr.bf16.mxu0 0
    %1447 = vmatpush1.bf16.msra.mxu0 0
    %1448 = vmatprep.subr.bf16.mxu0 0
    %1449 = vmatpush1.bf16.msra.mxu0 0
    %1450 = vmatprep.subr.bf16.mxu0 0
    %1451 = vmatpush1.bf16.msra.mxu0 0
    %1452 = vmatprep.subr.bf16.mxu0 0
    %1453 = vmatpush1.bf16.msra.mxu0 0
    %1454 = vmatprep.subr.bf16.mxu0 0
    %1455 = vmatpush1.bf16.msra.mxu0 0
    %1456 = vmatprep.subr.bf16.mxu0 0
    %1457 = vmatpush1.bf16.msra.mxu0 0
    %1458 = vmatprep.subr.bf16.mxu0 0
    %1459 = vmatpush1.bf16.msra.mxu0 %v57
    %1460 = vmatprep.subr.bf16.mxu0 0
    %1461 = vmatpush1.bf16.msra.mxu0 %v56
    %1462 = vmatprep.subr.bf16.mxu0 0
    %1463 = vmatpush2.bf16.msra.mxu0 0
    %1464 = vmatprep.subr.bf16.mxu0 0
    %1465 = vmatpush2.bf16.msra.mxu0 0
    %1466 = vmatprep.subr.bf16.mxu0 0
    %1467 = vmatpush2.bf16.msra.mxu0 0
    %1468 = vmatprep.subr.bf16.mxu0 0
    %1469 = vmatpush2.bf16.msra.mxu0 0
    %1470 = vmatprep.subr.bf16.mxu0 0
    %1471 = vmatpush2.bf16.msra.mxu0 0
    %1472 = vmatprep.subr.bf16.mxu0 0
    %1473 = vmatpush2.bf16.msra.mxu0 0
    %1474 = vmatprep.subr.bf16.mxu0 0
    %1475 = vmatpush2.bf16.msra.mxu0 0
    %1476 = vmatprep.subr.bf16.mxu0 0
    %1477 = vmatpush2.bf16.msra.mxu0 0
    %1478 = vmatprep.mubr.bf16.mxu0 0
    %1479 = vmatmul.mubr.bf16.gmra.mxu0 %v1313
    %v1480 = vpop.f32.mrf.mxu0
    %v1481 = vadd.f32 0.0, %v1480
    %v1482 = vpop.f32.mrf.mxu0
    %v1483 = vpop.f32.mrf.mxu0
    %v1484 = vpop.f32.mrf.mxu0
    %1485 = vdwg.mxu0
    %1487 = vrot.lane.b32.xlu0 %v1445, 32
    %v1488 = vpop.permute.xlu0 %1487
    %v1490 = vsel %vm191, %v1488, 0
    %1492 = vmatprep.subr.bf16.mxu0 0
    %1493 = vmatpush1.bf16.msra.mxu0 0
    %1494 = vmatprep.subr.bf16.mxu0 0
    %1495 = vmatpush1.bf16.msra.mxu0 0
    %1496 = vmatprep.subr.bf16.mxu0 0
    %1497 = vmatpush1.bf16.msra.mxu0 0
    %1498 = vmatprep.subr.bf16.mxu0 0
    %1499 = vmatpush1.bf16.msra.mxu0 0
    %1500 = vmatprep.subr.bf16.mxu0 0
    %1501 = vmatpush1.bf16.msra.mxu0 0
    %1502 = vmatprep.subr.bf16.mxu0 0
    %1503 = vmatpush1.bf16.msra.mxu0 0
    %1504 = vmatprep.subr.bf16.mxu0 0
    %1505 = vmatpush1.bf16.msra.mxu0 %v55
    %1506 = vmatprep.subr.bf16.mxu0 0
    %1507 = vmatpush1.bf16.msra.mxu0 %v54
    %1508 = vmatprep.subr.bf16.mxu0 0
    %1509 = vmatpush2.bf16.msra.mxu0 0
    %1510 = vmatprep.subr.bf16.mxu0 0
    %1511 = vmatpush2.bf16.msra.mxu0 0
    %1512 = vmatprep.subr.bf16.mxu0 0
    %1513 = vmatpush2.bf16.msra.mxu0 0
    %1514 = vmatprep.subr.bf16.mxu0 0
    %1515 = vmatpush2.bf16.msra.mxu0 0
    %1516 = vmatprep.subr.bf16.mxu0 0
    %1517 = vmatpush2.bf16.msra.mxu0 0
    %1518 = vmatprep.subr.bf16.mxu0 0
    %1519 = vmatpush2.bf16.msra.mxu0 0
    %1520 = vmatprep.subr.bf16.mxu0 0
    %1521 = vmatpush2.bf16.msra.mxu0 0
    %1522 = vmatprep.subr.bf16.mxu0 0
    %1523 = vmatpush2.bf16.msra.mxu0 0
    %1524 = vmatprep.mubr.bf16.mxu0 0
    %1525 = vmatmul.mubr.bf16.gmra.mxu0 %v1490
    %v1526 = vpop.f32.mrf.mxu0
    %v1527 = vadd.f32 %v1481, %v1526
    %v1528 = vpop.f32.mrf.mxu0
    %v1529 = vpop.f32.mrf.mxu0
    %v1530 = vpop.f32.mrf.mxu0
    %1531 = vdwg.mxu0
    %v1532 = vadd.f32 %v1527, %v350
    %v1533 = vxor.u32 %v1532, 2147483648
    %v1534 = vmul.f32 %v1533, 1.442695
    %v1535 = vpow.pop %v1534
    %v1536 = vadd.f32 %v1535, 1.0
    %v1537 = vrcp.pop %v1536
    %v1538 = vmul.f32 1.0, %v1537
    %v1539 = vtanh.pop %v1532
    %v1540 = vmul.f32 %v1538, %v1254
    %1542 = vrot.lane.b32.xlu0 %v1539, 64
    %v1543 = vpop.permute.xlu0 %1542
    %v1545 = vmul.f32 %v1538, %v1543
    %1547 = vrot.lane.b32.xlu0 %v1545, 32
    %v1548 = vpop.permute.xlu0 %1547
    %v1550 = vadd.f32 %v1540, %v1548
    %v1551 = vtanh.pop %v1550
    %1553 = vrot.lane.b32.xlu0 %v1551, 64
    %v1554 = vpop.permute.xlu0 %1553
    %v1556 = vmul.f32 %v1538, %v1554
    %v1557 = vpack.c.bf16 %v1556, %v1556
    %v1558 = vpack.c.bf16 %v1379, %v1379
    %1560 = vrot.lane.b32.xlu0 %v1558, 32
    %v1561 = vpop.permute.xlu0 %1560
    %v1563 = vsel %vm191, %v1561, 0
    %1565 = vmatprep.subr.bf16.mxu0 0
    %1566 = vmatpush1.bf16.msra.mxu0 0
    %1567 = vmatprep.subr.bf16.mxu0 0
    %1568 = vmatpush1.bf16.msra.mxu0 0
    %1569 = vmatprep.subr.bf16.mxu0 0
    %1570 = vmatpush1.bf16.msra.mxu0 0
    %1571 = vmatprep.subr.bf16.mxu0 0
    %1572 = vmatpush1.bf16.msra.mxu0 0
    %1573 = vmatprep.subr.bf16.mxu0 0
    %1574 = vmatpush1.bf16.msra.mxu0 0
    %1575 = vmatprep.subr.bf16.mxu0 0
    %1576 = vmatpush1.bf16.msra.mxu0 0
    %1577 = vmatprep.subr.bf16.mxu0 0
    %1578 = vmatpush1.bf16.msra.mxu0 %v61
    %1579 = vmatprep.subr.bf16.mxu0 0
    %1580 = vmatpush1.bf16.msra.mxu0 %v60
    %1581 = vmatprep.subr.bf16.mxu0 0
    %1582 = vmatpush2.bf16.msra.mxu0 0
    %1583 = vmatprep.subr.bf16.mxu0 0
    %1584 = vmatpush2.bf16.msra.mxu0 0
    %1585 = vmatprep.subr.bf16.mxu0 0
    %1586 = vmatpush2.bf16.msra.mxu0 0
    %1587 = vmatprep.subr.bf16.mxu0 0
    %1588 = vmatpush2.bf16.msra.mxu0 0
    %1589 = vmatprep.subr.bf16.mxu0 0
    %1590 = vmatpush2.bf16.msra.mxu0 0
    %1591 = vmatprep.subr.bf16.mxu0 0
    %1592 = vmatpush2.bf16.msra.mxu0 0
    %1593 = vmatprep.subr.bf16.mxu0 0
    %1594 = vmatpush2.bf16.msra.mxu0 0
    %1595 = vmatprep.subr.bf16.mxu0 0
    %1596 = vmatpush2.bf16.msra.mxu0 0
    %1597 = vmatprep.mubr.bf16.mxu0 0
    %1598 = vmatmul.mubr.bf16.gmra.mxu0 %v1563
    %v1599 = vpop.f32.mrf.mxu0
    %v1600 = vadd.f32 0.0, %v1599
    %v1601 = vpop.f32.mrf.mxu0
    %v1602 = vpop.f32.mrf.mxu0
    %v1603 = vpop.f32.mrf.mxu0
    %1604 = vdwg.mxu0
    %1606 = vrot.lane.b32.xlu0 %v1557, 32
    %v1607 = vpop.permute.xlu0 %1606
    %v1609 = vsel %vm191, %v1607, 0
    %1611 = vmatprep.subr.bf16.mxu0 0
    %1612 = vmatpush1.bf16.msra.mxu0 0
    %1613 = vmatprep.subr.bf16.mxu0 0
    %1614 = vmatpush1.bf16.msra.mxu0 0
    %1615 = vmatprep.subr.bf16.mxu0 0
    %1616 = vmatpush1.bf16.msra.mxu0 0
    %1617 = vmatprep.subr.bf16.mxu0 0
    %1618 = vmatpush1.bf16.msra.mxu0 0
    %1619 = vmatprep.subr.bf16.mxu0 0
    %1620 = vmatpush1.bf16.msra.mxu0 0
    %1621 = vmatprep.subr.bf16.mxu0 0
    %1622 = vmatpush1.bf16.msra.mxu0 0
    %1623 = vmatprep.subr.bf16.mxu0 0
    %1624 = vmatpush1.bf16.msra.mxu0 %v59
    %1625 = vmatprep.subr.bf16.mxu0 0
    %1626 = vmatpush1.bf16.msra.mxu0 %v58
    %1627 = vmatprep.subr.bf16.mxu0 0
    %1628 = vmatpush2.bf16.msra.mxu0 0
    %1629 = vmatprep.subr.bf16.mxu0 0
    %1630 = vmatpush2.bf16.msra.mxu0 0
    %1631 = vmatprep.subr.bf16.mxu0 0
    %1632 = vmatpush2.bf16.msra.mxu0 0
    %1633 = vmatprep.subr.bf16.mxu0 0
    %1634 = vmatpush2.bf16.msra.mxu0 0
    %1635 = vmatprep.subr.bf16.mxu0 0
    %1636 = vmatpush2.bf16.msra.mxu0 0
    %1637 = vmatprep.subr.bf16.mxu0 0
    %1638 = vmatpush2.bf16.msra.mxu0 0
    %1639 = vmatprep.subr.bf16.mxu0 0
    %1640 = vmatpush2.bf16.msra.mxu0 0
    %1641 = vmatprep.subr.bf16.mxu0 0
    %1642 = vmatpush2.bf16.msra.mxu0 0
    %1643 = vmatprep.mubr.bf16.mxu0 0
    %1644 = vmatmul.mubr.bf16.gmra.mxu0 %v1609
    %v1645 = vpop.f32.mrf.mxu0
    %v1646 = vadd.f32 %v1600, %v1645
    %v1647 = vpop.f32.mrf.mxu0
    %v1648 = vpop.f32.mrf.mxu0
    %v1649 = vpop.f32.mrf.mxu0
    %1650 = vdwg.mxu0
    %v1651 = vadd.f32 %v1646, %v466
    %v1652 = vxor.u32 %v1651, 2147483648
    %v1653 = vmul.f32 %v1652, 1.442695
    %v1654 = vpow.pop %v1653
    %v1655 = vadd.f32 %v1654, 1.0
    %v1656 = vrcp.pop %v1655
    %v1657 = vmul.f32 1.0, %v1656
    %v1658 = vtanh.pop %v1651
    %v1659 = vmul.f32 %v1657, %v1373
    %1661 = vrot.lane.b32.xlu0 %v1658, 64
    %v1662 = vpop.permute.xlu0 %1661
    %v1664 = vmul.f32 %v1657, %v1662
    %1666 = vrot.lane.b32.xlu0 %v1664, 32
    %v1667 = vpop.permute.xlu0 %1666
    %v1669 = vadd.f32 %v1659, %v1667
    %v1670 = vtanh.pop %v1669
    %1672 = vrot.lane.b32.xlu0 %v1670, 64
    %v1673 = vpop.permute.xlu0 %1672
    %v1675 = vmul.f32 %v1657, %v1673
    %1676 = vmatprep.subr.bf16.mxu0 0
    %1677 = vmatpush1.bf16.msra.mxu0 0
    %1678 = vmatprep.subr.bf16.mxu0 0
    %1679 = vmatpush1.bf16.msra.mxu0 0
    %1680 = vmatprep.subr.bf16.mxu0 0
    %1681 = vmatpush1.bf16.msra.mxu0 0
    %1682 = vmatprep.subr.bf16.mxu0 0
    %1683 = vmatpush1.bf16.msra.mxu0 0
    %1684 = vmatprep.subr.bf16.mxu0 0
    %1685 = vmatpush1.bf16.msra.mxu0 0
    %1686 = vmatprep.subr.bf16.mxu0 0
    %1687 = vmatpush1.bf16.msra.mxu0 0
    %1688 = vmatprep.subr.bf16.mxu0 0
    %1689 = vmatpush1.bf16.msra.mxu0 %v53
    %1690 = vmatprep.subr.bf16.mxu0 0
    %1691 = vmatpush1.bf16.msra.mxu0 %v52
    %1692 = vmatprep.subr.bf16.mxu0 0
    %1693 = vmatpush2.bf16.msra.mxu0 0
    %1694 = vmatprep.subr.bf16.mxu0 0
    %1695 = vmatpush2.bf16.msra.mxu0 0
    %1696 = vmatprep.subr.bf16.mxu0 0
    %1697 = vmatpush2.bf16.msra.mxu0 0
    %1698 = vmatprep.subr.bf16.mxu0 0
    %1699 = vmatpush2.bf16.msra.mxu0 0
    %1700 = vmatprep.subr.bf16.mxu0 0
    %1701 = vmatpush2.bf16.msra.mxu0 0
    %1702 = vmatprep.subr.bf16.mxu0 0
    %1703 = vmatpush2.bf16.msra.mxu0 0
    %1704 = vmatprep.subr.bf16.mxu0 0
    %1705 = vmatpush2.bf16.msra.mxu0 0
    %1706 = vmatprep.subr.bf16.mxu0 0
    %1707 = vmatpush2.bf16.msra.mxu0 0
    %1708 = vmatprep.mubr.bf16.mxu0 0
    %1709 = vmatmul.mubr.bf16.gmra.mxu0 %v1490
    %v1710 = vpop.f32.mrf.mxu0
    %v1711 = vadd.f32 0.0, %v1710
    %v1712 = vpop.f32.mrf.mxu0
    %v1713 = vpop.f32.mrf.mxu0
    %v1714 = vpop.f32.mrf.mxu0
    %1715 = vdwg.mxu0
    %v1716 = vadd.f32 %v188, %v1711
    %v1717 = vxor.u32 %v1716, 2147483648
    %v1718 = vmul.f32 %v1717, 1.442695
    %v1719 = vpow.pop %v1718
    %v1720 = vadd.f32 %v1719, 1.0
    %v1721 = vrcp.pop %v1720
    %v1722 = vmul.f32 1.0, %v1721
    %v1723 = vtanh.pop %v1716
    %v1724 = vmul.f32 %v1722, %v1438
    %1726 = vrot.lane.b32.xlu0 %v1723, 64
    %v1727 = vpop.permute.xlu0 %1726
    %v1729 = vmul.f32 %v1722, %v1727
    %1731 = vrot.lane.b32.xlu0 %v1729, 32
    %v1732 = vpop.permute.xlu0 %1731
    %v1734 = vadd.f32 %v1724, %v1732
    %v1735 = vtanh.pop %v1734
    %1737 = vrot.lane.b32.xlu0 %v1735, 64
    %v1738 = vpop.permute.xlu0 %1737
    %v1740 = vmul.f32 %v1722, %v1738
    %v1741 = vpack.c.bf16 %v1740, %v1740
    %1742 = vmatprep.subr.bf16.mxu0 0
    %1743 = vmatpush1.bf16.msra.mxu0 0
    %1744 = vmatprep.subr.bf16.mxu0 0
    %1745 = vmatpush1.bf16.msra.mxu0 0
    %1746 = vmatprep.subr.bf16.mxu0 0
    %1747 = vmatpush1.bf16.msra.mxu0 0
    %1748 = vmatprep.subr.bf16.mxu0 0
    %1749 = vmatpush1.bf16.msra.mxu0 0
    %1750 = vmatprep.subr.bf16.mxu0 0
    %1751 = vmatpush1.bf16.msra.mxu0 0
    %1752 = vmatprep.subr.bf16.mxu0 0
    %1753 = vmatpush1.bf16.msra.mxu0 0
    %1754 = vmatprep.subr.bf16.mxu0 0
    %1755 = vmatpush1.bf16.msra.mxu0 %v57
    %1756 = vmatprep.subr.bf16.mxu0 0
    %1757 = vmatpush1.bf16.msra.mxu0 %v56
    %1758 = vmatprep.subr.bf16.mxu0 0
    %1759 = vmatpush2.bf16.msra.mxu0 0
    %1760 = vmatprep.subr.bf16.mxu0 0
    %1761 = vmatpush2.bf16.msra.mxu0 0
    %1762 = vmatprep.subr.bf16.mxu0 0
    %1763 = vmatpush2.bf16.msra.mxu0 0
    %1764 = vmatprep.subr.bf16.mxu0 0
    %1765 = vmatpush2.bf16.msra.mxu0 0
    %1766 = vmatprep.subr.bf16.mxu0 0
    %1767 = vmatpush2.bf16.msra.mxu0 0
    %1768 = vmatprep.subr.bf16.mxu0 0
    %1769 = vmatpush2.bf16.msra.mxu0 0
    %1770 = vmatprep.subr.bf16.mxu0 0
    %1771 = vmatpush2.bf16.msra.mxu0 0
    %1772 = vmatprep.subr.bf16.mxu0 0
    %1773 = vmatpush2.bf16.msra.mxu0 0
    %1774 = vmatprep.mubr.bf16.mxu0 0
    %1775 = vmatmul.mubr.bf16.gmra.mxu0 %v1609
    %v1776 = vpop.f32.mrf.mxu0
    %v1777 = vadd.f32 0.0, %v1776
    %v1778 = vpop.f32.mrf.mxu0
    %v1779 = vpop.f32.mrf.mxu0
    %v1780 = vpop.f32.mrf.mxu0
    %1781 = vdwg.mxu0
    %1783 = vrot.lane.b32.xlu0 %v1741, 32
    %v1784 = vpop.permute.xlu0 %1783
    %v1786 = vsel %vm191, %v1784, 0
    %1788 = vmatprep.subr.bf16.mxu0 0
    %1789 = vmatpush1.bf16.msra.mxu0 0
    %1790 = vmatprep.subr.bf16.mxu0 0
    %1791 = vmatpush1.bf16.msra.mxu0 0
    %1792 = vmatprep.subr.bf16.mxu0 0
    %1793 = vmatpush1.bf16.msra.mxu0 0
    %1794 = vmatprep.subr.bf16.mxu0 0
    %1795 = vmatpush1.bf16.msra.mxu0 0
    %1796 = vmatprep.subr.bf16.mxu0 0
    %1797 = vmatpush1.bf16.msra.mxu0 0
    %1798 = vmatprep.subr.bf16.mxu0 0
    %1799 = vmatpush1.bf16.msra.mxu0 0
    %1800 = vmatprep.subr.bf16.mxu0 0
    %1801 = vmatpush1.bf16.msra.mxu0 %v55
    %1802 = vmatprep.subr.bf16.mxu0 0
    %1803 = vmatpush1.bf16.msra.mxu0 %v54
    %1804 = vmatprep.subr.bf16.mxu0 0
    %1805 = vmatpush2.bf16.msra.mxu0 0
    %1806 = vmatprep.subr.bf16.mxu0 0
    %1807 = vmatpush2.bf16.msra.mxu0 0
    %1808 = vmatprep.subr.bf16.mxu0 0
    %1809 = vmatpush2.bf16.msra.mxu0 0
    %1810 = vmatprep.subr.bf16.mxu0 0
    %1811 = vmatpush2.bf16.msra.mxu0 0
    %1812 = vmatprep.subr.bf16.mxu0 0
    %1813 = vmatpush2.bf16.msra.mxu0 0
    %1814 = vmatprep.subr.bf16.mxu0 0
    %1815 = vmatpush2.bf16.msra.mxu0 0
    %1816 = vmatprep.subr.bf16.mxu0 0
    %1817 = vmatpush2.bf16.msra.mxu0 0
    %1818 = vmatprep.subr.bf16.mxu0 0
    %1819 = vmatpush2.bf16.msra.mxu0 0
    %1820 = vmatprep.mubr.bf16.mxu0 0
    %1821 = vmatmul.mubr.bf16.gmra.mxu0 %v1786
    %v1822 = vpop.f32.mrf.mxu0
    %v1823 = vadd.f32 %v1777, %v1822
    %v1824 = vpop.f32.mrf.mxu0
    %v1825 = vpop.f32.mrf.mxu0
    %v1826 = vpop.f32.mrf.mxu0
    %1827 = vdwg.mxu0
    %v1828 = vadd.f32 %v1823, %v350
    %v1829 = vxor.u32 %v1828, 2147483648
    %v1830 = vmul.f32 %v1829, 1.442695
    %v1831 = vpow.pop %v1830
    %v1832 = vadd.f32 %v1831, 1.0
    %v1833 = vrcp.pop %v1832
    %v1834 = vmul.f32 1.0, %v1833
    %v1835 = vtanh.pop %v1828
    %v1836 = vmul.f32 %v1834, %v1550
    %1838 = vrot.lane.b32.xlu0 %v1835, 64
    %v1839 = vpop.permute.xlu0 %1838
    %v1841 = vmul.f32 %v1834, %v1839
    %1843 = vrot.lane.b32.xlu0 %v1841, 32
    %v1844 = vpop.permute.xlu0 %1843
    %v1846 = vadd.f32 %v1836, %v1844
    %v1847 = vtanh.pop %v1846
    %1849 = vrot.lane.b32.xlu0 %v1847, 64
    %v1850 = vpop.permute.xlu0 %1849
    %v1852 = vmul.f32 %v1834, %v1850
    %v1853 = vpack.c.bf16 %v1852, %v1852
    %v1854 = vpack.c.bf16 %v1675, %v1675
    %1856 = vrot.lane.b32.xlu0 %v1854, 32
    %v1857 = vpop.permute.xlu0 %1856
    %v1859 = vsel %vm191, %v1857, 0
    %1861 = vmatprep.subr.bf16.mxu0 0
    %1862 = vmatpush1.bf16.msra.mxu0 0
    %1863 = vmatprep.subr.bf16.mxu0 0
    %1864 = vmatpush1.bf16.msra.mxu0 0
    %1865 = vmatprep.subr.bf16.mxu0 0
    %1866 = vmatpush1.bf16.msra.mxu0 0
    %1867 = vmatprep.subr.bf16.mxu0 0
    %1868 = vmatpush1.bf16.msra.mxu0 0
    %1869 = vmatprep.subr.bf16.mxu0 0
    %1870 = vmatpush1.bf16.msra.mxu0 0
    %1871 = vmatprep.subr.bf16.mxu0 0
    %1872 = vmatpush1.bf16.msra.mxu0 0
    %1873 = vmatprep.subr.bf16.mxu0 0
    %1874 = vmatpush1.bf16.msra.mxu0 %v61
    %1875 = vmatprep.subr.bf16.mxu0 0
    %1876 = vmatpush1.bf16.msra.mxu0 %v60
    %1877 = vmatprep.subr.bf16.mxu0 0
    %1878 = vmatpush2.bf16.msra.mxu0 0
    %1879 = vmatprep.subr.bf16.mxu0 0
    %1880 = vmatpush2.bf16.msra.mxu0 0
    %1881 = vmatprep.subr.bf16.mxu0 0
    %1882 = vmatpush2.bf16.msra.mxu0 0
    %1883 = vmatprep.subr.bf16.mxu0 0
    %1884 = vmatpush2.bf16.msra.mxu0 0
    %1885 = vmatprep.subr.bf16.mxu0 0
    %1886 = vmatpush2.bf16.msra.mxu0 0
    %1887 = vmatprep.subr.bf16.mxu0 0
    %1888 = vmatpush2.bf16.msra.mxu0 0
    %1889 = vmatprep.subr.bf16.mxu0 0
    %1890 = vmatpush2.bf16.msra.mxu0 0
    %1891 = vmatprep.subr.bf16.mxu0 0
    %1892 = vmatpush2.bf16.msra.mxu0 0
    %1893 = vmatprep.mubr.bf16.mxu0 0
    %1894 = vmatmul.mubr.bf16.gmra.mxu0 %v1859
    %v1895 = vpop.f32.mrf.mxu0
    %v1896 = vadd.f32 0.0, %v1895
    %v1897 = vpop.f32.mrf.mxu0
    %v1898 = vpop.f32.mrf.mxu0
    %v1899 = vpop.f32.mrf.mxu0
    %1900 = vdwg.mxu0
    %1902 = vrot.lane.b32.xlu0 %v1853, 32
    %v1903 = vpop.permute.xlu0 %1902
    %v1905 = vsel %vm191, %v1903, 0
    %1907 = vmatprep.subr.bf16.mxu0 0
    %1908 = vmatpush1.bf16.msra.mxu0 0
    %1909 = vmatprep.subr.bf16.mxu0 0
    %1910 = vmatpush1.bf16.msra.mxu0 0
    %1911 = vmatprep.subr.bf16.mxu0 0
    %1912 = vmatpush1.bf16.msra.mxu0 0
    %1913 = vmatprep.subr.bf16.mxu0 0
    %1914 = vmatpush1.bf16.msra.mxu0 0
    %1915 = vmatprep.subr.bf16.mxu0 0
    %1916 = vmatpush1.bf16.msra.mxu0 0
    %1917 = vmatprep.subr.bf16.mxu0 0
    %1918 = vmatpush1.bf16.msra.mxu0 0
    %1919 = vmatprep.subr.bf16.mxu0 0
    %1920 = vmatpush1.bf16.msra.mxu0 %v59
    %1921 = vmatprep.subr.bf16.mxu0 0
    %1922 = vmatpush1.bf16.msra.mxu0 %v58
    %1923 = vmatprep.subr.bf16.mxu0 0
    %1924 = vmatpush2.bf16.msra.mxu0 0
    %1925 = vmatprep.subr.bf16.mxu0 0
    %1926 = vmatpush2.bf16.msra.mxu0 0
    %1927 = vmatprep.subr.bf16.mxu0 0
    %1928 = vmatpush2.bf16.msra.mxu0 0
    %1929 = vmatprep.subr.bf16.mxu0 0
    %1930 = vmatpush2.bf16.msra.mxu0 0
    %1931 = vmatprep.subr.bf16.mxu0 0
    %1932 = vmatpush2.bf16.msra.mxu0 0
    %1933 = vmatprep.subr.bf16.mxu0 0
    %1934 = vmatpush2.bf16.msra.mxu0 0
    %1935 = vmatprep.subr.bf16.mxu0 0
    %1936 = vmatpush2.bf16.msra.mxu0 0
    %1937 = vmatprep.subr.bf16.mxu0 0
    %1938 = vmatpush2.bf16.msra.mxu0 0
    %1939 = vmatprep.mubr.bf16.mxu0 0
    %1940 = vmatmul.mubr.bf16.gmra.mxu0 %v1905
    %v1941 = vpop.f32.mrf.mxu0
    %v1942 = vadd.f32 %v1896, %v1941
    %v1943 = vpop.f32.mrf.mxu0
    %v1944 = vpop.f32.mrf.mxu0
    %v1945 = vpop.f32.mrf.mxu0
    %1946 = vdwg.mxu0
    %v1947 = vadd.f32 %v1942, %v466
    %v1948 = vxor.u32 %v1947, 2147483648
    %v1949 = vmul.f32 %v1948, 1.442695
    %v1950 = vpow.pop %v1949
    %v1951 = vadd.f32 %v1950, 1.0
    %v1952 = vrcp.pop %v1951
    %v1953 = vmul.f32 1.0, %v1952
    %v1954 = vtanh.pop %v1947
    %v1955 = vmul.f32 %v1953, %v1669
    %1957 = vrot.lane.b32.xlu0 %v1954, 64
    %v1958 = vpop.permute.xlu0 %1957
    %v1960 = vmul.f32 %v1953, %v1958
    %1962 = vrot.lane.b32.xlu0 %v1960, 32
    %v1963 = vpop.permute.xlu0 %1962
    %v1965 = vadd.f32 %v1955, %v1963
    %v1966 = vtanh.pop %v1965
    %1968 = vrot.lane.b32.xlu0 %v1966, 64
    %v1969 = vpop.permute.xlu0 %1968
    %v1971 = vmul.f32 %v1953, %v1969
    %1972 = vmatprep.subr.bf16.mxu0 0
    %1973 = vmatpush1.bf16.msra.mxu0 0
    %1974 = vmatprep.subr.bf16.mxu0 0
    %1975 = vmatpush1.bf16.msra.mxu0 0
    %1976 = vmatprep.subr.bf16.mxu0 0
    %1977 = vmatpush1.bf16.msra.mxu0 0
    %1978 = vmatprep.subr.bf16.mxu0 0
    %1979 = vmatpush1.bf16.msra.mxu0 0
    %1980 = vmatprep.subr.bf16.mxu0 0
    %1981 = vmatpush1.bf16.msra.mxu0 0
    %1982 = vmatprep.subr.bf16.mxu0 0
    %1983 = vmatpush1.bf16.msra.mxu0 0
    %1984 = vmatprep.subr.bf16.mxu0 0
    %1985 = vmatpush1.bf16.msra.mxu0 %v53
    %1986 = vmatprep.subr.bf16.mxu0 0
    %1987 = vmatpush1.bf16.msra.mxu0 %v52
    %1988 = vmatprep.subr.bf16.mxu0 0
    %1989 = vmatpush2.bf16.msra.mxu0 0
    %1990 = vmatprep.subr.bf16.mxu0 0
    %1991 = vmatpush2.bf16.msra.mxu0 0
    %1992 = vmatprep.subr.bf16.mxu0 0
    %1993 = vmatpush2.bf16.msra.mxu0 0
    %1994 = vmatprep.subr.bf16.mxu0 0
    %1995 = vmatpush2.bf16.msra.mxu0 0
    %1996 = vmatprep.subr.bf16.mxu0 0
    %1997 = vmatpush2.bf16.msra.mxu0 0
    %1998 = vmatprep.subr.bf16.mxu0 0
    %1999 = vmatpush2.bf16.msra.mxu0 0
    %2000 = vmatprep.subr.bf16.mxu0 0
    %2001 = vmatpush2.bf16.msra.mxu0 0
    %2002 = vmatprep.subr.bf16.mxu0 0
    %2003 = vmatpush2.bf16.msra.mxu0 0
    %2004 = vmatprep.mubr.bf16.mxu0 0
    %2005 = vmatmul.mubr.bf16.gmra.mxu0 %v1786
    %v2006 = vpop.f32.mrf.mxu0
    %v2007 = vadd.f32 0.0, %v2006
    %v2008 = vpop.f32.mrf.mxu0
    %v2009 = vpop.f32.mrf.mxu0
    %v2010 = vpop.f32.mrf.mxu0
    %2011 = vdwg.mxu0
    %v2012 = vadd.f32 %v189, %v2007
    %v2013 = vxor.u32 %v2012, 2147483648
    %v2014 = vmul.f32 %v2013, 1.442695
    %v2015 = vpow.pop %v2014
    %v2016 = vadd.f32 %v2015, 1.0
    %v2017 = vrcp.pop %v2016
    %v2018 = vmul.f32 1.0, %v2017
    %v2019 = vtanh.pop %v2012
    %v2020 = vmul.f32 %v2018, %v1734
    %2022 = vrot.lane.b32.xlu0 %v2019, 64
    %v2023 = vpop.permute.xlu0 %2022
    %v2025 = vmul.f32 %v2018, %v2023
    %2027 = vrot.lane.b32.xlu0 %v2025, 32
    %v2028 = vpop.permute.xlu0 %2027
    %v2030 = vadd.f32 %v2020, %v2028
    %v2031 = vtanh.pop %v2030
    %2033 = vrot.lane.b32.xlu0 %v2031, 64
    %v2034 = vpop.permute.xlu0 %2033
    %v2036 = vmul.f32 %v2018, %v2034
    %v2037 = vpack.c.bf16 %v2036, %v2036
    %2038 = vmatprep.subr.bf16.mxu0 0
    %2039 = vmatpush1.bf16.msra.mxu0 0
    %2040 = vmatprep.subr.bf16.mxu0 0
    %2041 = vmatpush1.bf16.msra.mxu0 0
    %2042 = vmatprep.subr.bf16.mxu0 0
    %2043 = vmatpush1.bf16.msra.mxu0 0
    %2044 = vmatprep.subr.bf16.mxu0 0
    %2045 = vmatpush1.bf16.msra.mxu0 0
    %2046 = vmatprep.subr.bf16.mxu0 0
    %2047 = vmatpush1.bf16.msra.mxu0 0
    %2048 = vmatprep.subr.bf16.mxu0 0
    %2049 = vmatpush1.bf16.msra.mxu0 0
    %2050 = vmatprep.subr.bf16.mxu0 0
    %2051 = vmatpush1.bf16.msra.mxu0 %v57
    %2052 = vmatprep.subr.bf16.mxu0 0
    %2053 = vmatpush1.bf16.msra.mxu0 %v56
    %2054 = vmatprep.subr.bf16.mxu0 0
    %2055 = vmatpush2.bf16.msra.mxu0 0
    %2056 = vmatprep.subr.bf16.mxu0 0
    %2057 = vmatpush2.bf16.msra.mxu0 0
    %2058 = vmatprep.subr.bf16.mxu0 0
    %2059 = vmatpush2.bf16.msra.mxu0 0
    %2060 = vmatprep.subr.bf16.mxu0 0
    %2061 = vmatpush2.bf16.msra.mxu0 0
    %2062 = vmatprep.subr.bf16.mxu0 0
    %2063 = vmatpush2.bf16.msra.mxu0 0
    %2064 = vmatprep.subr.bf16.mxu0 0
    %2065 = vmatpush2.bf16.msra.mxu0 0
    %2066 = vmatprep.subr.bf16.mxu0 0
    %2067 = vmatpush2.bf16.msra.mxu0 0
    %2068 = vmatprep.subr.bf16.mxu0 0
    %2069 = vmatpush2.bf16.msra.mxu0 0
    %2070 = vmatprep.mubr.bf16.mxu0 0
    %2071 = vmatmul.mubr.bf16.gmra.mxu0 %v1905
    %v2072 = vpop.f32.mrf.mxu0
    %v2073 = vadd.f32 0.0, %v2072
    %v2074 = vpop.f32.mrf.mxu0
    %v2075 = vpop.f32.mrf.mxu0
    %v2076 = vpop.f32.mrf.mxu0
    %2077 = vdwg.mxu0
    %2079 = vrot.lane.b32.xlu0 %v2037, 32
    %v2080 = vpop.permute.xlu0 %2079
    %v2082 = vsel %vm191, %v2080, 0
    %2084 = vmatprep.subr.bf16.mxu0 0
    %2085 = vmatpush1.bf16.msra.mxu0 0
    %2086 = vmatprep.subr.bf16.mxu0 0
    %2087 = vmatpush1.bf16.msra.mxu0 0
    %2088 = vmatprep.subr.bf16.mxu0 0
    %2089 = vmatpush1.bf16.msra.mxu0 0
    %2090 = vmatprep.subr.bf16.mxu0 0
    %2091 = vmatpush1.bf16.msra.mxu0 0
    %2092 = vmatprep.subr.bf16.mxu0 0
    %2093 = vmatpush1.bf16.msra.mxu0 0
    %2094 = vmatprep.subr.bf16.mxu0 0
    %2095 = vmatpush1.bf16.msra.mxu0 0
    %2096 = vmatprep.subr.bf16.mxu0 0
    %2097 = vmatpush1.bf16.msra.mxu0 %v55
    %2098 = vmatprep.subr.bf16.mxu0 0
    %2099 = vmatpush1.bf16.msra.mxu0 %v54
    %2100 = vmatprep.subr.bf16.mxu0 0
    %2101 = vmatpush2.bf16.msra.mxu0 0
    %2102 = vmatprep.subr.bf16.mxu0 0
    %2103 = vmatpush2.bf16.msra.mxu0 0
    %2104 = vmatprep.subr.bf16.mxu0 0
    %2105 = vmatpush2.bf16.msra.mxu0 0
    %2106 = vmatprep.subr.bf16.mxu0 0
    %2107 = vmatpush2.bf16.msra.mxu0 0
    %2108 = vmatprep.subr.bf16.mxu0 0
    %2109 = vmatpush2.bf16.msra.mxu0 0
    %2110 = vmatprep.subr.bf16.mxu0 0
    %2111 = vmatpush2.bf16.msra.mxu0 0
    %2112 = vmatprep.subr.bf16.mxu0 0
    %2113 = vmatpush2.bf16.msra.mxu0 0
    %2114 = vmatprep.subr.bf16.mxu0 0
    %2115 = vmatpush2.bf16.msra.mxu0 0
    %2116 = vmatprep.mubr.bf16.mxu0 0
    %2117 = vmatmul.mubr.bf16.gmra.mxu0 %v2082
    %v2118 = vpop.f32.mrf.mxu0
    %v2119 = vadd.f32 %v2073, %v2118
    %v2120 = vpop.f32.mrf.mxu0
    %v2121 = vpop.f32.mrf.mxu0
    %v2122 = vpop.f32.mrf.mxu0
    %2123 = vdwg.mxu0
    %v2124 = vadd.f32 %v2119, %v350
    %v2125 = vxor.u32 %v2124, 2147483648
    %v2126 = vmul.f32 %v2125, 1.442695
    %v2127 = vpow.pop %v2126
    %v2128 = vadd.f32 %v2127, 1.0
    %v2129 = vrcp.pop %v2128
    %v2130 = vmul.f32 1.0, %v2129
    %v2131 = vtanh.pop %v2124
    %v2132 = vmul.f32 %v2130, %v1846
    %2134 = vrot.lane.b32.xlu0 %v2131, 64
    %v2135 = vpop.permute.xlu0 %2134
    %v2137 = vmul.f32 %v2130, %v2135
    %2139 = vrot.lane.b32.xlu0 %v2137, 32
    %v2140 = vpop.permute.xlu0 %2139
    %v2142 = vadd.f32 %v2132, %v2140
    %v2143 = vtanh.pop %v2142
    %2145 = vrot.lane.b32.xlu0 %v2143, 64
    %v2146 = vpop.permute.xlu0 %2145
    %v2148 = vmul.f32 %v2130, %v2146
    %v2149 = vpack.c.bf16 %v2148, %v2148
    %v2150 = vpack.c.bf16 %v1971, %v1971
    %2152 = vrot.lane.b32.xlu0 %v2150, 32
    %v2153 = vpop.permute.xlu0 %2152
    %v2155 = vsel %vm191, %v2153, 0
    %2157 = vmatprep.subr.bf16.mxu0 0
    %2158 = vmatpush1.bf16.msra.mxu0 0
    %2159 = vmatprep.subr.bf16.mxu0 0
    %2160 = vmatpush1.bf16.msra.mxu0 0
    %2161 = vmatprep.subr.bf16.mxu0 0
    %2162 = vmatpush1.bf16.msra.mxu0 0
    %2163 = vmatprep.subr.bf16.mxu0 0
    %2164 = vmatpush1.bf16.msra.mxu0 0
    %2165 = vmatprep.subr.bf16.mxu0 0
    %2166 = vmatpush1.bf16.msra.mxu0 0
    %2167 = vmatprep.subr.bf16.mxu0 0
    %2168 = vmatpush1.bf16.msra.mxu0 0
    %2169 = vmatprep.subr.bf16.mxu0 0
    %2170 = vmatpush1.bf16.msra.mxu0 %v61
    %2171 = vmatprep.subr.bf16.mxu0 0
    %2172 = vmatpush1.bf16.msra.mxu0 %v60
    %2173 = vmatprep.subr.bf16.mxu0 0
    %2174 = vmatpush2.bf16.msra.mxu0 0
    %2175 = vmatprep.subr.bf16.mxu0 0
    %2176 = vmatpush2.bf16.msra.mxu0 0
    %2177 = vmatprep.subr.bf16.mxu0 0
    %2178 = vmatpush2.bf16.msra.mxu0 0
    %2179 = vmatprep.subr.bf16.mxu0 0
    %2180 = vmatpush2.bf16.msra.mxu0 0
    %2181 = vmatprep.subr.bf16.mxu0 0
    %2182 = vmatpush2.bf16.msra.mxu0 0
    %2183 = vmatprep.subr.bf16.mxu0 0
    %2184 = vmatpush2.bf16.msra.mxu0 0
    %2185 = vmatprep.subr.bf16.mxu0 0
    %2186 = vmatpush2.bf16.msra.mxu0 0
    %2187 = vmatprep.subr.bf16.mxu0 0
    %2188 = vmatpush2.bf16.msra.mxu0 0
    %2189 = vmatprep.mubr.bf16.mxu0 0
    %2190 = vmatmul.mubr.bf16.gmra.mxu0 %v2155
    %v2191 = vpop.f32.mrf.mxu0
    %v2192 = vadd.f32 0.0, %v2191
    %v2193 = vpop.f32.mrf.mxu0
    %v2194 = vpop.f32.mrf.mxu0
    %v2195 = vpop.f32.mrf.mxu0
    %2196 = vdwg.mxu0
    %2198 = vrot.lane.b32.xlu0 %v2149, 32
    %v2199 = vpop.permute.xlu0 %2198
    %v2201 = vsel %vm191, %v2199, 0
    %2203 = vmatprep.subr.bf16.mxu0 0
    %2204 = vmatpush1.bf16.msra.mxu0 0
    %2205 = vmatprep.subr.bf16.mxu0 0
    %2206 = vmatpush1.bf16.msra.mxu0 0
    %2207 = vmatprep.subr.bf16.mxu0 0
    %2208 = vmatpush1.bf16.msra.mxu0 0
    %2209 = vmatprep.subr.bf16.mxu0 0
    %2210 = vmatpush1.bf16.msra.mxu0 0
    %2211 = vmatprep.subr.bf16.mxu0 0
    %2212 = vmatpush1.bf16.msra.mxu0 0
    %2213 = vmatprep.subr.bf16.mxu0 0
    %2214 = vmatpush1.bf16.msra.mxu0 0
    %2215 = vmatprep.subr.bf16.mxu0 0
    %2216 = vmatpush1.bf16.msra.mxu0 %v59
    %2217 = vmatprep.subr.bf16.mxu0 0
    %2218 = vmatpush1.bf16.msra.mxu0 %v58
    %2219 = vmatprep.subr.bf16.mxu0 0
    %2220 = vmatpush2.bf16.msra.mxu0 0
    %2221 = vmatprep.subr.bf16.mxu0 0
    %2222 = vmatpush2.bf16.msra.mxu0 0
    %2223 = vmatprep.subr.bf16.mxu0 0
    %2224 = vmatpush2.bf16.msra.mxu0 0
    %2225 = vmatprep.subr.bf16.mxu0 0
    %2226 = vmatpush2.bf16.msra.mxu0 0
    %2227 = vmatprep.subr.bf16.mxu0 0
    %2228 = vmatpush2.bf16.msra.mxu0 0
    %2229 = vmatprep.subr.bf16.mxu0 0
    %2230 = vmatpush2.bf16.msra.mxu0 0
    %2231 = vmatprep.subr.bf16.mxu0 0
    %2232 = vmatpush2.bf16.msra.mxu0 0
    %2233 = vmatprep.subr.bf16.mxu0 0
    %2234 = vmatpush2.bf16.msra.mxu0 0
    %2235 = vmatprep.mubr.bf16.mxu0 0
    %2236 = vmatmul.mubr.bf16.gmra.mxu0 %v2201
    %v2237 = vpop.f32.mrf.mxu0
    %v2238 = vadd.f32 %v2192, %v2237
    %v2239 = vpop.f32.mrf.mxu0
    %v2240 = vpop.f32.mrf.mxu0
    %v2241 = vpop.f32.mrf.mxu0
    %2242 = vdwg.mxu0
    %v2243 = vadd.f32 %v2238, %v466
    %v2244 = vxor.u32 %v2243, 2147483648
    %v2245 = vmul.f32 %v2244, 1.442695
    %v2246 = vpow.pop %v2245
    %v2247 = vadd.f32 %v2246, 1.0
    %v2248 = vrcp.pop %v2247
    %v2249 = vmul.f32 1.0, %v2248
    %v2250 = vtanh.pop %v2243
    %v2251 = vmul.f32 %v2249, %v1965
    %2253 = vrot.lane.b32.xlu0 %v2250, 64
    %v2254 = vpop.permute.xlu0 %2253
    %v2256 = vmul.f32 %v2249, %v2254
    %2258 = vrot.lane.b32.xlu0 %v2256, 32
    %v2259 = vpop.permute.xlu0 %2258
    %v2261 = vadd.f32 %v2251, %v2259
    %v2262 = vtanh.pop %v2261
    %2264 = vrot.lane.b32.xlu0 %v2262, 64
    %v2265 = vpop.permute.xlu0 %2264
    %v2267 = vmul.f32 %v2249, %v2265
    %2268 = vmatprep.subr.bf16.mxu0 0
    %2269 = vmatpush1.bf16.msra.mxu0 0
    %2270 = vmatprep.subr.bf16.mxu0 0
    %2271 = vmatpush1.bf16.msra.mxu0 0
    %2272 = vmatprep.subr.bf16.mxu0 0
    %2273 = vmatpush1.bf16.msra.mxu0 0
    %2274 = vmatprep.subr.bf16.mxu0 0
    %2275 = vmatpush1.bf16.msra.mxu0 0
    %2276 = vmatprep.subr.bf16.mxu0 0
    %2277 = vmatpush1.bf16.msra.mxu0 0
    %2278 = vmatprep.subr.bf16.mxu0 0
    %2279 = vmatpush1.bf16.msra.mxu0 0
    %2280 = vmatprep.subr.bf16.mxu0 0
    %2281 = vmatpush1.bf16.msra.mxu0 %v53
    %2282 = vmatprep.subr.bf16.mxu0 0
    %2283 = vmatpush1.bf16.msra.mxu0 %v52
    %2284 = vmatprep.subr.bf16.mxu0 0
    %2285 = vmatpush2.bf16.msra.mxu0 0
    %2286 = vmatprep.subr.bf16.mxu0 0
    %2287 = vmatpush2.bf16.msra.mxu0 0
    %2288 = vmatprep.subr.bf16.mxu0 0
    %2289 = vmatpush2.bf16.msra.mxu0 0
    %2290 = vmatprep.subr.bf16.mxu0 0
    %2291 = vmatpush2.bf16.msra.mxu0 0
    %2292 = vmatprep.subr.bf16.mxu0 0
    %2293 = vmatpush2.bf16.msra.mxu0 0
    %2294 = vmatprep.subr.bf16.mxu0 0
    %2295 = vmatpush2.bf16.msra.mxu0 0
    %2296 = vmatprep.subr.bf16.mxu0 0
    %2297 = vmatpush2.bf16.msra.mxu0 0
    %2298 = vmatprep.subr.bf16.mxu0 0
    %2299 = vmatpush2.bf16.msra.mxu0 0
    %2300 = vmatprep.mubr.bf16.mxu0 0
    %2301 = vmatmul.mubr.bf16.gmra.mxu0 %v2082
    %v2302 = vpop.f32.mrf.mxu0
    %v2303 = vadd.f32 0.0, %v2302
    %v2304 = vpop.f32.mrf.mxu0
    %v2305 = vpop.f32.mrf.mxu0
    %v2306 = vpop.f32.mrf.mxu0
    %2307 = vdwg.mxu0
    %v2308 = vadd.f32 %v190, %v2303
    %v2309 = vxor.u32 %v2308, 2147483648
    %v2310 = vmul.f32 %v2309, 1.442695
    %v2311 = vpow.pop %v2310
    %v2312 = vadd.f32 %v2311, 1.0
    %v2313 = vrcp.pop %v2312
    %v2314 = vmul.f32 1.0, %v2313
    %v2315 = vtanh.pop %v2308
    %v2316 = vmul.f32 %v2314, %v2030
    %2318 = vrot.lane.b32.xlu0 %v2315, 64
    %v2319 = vpop.permute.xlu0 %2318
    %v2321 = vmul.f32 %v2314, %v2319
    %2323 = vrot.lane.b32.xlu0 %v2321, 32
    %v2324 = vpop.permute.xlu0 %2323
    %v2326 = vadd.f32 %v2316, %v2324
    %v2327 = vtanh.pop %v2326
    %2329 = vrot.lane.b32.xlu0 %v2327, 64
    %v2330 = vpop.permute.xlu0 %2329
    %v2332 = vmul.f32 %v2314, %v2330
    %v2333 = vpack.c.bf16 %v2332, %v2332
    %2334 = vmatprep.subr.bf16.mxu0 0
    %2335 = vmatpush1.bf16.msra.mxu0 0
    %2336 = vmatprep.subr.bf16.mxu0 0
    %2337 = vmatpush1.bf16.msra.mxu0 0
    %2338 = vmatprep.subr.bf16.mxu0 0
    %2339 = vmatpush1.bf16.msra.mxu0 0
    %2340 = vmatprep.subr.bf16.mxu0 0
    %2341 = vmatpush1.bf16.msra.mxu0 0
    %2342 = vmatprep.subr.bf16.mxu0 0
    %2343 = vmatpush1.bf16.msra.mxu0 0
    %2344 = vmatprep.subr.bf16.mxu0 0
    %2345 = vmatpush1.bf16.msra.mxu0 0
    %2346 = vmatprep.subr.bf16.mxu0 0
    %2347 = vmatpush1.bf16.msra.mxu0 %v57
    %2348 = vmatprep.subr.bf16.mxu0 0
    %2349 = vmatpush1.bf16.msra.mxu0 %v56
    %2350 = vmatprep.subr.bf16.mxu0 0
    %2351 = vmatpush2.bf16.msra.mxu0 0
    %2352 = vmatprep.subr.bf16.mxu0 0
    %2353 = vmatpush2.bf16.msra.mxu0 0
    %2354 = vmatprep.subr.bf16.mxu0 0
    %2355 = vmatpush2.bf16.msra.mxu0 0
    %2356 = vmatprep.subr.bf16.mxu0 0
    %2357 = vmatpush2.bf16.msra.mxu0 0
    %2358 = vmatprep.subr.bf16.mxu0 0
    %2359 = vmatpush2.bf16.msra.mxu0 0
    %2360 = vmatprep.subr.bf16.mxu0 0
    %2361 = vmatpush2.bf16.msra.mxu0 0
    %2362 = vmatprep.subr.bf16.mxu0 0
    %2363 = vmatpush2.bf16.msra.mxu0 0
    %2364 = vmatprep.subr.bf16.mxu0 0
    %2365 = vmatpush2.bf16.msra.mxu0 0
    %2366 = vmatprep.mubr.bf16.mxu0 0
    %2367 = vmatmul.mubr.bf16.gmra.mxu0 %v2201
    %v2368 = vpop.f32.mrf.mxu0
    %v2369 = vadd.f32 0.0, %v2368
    %v2370 = vpop.f32.mrf.mxu0
    %v2371 = vpop.f32.mrf.mxu0
    %v2372 = vpop.f32.mrf.mxu0
    %2373 = vdwg.mxu0
    %2375 = vrot.lane.b32.xlu0 %v2333, 32
    %v2376 = vpop.permute.xlu0 %2375
    %v2378 = vsel %vm191, %v2376, 0
    %2380 = vmatprep.subr.bf16.mxu0 0
    %2381 = vmatpush1.bf16.msra.mxu0 0
    %2382 = vmatprep.subr.bf16.mxu0 0
    %2383 = vmatpush1.bf16.msra.mxu0 0
    %2384 = vmatprep.subr.bf16.mxu0 0
    %2385 = vmatpush1.bf16.msra.mxu0 0
    %2386 = vmatprep.subr.bf16.mxu0 0
    %2387 = vmatpush1.bf16.msra.mxu0 0
    %2388 = vmatprep.subr.bf16.mxu0 0
    %2389 = vmatpush1.bf16.msra.mxu0 0
    %2390 = vmatprep.subr.bf16.mxu0 0
    %2391 = vmatpush1.bf16.msra.mxu0 0
    %2392 = vmatprep.subr.bf16.mxu0 0
    %2393 = vmatpush1.bf16.msra.mxu0 %v55
    %2394 = vmatprep.subr.bf16.mxu0 0
    %2395 = vmatpush1.bf16.msra.mxu0 %v54
    %2396 = vmatprep.subr.bf16.mxu0 0
    %2397 = vmatpush2.bf16.msra.mxu0 0
    %2398 = vmatprep.subr.bf16.mxu0 0
    %2399 = vmatpush2.bf16.msra.mxu0 0
    %2400 = vmatprep.subr.bf16.mxu0 0
    %2401 = vmatpush2.bf16.msra.mxu0 0
    %2402 = vmatprep.subr.bf16.mxu0 0
    %2403 = vmatpush2.bf16.msra.mxu0 0
    %2404 = vmatprep.subr.bf16.mxu0 0
    %2405 = vmatpush2.bf16.msra.mxu0 0
    %2406 = vmatprep.subr.bf16.mxu0 0
    %2407 = vmatpush2.bf16.msra.mxu0 0
    %2408 = vmatprep.subr.bf16.mxu0 0
    %2409 = vmatpush2.bf16.msra.mxu0 0
    %2410 = vmatprep.subr.bf16.mxu0 0
    %2411 = vmatpush2.bf16.msra.mxu0 0
    %2412 = vmatprep.mubr.bf16.mxu0 0
    %2413 = vmatmul.mubr.bf16.gmra.mxu0 %v2378
    %v2414 = vpop.f32.mrf.mxu0
    %v2415 = vadd.f32 %v2369, %v2414
    %v2416 = vpop.f32.mrf.mxu0
    %v2417 = vpop.f32.mrf.mxu0
    %v2418 = vpop.f32.mrf.mxu0
    %2419 = vdwg.mxu0
    %v2420 = vadd.f32 %v2415, %v350
    %v2421 = vxor.u32 %v2420, 2147483648
    %v2422 = vmul.f32 %v2421, 1.442695
    %v2423 = vpow.pop %v2422
    %v2424 = vadd.f32 %v2423, 1.0
    %v2425 = vrcp.pop %v2424
    %v2426 = vmul.f32 1.0, %v2425
    %v2427 = vtanh.pop %v2420
    %v2428 = vmul.f32 %v2426, %v2142
    %2430 = vrot.lane.b32.xlu0 %v2427, 64
    %v2431 = vpop.permute.xlu0 %2430
    %v2433 = vmul.f32 %v2426, %v2431
    %2435 = vrot.lane.b32.xlu0 %v2433, 32
    %v2436 = vpop.permute.xlu0 %2435
    %v2438 = vadd.f32 %v2428, %v2436
    %v2439 = vtanh.pop %v2438
    %2441 = vrot.lane.b32.xlu0 %v2439, 64
    %v2442 = vpop.permute.xlu0 %2441
    %v2444 = vmul.f32 %v2426, %v2442
    %v2445 = vpack.c.bf16 %v2444, %v2444
    %v2446 = vpack.c.bf16 %v2267, %v2267
    %2448 = vrot.lane.b32.xlu0 %v2446, 32
    %v2449 = vpop.permute.xlu0 %2448
    %v2451 = vsel %vm191, %v2449, 0
    %2453 = vmatprep.subr.bf16.mxu0 0
    %2454 = vmatpush1.bf16.msra.mxu0 0
    %2455 = vmatprep.subr.bf16.mxu0 0
    %2456 = vmatpush1.bf16.msra.mxu0 0
    %2457 = vmatprep.subr.bf16.mxu0 0
    %2458 = vmatpush1.bf16.msra.mxu0 0
    %2459 = vmatprep.subr.bf16.mxu0 0
    %2460 = vmatpush1.bf16.msra.mxu0 0
    %2461 = vmatprep.subr.bf16.mxu0 0
    %2462 = vmatpush1.bf16.msra.mxu0 0
    %2463 = vmatprep.subr.bf16.mxu0 0
    %2464 = vmatpush1.bf16.msra.mxu0 0
    %2465 = vmatprep.subr.bf16.mxu0 0
    %2466 = vmatpush1.bf16.msra.mxu0 %v61
    %2467 = vmatprep.subr.bf16.mxu0 0
    %2468 = vmatpush1.bf16.msra.mxu0 %v60
    %2469 = vmatprep.subr.bf16.mxu0 0
    %2470 = vmatpush2.bf16.msra.mxu0 0
    %2471 = vmatprep.subr.bf16.mxu0 0
    %2472 = vmatpush2.bf16.msra.mxu0 0
    %2473 = vmatprep.subr.bf16.mxu0 0
    %2474 = vmatpush2.bf16.msra.mxu0 0
    %2475 = vmatprep.subr.bf16.mxu0 0
    %2476 = vmatpush2.bf16.msra.mxu0 0
    %2477 = vmatprep.subr.bf16.mxu0 0
    %2478 = vmatpush2.bf16.msra.mxu0 0
    %2479 = vmatprep.subr.bf16.mxu0 0
    %2480 = vmatpush2.bf16.msra.mxu0 0
    %2481 = vmatprep.subr.bf16.mxu0 0
    %2482 = vmatpush2.bf16.msra.mxu0 0
    %2483 = vmatprep.subr.bf16.mxu0 0
    %2484 = vmatpush2.bf16.msra.mxu0 0
    %2485 = vmatprep.mubr.bf16.mxu0 0
    %2486 = vmatmul.mubr.bf16.gmra.mxu0 %v2451
    %v2487 = vpop.f32.mrf.mxu0
    %v2488 = vadd.f32 0.0, %v2487
    %v2489 = vpop.f32.mrf.mxu0
    %v2490 = vpop.f32.mrf.mxu0
    %v2491 = vpop.f32.mrf.mxu0
    %2492 = vdwg.mxu0
    %2494 = vrot.lane.b32.xlu0 %v2445, 32
    %v2495 = vpop.permute.xlu0 %2494
    %v2497 = vsel %vm191, %v2495, 0
    %2499 = vmatprep.subr.bf16.mxu0 0
    %2500 = vmatpush1.bf16.msra.mxu0 0
    %2501 = vmatprep.subr.bf16.mxu0 0
    %2502 = vmatpush1.bf16.msra.mxu0 0
    %2503 = vmatprep.subr.bf16.mxu0 0
    %2504 = vmatpush1.bf16.msra.mxu0 0
    %2505 = vmatprep.subr.bf16.mxu0 0
    %2506 = vmatpush1.bf16.msra.mxu0 0
    %2507 = vmatprep.subr.bf16.mxu0 0
    %2508 = vmatpush1.bf16.msra.mxu0 0
    %2509 = vmatprep.subr.bf16.mxu0 0
    %2510 = vmatpush1.bf16.msra.mxu0 0
    %2511 = vmatprep.subr.bf16.mxu0 0
    %2512 = vmatpush1.bf16.msra.mxu0 %v59
    %2513 = vmatprep.subr.bf16.mxu0 0
    %2514 = vmatpush1.bf16.msra.mxu0 %v58
    %2515 = vmatprep.subr.bf16.mxu0 0
    %2516 = vmatpush2.bf16.msra.mxu0 0
    %2517 = vmatprep.subr.bf16.mxu0 0
    %2518 = vmatpush2.bf16.msra.mxu0 0
    %2519 = vmatprep.subr.bf16.mxu0 0
    %2520 = vmatpush2.bf16.msra.mxu0 0
    %2521 = vmatprep.subr.bf16.mxu0 0
    %2522 = vmatpush2.bf16.msra.mxu0 0
    %2523 = vmatprep.subr.bf16.mxu0 0
    %2524 = vmatpush2.bf16.msra.mxu0 0
    %2525 = vmatprep.subr.bf16.mxu0 0
    %2526 = vmatpush2.bf16.msra.mxu0 0
    %2527 = vmatprep.subr.bf16.mxu0 0
    %2528 = vmatpush2.bf16.msra.mxu0 0
    %2529 = vmatprep.subr.bf16.mxu0 0
    %2530 = vmatpush2.bf16.msra.mxu0 0
    %2531 = vmatprep.mubr.bf16.mxu0 0
    %2532 = vmatmul.mubr.bf16.gmra.mxu0 %v2497
    %v2533 = vpop.f32.mrf.mxu0
    %v2534 = vadd.f32 %v2488, %v2533
    %v2535 = vpop.f32.mrf.mxu0
    %v2536 = vpop.f32.mrf.mxu0
    %v2537 = vpop.f32.mrf.mxu0
    %2538 = vdwg.mxu0
    %v2539 = vadd.f32 %v2534, %v466
    %v2540 = vxor.u32 %v2539, 2147483648
    %v2541 = vmul.f32 %v2540, 1.442695
    %v2542 = vpow.pop %v2541
    %v2543 = vadd.f32 %v2542, 1.0
    %v2544 = vrcp.pop %v2543
    %v2545 = vmul.f32 1.0, %v2544
    %v2546 = vtanh.pop %v2539
    %v2547 = vmul.f32 %v2545, %v2261
    %2549 = vrot.lane.b32.xlu0 %v2546, 64
    %v2550 = vpop.permute.xlu0 %2549
    %v2552 = vmul.f32 %v2545, %v2550
    %2554 = vrot.lane.b32.xlu0 %v2552, 32
    %v2555 = vpop.permute.xlu0 %2554
    %v2557 = vadd.f32 %v2547, %v2555
    %v2558 = vtanh.pop %v2557
    %2560 = vrot.lane.b32.xlu0 %v2558, 64
    %v2561 = vpop.permute.xlu0 %2560
    %v2563 = vmul.f32 %v2545, %v2561
    %v2564 = vlaneseq
    %v2565 = vshrl.u32 %v2564, 7
    %v2566 = vsub.s32 6, %v2565
    %v2567 = vrot.slane %v29, %v2566
    %2569 = vrot.lane.b32.xlu0 %v2567, 96
    %v2570 = vpop.permute.xlu0 %2569
    %v2572 = vmul.f32 %v491, %v2570
    %v2573 = vmul.f32 %v787, %v2570
    %v2574 = vmul.f32 %v1083, %v2570
    %v2575 = vmul.f32 %v1379, %v2570
    %v2576 = vmul.f32 %v1675, %v2570
    %v2577 = vmul.f32 %v1971, %v2570
    %v2578 = vmul.f32 %v2267, %v2570
    %v2579 = vmul.f32 %v2563, %v2570
    %2588 = vrot.lane.b32.xlu0 %v2572, 32
    %v2589 = vpop.permute.xlu0 %2588
    %2590 = vrot.lane.b32.xlu0 %v2573, 32
    %v2591 = vpop.permute.xlu0 %2590
    %2592 = vrot.lane.b32.xlu0 %v2574, 32
    %v2593 = vpop.permute.xlu0 %2592
    %2594 = vrot.lane.b32.xlu0 %v2575, 32
    %v2595 = vpop.permute.xlu0 %2594
    %2596 = vrot.lane.b32.xlu0 %v2576, 32
    %v2597 = vpop.permute.xlu0 %2596
    %2598 = vrot.lane.b32.xlu0 %v2577, 32
    %v2599 = vpop.permute.xlu0 %2598
    %2600 = vrot.lane.b32.xlu0 %v2578, 32
    %v2601 = vpop.permute.xlu0 %2600
    %2602 = vrot.lane.b32.xlu0 %v2579, 32
    %v2603 = vpop.permute.xlu0 %2602
    %v2612 = vsel %vm191, %v2589, 0.0
    %2613 = vadd.xlane.f32.xlu0 %v2612
    %v2614 = vpop.xlane.xlu0 %2613
    %v2615 = vsel %vm191, %v2591, 0.0
    %2616 = vadd.xlane.f32.xlu0 %v2615
    %v2617 = vpop.xlane.xlu0 %2616
    %v2618 = vsel %vm191, %v2593, 0.0
    %2619 = vadd.xlane.f32.xlu0 %v2618
    %v2620 = vpop.xlane.xlu0 %2619
    %v2621 = vsel %vm191, %v2595, 0.0
    %2622 = vadd.xlane.f32.xlu0 %v2621
    %v2623 = vpop.xlane.xlu0 %2622
    %v2624 = vsel %vm191, %v2597, 0.0
    %2625 = vadd.xlane.f32.xlu0 %v2624
    %v2626 = vpop.xlane.xlu0 %2625
    %v2627 = vsel %vm191, %v2599, 0.0
    %2628 = vadd.xlane.f32.xlu0 %v2627
    %v2629 = vpop.xlane.xlu0 %2628
    %v2630 = vsel %vm191, %v2601, 0.0
    %2631 = vadd.xlane.f32.xlu0 %v2630
    %v2632 = vpop.xlane.xlu0 %2631
    %v2633 = vsel %vm191, %v2603, 0.0
    %2634 = vadd.xlane.f32.xlu0 %v2633
    %v2635 = vpop.xlane.xlu0 %2634
    %v2636 = vlaneseq
    %v2637 = vshrl.u32 %v2636, 7
    %v2638 = vsub.s32 7, %v2637
    %v2639 = vrot.slane %v29, %v2638
    %v2640 = vadd.f32 %v2614, %v2639
    %v2641 = vadd.f32 %v2617, %v2639
    %v2642 = vadd.f32 %v2620, %v2639
    %v2643 = vadd.f32 %v2623, %v2639
    %v2644 = vadd.f32 %v2626, %v2639
    %v2645 = vadd.f32 %v2629, %v2639
    %v2646 = vadd.f32 %v2632, %v2639
    %v2647 = vadd.f32 %v2635, %v2639
    %vm2648 = vcmask 7168
    %v2649 = vsel %vm2648, %v2640, -inf
    %v2650 = vsel %vm2648, %v2641, -inf
    %v2651 = vsel %vm2648, %v2642, -inf
    %v2652 = vsel %vm2648, %v2643, -inf
    %v2653 = vsel %vm2648, %v2644, -inf
    %v2654 = vmax.f32 %v2649, %v2653
    %v2655 = vsel %vm2648, %v2645, -inf
    %v2656 = vmax.f32 %v2650, %v2655
    %v2657 = vsel %vm2648, %v2646, -inf
    %v2658 = vmax.f32 %v2651, %v2657
    %v2659 = vsel %vm2648, %v2647, -inf
    %v2660 = vmax.f32 %v2652, %v2659
    %v2661 = vmax.f32 %v2654, %v2656
    %v2662 = vmax.f32 %v2658, %v2660
    %v2663 = vmax.f32 %v2661, %v2662
    %v2664 = vsub.f32 %v2640, %v2663
    %v2665 = vsub.f32 %v2641, %v2663
    %v2666 = vsub.f32 %v2642, %v2663
    %v2667 = vsub.f32 %v2643, %v2663
    %v2668 = vsub.f32 %v2644, %v2663
    %v2669 = vsub.f32 %v2645, %v2663
    %v2670 = vsub.f32 %v2646, %v2663
    %v2671 = vsub.f32 %v2647, %v2663
    %v2672 = vmul.f32 %v2664, 1.442695
    %v2673 = vpow.pop %v2672
    %v2674 = vmul.f32 %v2665, 1.442695
    %v2675 = vpow.pop %v2674
    %v2676 = vmul.f32 %v2666, 1.442695
    %v2677 = vpow.pop %v2676
    %v2678 = vmul.f32 %v2667, 1.442695
    %v2679 = vpow.pop %v2678
    %v2680 = vmul.f32 %v2668, 1.442695
    %v2681 = vpow.pop %v2680
    %v2682 = vmul.f32 %v2669, 1.442695
    %v2683 = vpow.pop %v2682
    %v2684 = vmul.f32 %v2670, 1.442695
    %v2685 = vpow.pop %v2684
    %v2686 = vmul.f32 %v2671, 1.442695
    %v2687 = vpow.pop %v2686
    %v2688 = vsel %vm2648, %v2673, 0.0
    %v2689 = vsel %vm2648, %v2675, 0.0
    %v2690 = vadd.f32 %v2688, %v2689
    %v2691 = vsel %vm2648, %v2677, 0.0
    %v2692 = vadd.f32 %v2690, %v2691
    %v2693 = vsel %vm2648, %v2679, 0.0
    %v2694 = vadd.f32 %v2692, %v2693
    %v2695 = vsel %vm2648, %v2681, 0.0
    %v2696 = vadd.f32 %v2694, %v2695
    %v2697 = vsel %vm2648, %v2683, 0.0
    %v2698 = vadd.f32 %v2696, %v2697
    %v2699 = vsel %vm2648, %v2685, 0.0
    %v2700 = vadd.f32 %v2698, %v2699
    %v2701 = vsel %vm2648, %v2687, 0.0
    %v2702 = vadd.f32 %v2700, %v2701
    %v2703 = vrcp.pop %v2702
    %v2704 = vmul.f32 %v2673, %v2703
    %v2705 = vmul.f32 %v2675, %v2703
    %v2706 = vmul.f32 %v2677, %v2703
    %v2707 = vmul.f32 %v2679, %v2703
    %v2708 = vmul.f32 %v2681, %v2703
    %v2709 = vmul.f32 %v2683, %v2703
    %v2710 = vmul.f32 %v2685, %v2703
    %v2711 = vmul.f32 %v2687, %v2703
    %2713 = vset.pattern.permute.xlu0 0
    %2714 = vperm.xlu0 %2713, %v2704
    %v2715 = vpop.permute.xlu0 %2714
    %2718 = vset.pattern.permute.xlu0 0
    %2719 = vperm.xlu0 %2718, %v2705
    %v2720 = vpop.permute.xlu0 %2719
    %2723 = vset.pattern.permute.xlu0 0
    %2724 = vperm.xlu0 %2723, %v2706
    %v2725 = vpop.permute.xlu0 %2724
    %2728 = vset.pattern.permute.xlu0 0
    %2729 = vperm.xlu0 %2728, %v2707
    %v2730 = vpop.permute.xlu0 %2729
    %2733 = vset.pattern.permute.xlu0 0
    %2734 = vperm.xlu0 %2733, %v2708
    %v2735 = vpop.permute.xlu0 %2734
    %2738 = vset.pattern.permute.xlu0 0
    %2739 = vperm.xlu0 %2738, %v2709
    %v2740 = vpop.permute.xlu0 %2739
    %2743 = vset.pattern.permute.xlu0 0
    %2744 = vperm.xlu0 %2743, %v2710
    %v2745 = vpop.permute.xlu0 %2744
    %2748 = vset.pattern.permute.xlu0 0
    %2749 = vperm.xlu0 %2748, %v2711
    %v2750 = vpop.permute.xlu0 %2749
    %v2752 = vmul.f32 %v2715, %v491
    %v2753 = vmul.f32 %v2720, %v787
    %v2754 = vmul.f32 %v2725, %v1083
    %v2755 = vmul.f32 %v2730, %v1379
    %v2756 = vmul.f32 %v2735, %v1675
    %v2757 = vmul.f32 %v2740, %v1971
    %v2758 = vmul.f32 %v2745, %v2267
    %v2759 = vmul.f32 %v2750, %v2563
    %vm2760 = vcmask 1048320
    %v2761 = vsel %vm2760, %v2752, 0.0
    %v2762 = vsel %vm2760, %v2753, 0.0
    %v2763 = vadd.f32 %v2761, %v2762
    %v2764 = vsel %vm2760, %v2754, 0.0
    %v2765 = vadd.f32 %v2763, %v2764
    %v2766 = vsel %vm2760, %v2755, 0.0
    %v2767 = vadd.f32 %v2765, %v2766
    %v2768 = vsel %vm2760, %v2756, 0.0
    %v2769 = vadd.f32 %v2767, %v2768
    %v2770 = vsel %vm2760, %v2757, 0.0
    %v2771 = vadd.f32 %v2769, %v2770
    %v2772 = vsel %vm2760, %v2758, 0.0
    %v2773 = vadd.f32 %v2771, %v2772
    %v2774 = vsel %vm2760, %v2759, 0.0
    %v2775 = vadd.f32 %v2773, %v2774
    %2777 = vrot.lane.b32.xlu0 %v2775, 32
    %v2778 = vpop.permute.xlu0 %2777
    %v2780 = vsel %vm191, %v2778, 0.0
    %2781 = vadd.xlane.f32.xlu0 %v2780
    %v2782 = vpop.xlane.xlu0 %2781
    %v2783 = vrcp.pop 32.0
    %v2784 = vmul.f32 %v2782, %v2783
    %v2785 = vsub.f32 %v2775, %v2784
    %v2786 = vmul.f32 %v2785, %v2785
    %2788 = vrot.lane.b32.xlu0 %v2786, 32
    %v2789 = vpop.permute.xlu0 %2788
    %v2791 = vsel %vm191, %v2789, 0.0
    %2792 = vadd.xlane.f32.xlu0 %v2791
    %v2793 = vpop.xlane.xlu0 %2792
    %v2794 = vmul.f32 %v2793, %v2783
    %v2795 = vadd.f32 %v2794, 1e-05
    %v2796 = vrsqrt.pop %v2795
    %v2797 = vmul.f32 %v2785, %v2796
    %v2798 = vlaneseq
    %v2799 = vshrl.u32 %v2798, 7
    %v2800 = vsub.s32 5, %v2799
    %v2801 = vrot.slane %v29, %v2800
    %2803 = vrot.lane.b32.xlu0 %v2801, 96
    %v2804 = vpop.permute.xlu0 %2803
    %v2806 = vmul.f32 %v2797, %v2804
    %2807 = vrot.lane.b32.xlu0 %v2801, 64
    %v2808 = vpop.permute.xlu0 %2807
    %v2810 = vadd.f32 %v2806, %v2808
    %2812 = vrot.lane.b32.xlu0 %v2810, 32
    %v2813 = vpop.permute.xlu0 %2812
    %v2814 = vsel %vm191, %v2813, 0
    %2816 = vmatprep.subr.mxu0 0.0
    %2817 = vmatpush1.msra.mxu0 0.0
    %2818 = vmatprep.subr.mxu0 0.0
    %2819 = vmatpush1.msra.mxu0 0.0
    %2820 = vmatprep.subr.mxu0 0.0
    %2821 = vmatpush1.msra.mxu0 0.0
    %2822 = vmatprep.subr.mxu0 0.0
    %2823 = vmatpush1.msra.mxu0 0.0
    %2824 = vmatprep.subr.mxu0 0.0
    %2825 = vmatpush1.msra.mxu0 0.0
    %2826 = vmatprep.subr.mxu0 0.0
    %2827 = vmatpush1.msra.mxu0 0.0
    %2828 = vmatprep.subr.mxu0 0.0
    %2829 = vmatpush1.msra.mxu0 0.0
    %2830 = vmatprep.subr.mxu0 0.0
    %2831 = vmatpush1.msra.mxu0 0.0
    %2832 = vmatprep.subr.mxu0 0.0
    %2833 = vmatpush1.msra.mxu0 0.0
    %2834 = vmatprep.subr.mxu0 0.0
    %2835 = vmatpush1.msra.mxu0 0.0
    %2836 = vmatprep.subr.mxu0 0.0
    %2837 = vmatpush1.msra.mxu0 0.0
    %2838 = vmatprep.subr.mxu0 0.0
    %2839 = vmatpush1.msra.mxu0 0.0
    %2840 = vmatprep.subr.mxu0 0.0
    %2841 = vmatpush1.msra.mxu0 %v66
    %2842 = vmatprep.subr.mxu0 0.0
    %2843 = vmatpush1.msra.mxu0 %v65
    %2844 = vmatprep.subr.mxu0 0.0
    %2845 = vmatpush1.msra.mxu0 %v64
    %2846 = vmatprep.subr.mxu0 0.0
    %2847 = vmatpush1.msra.mxu0 %v63
    %2848 = vmatprep.subr.mxu0 0.0
    %2849 = vmatpush2.msra.mxu0 0.0
    %2850 = vmatprep.subr.mxu0 0.0
    %2851 = vmatpush2.msra.mxu0 0.0
    %2852 = vmatprep.subr.mxu0 0.0
    %2853 = vmatpush2.msra.mxu0 0.0
    %2854 = vmatprep.subr.mxu0 0.0
    %2855 = vmatpush2.msra.mxu0 0.0
    %2856 = vmatprep.subr.mxu0 0.0
    %2857 = vmatpush2.msra.mxu0 0.0
    %2858 = vmatprep.subr.mxu0 0.0
    %2859 = vmatpush2.msra.mxu0 0.0
    %2860 = vmatprep.subr.mxu0 0.0
    %2861 = vmatpush2.msra.mxu0 0.0
    %2862 = vmatprep.subr.mxu0 0.0
    %2863 = vmatpush2.msra.mxu0 0.0
    %2864 = vmatprep.subr.mxu0 0.0
    %2865 = vmatpush2.msra.mxu0 0.0
    %2866 = vmatprep.subr.mxu0 0.0
    %2867 = vmatpush2.msra.mxu0 0.0
    %2868 = vmatprep.subr.mxu0 0.0
    %2869 = vmatpush2.msra.mxu0 0.0
    %2870 = vmatprep.subr.mxu0 0.0
    %2871 = vmatpush2.msra.mxu0 0.0
    %2872 = vmatprep.subr.mxu0 0.0
    %2873 = vmatpush2.msra.mxu0 0.0
    %2874 = vmatprep.subr.mxu0 0.0
    %2875 = vmatpush2.msra.mxu0 0.0
    %2876 = vmatprep.subr.mxu0 0.0
    %2877 = vmatpush2.msra.mxu0 0.0
    %2878 = vmatprep.subr.mxu0 0.0
    %2879 = vmatpush2.msra.mxu0 0.0
    %2880 = vmatprep.mubr.f32.mxu0 0.0
    %2881 = vmatmul.mubr.f32.gmra.mxu0 %v2814
    %v2882 = vpop.f32.mrf.mxu0
    %v2883 = vadd.f32 %v2808, %v2882
    %v2884 = vpop.f32.mrf.mxu0
    %2885 = vdwg.mxu0
    %v2886 = vmax.f32 %v2883, 0.0
    %v2887 = vmul.f32 %v2886, %v2570
    %vm2888 = vcmask 130048
    %v2889 = vsel %vm2888, %v2887, 0.0
    %2890 = vadd.xlane.f32.xlu0 %v2889
    %v2891 = vpop.xlane.xlu0 %2890
    %v2892 = vadd.f32 %v2891, %v2639
    %2894 = vrot.lane.b32.xlu0 %v2892, 127
    %v2895 = vpop.permute.xlu0 %2894
    %2897 = vst.msk [vmem:[%s3] sm:$0xff] %vm2648, %v2895
    // Predicated region
    $region18: #{attention_lstm_forward.1} parent=1 // pred_check
      _
    $region19: #{attention_lstm_forward.1} parent=1 // pred_check_branch
      %2899 = sbr.rel (0) target = $region21
    $region20: #{attention_lstm_forward.1} parent=1 // pred_region
      _
    $region21: #{attention_lstm_forward.1} parent=1 // pred_fallthru
      _
    // Predicated region
    $region22: #{attention_lstm_forward.1} parent=1 // pred_check
      _
    $region23: #{attention_lstm_forward.1} parent=1 // pred_check_branch
      %2901 = sbr.rel (0) target = $region25
    $region24: #{attention_lstm_forward.1} parent=1 // pred_region
      _
    $region25: #{attention_lstm_forward.1} parent=1 // pred_fallthru
      _
    %2902 = vsyncpa [#allocation3], 1

</llo_original>
